<compile_context>
chip_gen: v7x
topology: tpu7x:2x2x1
jax: 0.10.0
libtpu: 0.0.40
codegen_flags: <defaults>
</compile_context>

<pallas_src>
import jax
import jax.numpy as jnp
import numpy as np
from jax.experimental import pallas as pl
from jax.experimental.pallas import tpu as pltpu

G = 8                      # spatial positions per group
S = 81                     # 9x9 board positions
S_PAD = ((S + G - 1) // G) * G    # 88
NG = S_PAD // G            # 11 groups
KCOL = 36                  # im2col columns per position (4 ch * 3 * 3)
CCONV = 32                 # conv output channels


# ---------------------------------------------------------------------------
# Fused kernel (one grid step = one batch chunk; weights VMEM-resident)
# ---------------------------------------------------------------------------
def _fused_kernel(patches_ref, mlp_ref,
                  conv_w_ref, conv_b_ref,
                  w1_ref, w2_ref, comb_b_ref,
                  mlp_w_ref, mlp_b_ref,
                  head_w_ref, head_b_ref,
                  out_ref, a_ref):
    """patches_ref : (NG*bc, G*36) bf16   row = g*bc + b, col = p*36 + (c*9+kh*3+kw)
       conv_w_ref  : (G*36, G*32)  bf16   block-diagonal im2col conv weight
       w1_ref      : (NG, G*32, 256) bf16 combined weight, NCHW-flatten fold + group pad
       head_w_ref  : (256, 128)    bf16   [moves(81) | result(2) | zero pad]
       out_ref     : (bc, 128)     f32    lane-dense merged head output
       a_ref       : (NG*bc, G*32) bf16   scratch: conv activations
    """
    bc = out_ref.shape[0]
    n_g = w1_ref.shape[0]

    # 1) conv for every (group, batch) row: ONE matmul, ONE ReLU, ONE bf16 cast
    pre = jnp.dot(patches_ref[...], conv_w_ref[...],
                  preferred_element_type=jnp.float32)
    a_ref[...] = jnp.maximum(pre + conv_b_ref[...], 0.0).astype(jnp.bfloat16)

    # 2) MLP branch on the VPU: 3 FMAs instead of a K=3 MXU push
    mlp = mlp_ref[...]                                            # (bc, 3) f32
    x2 = jnp.zeros((bc, CCONV), jnp.float32) + mlp_b_ref[...]
    for j in range(mlp.shape[1]):
        x2 = x2 + mlp[:, j:j + 1] * mlp_w_ref[j:j + 1, :]
    x2 = jnp.maximum(x2, 0.0).astype(jnp.bfloat16)                # (bc, 32)

    # 3) combined layer: h = x2 @ W2 + sum_g a_g @ W1[g]   (K streamed once)
    h = jnp.dot(x2, w2_ref[...], preferred_element_type=jnp.float32)
    for g in range(n_g):                                          # 11 K=256 chunks
        a_g = a_ref[g * bc:(g + 1) * bc, :]                       # (bc, 256) bf16
        h = h + jnp.dot(a_g, w1_ref[g], preferred_element_type=jnp.float32)
    h = jnp.maximum(h + comb_b_ref[...], 0.0).astype(jnp.bfloat16)

    # 4) merged output heads, single lane-dense (bc, 128) store
    out_ref[...] = (jnp.dot(h, head_w_ref[...],
                            preferred_element_type=jnp.float32)
                    + head_b_ref[...])


# ---------------------------------------------------------------------------
# Parameters (deterministic synthetic init, PyTorch shapes)
# ---------------------------------------------------------------------------
def init_params(key):
    ks = jax.random.split(key, 10)

    def lin(k, fan_in, shape):
        return jax.random.normal(k, shape, jnp.float32) / np.sqrt(fan_in)

    return dict(
        conv_w=lin(ks[0], 4 * 3 * 3, (32, 4, 3, 3)),            # Conv2d(4,32,3,p=1)
        conv_b=lin(ks[1], 4 * 3 * 3, (32,)),
        mlp_w=lin(ks[2], 3, (32, 3)),                           # Linear(3, 32)
        mlp_b=lin(ks[3], 3, (32,)),
        comb_w=lin(ks[4], 32 * 81 + 32, (256, 32 * 81 + 32)),   # Linear(2624, 256)
        comb_b=lin(ks[5], 32 * 81 + 32, (256,)),
        mv_w=lin(ks[6], 256, (81, 256)),                        # Linear(256, 81)
        mv_b=lin(ks[7], 256, (81,)),
        res_w=lin(ks[8], 256, (2, 256)),                        # Linear(256, 2)
        res_b=lin(ks[9], 256, (2,)),
    )


def prepare_params(params):
    """One-time weight layout prep (runs on host, never per forward call)."""
    # im2col conv weight: (36, 32), row index c*9 + kh*3 + kw
    conv_w_col = params["conv_w"].reshape(CCONV, KCOL).T               # (36, 32)
    # block-diagonal over G positions -> (G*36, G*32)
    wbd = jnp.zeros((G * KCOL, G * CCONV), jnp.float32)
    for p in range(G):
        wbd = wbd.at[p * KCOL:(p + 1) * KCOL,
                     p * CCONV:(p + 1) * CCONV].set(conv_w_col)
    conv_bt = jnp.tile(params["conv_b"], (G,)).reshape(1, G * CCONV)   # bias tiled

    # combined weight: fold PyTorch NCHW flatten (col = o*81 + s) and grouping
    wc_t = params["comb_w"].T                                          # (2624, 256)
    w1 = wc_t[:CCONV * S].reshape(CCONV, S, 256).transpose(1, 0, 2)    # (81, 32, 256) [s,o,n]
    w1 = jnp.pad(w1, ((0, S_PAD - S), (0, 0), (0, 0)))                 # zero rows for pad pos
    w1 = w1.reshape(NG, G * CCONV, 256)                                # (11, 256, 256)
    w2 = wc_t[CCONV * S:]                                              # (32, 256)

    # merged, lane-padded output heads
    head_w = jnp.zeros((256, 128), jnp.float32)
    head_w = head_w.at[:, :81].set(params["mv_w"].T).at[:, 81:83].set(params["res_w"].T)
    head_b = jnp.zeros((1, 128), jnp.float32)
    head_b = head_b.at[0, :81].set(params["mv_b"]).at[0, 81:83].set(params["res_b"])

    return dict(
        conv_wbd=wbd.astype(jnp.bfloat16),                  # (288, 256)
        conv_bt=conv_bt.astype(jnp.float32),                # (1, 256)
        w1=w1.astype(jnp.bfloat16),                         # (11, 256, 256)
        w2=w2.astype(jnp.bfloat16),                         # (32, 256)
        comb_b=params["comb_b"].reshape(1, 256).astype(jnp.float32),
        mlp_w=params["mlp_w"].T.astype(jnp.float32),        # (3, 32)
        mlp_b=params["mlp_b"].reshape(1, 32).astype(jnp.float32),
        head_w=head_w.astype(jnp.bfloat16),                 # (256, 128)
        head_b=head_b,                                      # (1, 128) f32
    )


# ---------------------------------------------------------------------------
# Forward pass (one pallas_call)
# ---------------------------------------------------------------------------
@jax.jit
def forward(prep, board, mlp_feat):
    B = board.shape[0]
    # pad batch to a sublane multiple; chunk large batches for the grid
    Bp = max(8, ((B + 7) // 8) * 8)
    if Bp > 128:
        Bp = ((B + 127) // 128) * 128
    BC = min(Bp, 128)
    n_chunks = Bp // BC

    board_p = jnp.pad(board.astype(jnp.float32),
                      ((0, Bp - B), (0, 0), (0, 0), (0, 0)))
    mlp_p = jnp.pad(mlp_feat.astype(jnp.float32), ((0, Bp - B), (0, 0)))

    # im2col glue (tiny, fused by XLA): rows (chunk, g, b_local), col p*36 + c*9+kk
    pad = jnp.pad(board_p, ((0, 0), (0, 0), (1, 1), (1, 1)))
    slc = [pad[:, :, kh:kh + 9, kw:kw + 9] for kh in range(3) for kw in range(3)]
    pt = jnp.stack(slc, axis=2)                        # (Bp, 4, 9, 9, 9) = (b,c,kk,h,w)
    pt = pt.transpose(3, 4, 0, 1, 2)                   # (h, w, b, c, kk)
    pt = pt.reshape(S, Bp, KCOL)                       # (81, Bp, 36)
    pt = jnp.pad(pt, ((0, S_PAD - S), (0, 0), (0, 0))) # (88, Bp, 36) zero pad positions
    pt = pt.reshape(NG, G, n_chunks, BC, KCOL)
    pt = pt.transpose(2, 0, 3, 1, 4)                   # (chunk, g, b_local, p, k)
    pt = pt.reshape(n_chunks * NG * BC, G * KCOL).astype(jnp.bfloat16)

    flops = (2 * (NG * Bp) * (G * KCOL) * (G * CCONV)
             + 2 * Bp * (NG * G * CCONV) * 256
             + 2 * Bp * CCONV * 256
             + 2 * Bp * 256 * 128)
    bytes_accessed = (
        pt.size * 2 + mlp_p.size * 4 + Bp * 128 * 4
        + (prep["conv_wbd"].size + prep["w1"].size + prep["w2"].size
           + prep["head_w"].size) * 2
        + (prep["conv_bt"].size + prep["comb_b"].size + prep["mlp_w"].size
           + prep["mlp_b"].size + prep["head_b"].size) * 4)

    out = pl.pallas_call(
        _fused_kernel,
        out_shape=jax.ShapeDtypeStruct((Bp, 128), jnp.float32),
        grid=(n_chunks,),
        in_specs=[
            pl.BlockSpec((NG * BC, G * KCOL), lambda i: (i, 0)),      # patches (chunked)
            pl.BlockSpec((BC, 3), lambda i: (i, 0)),                  # mlp feats (chunked)
            pl.BlockSpec((G * KCOL, G * CCONV), lambda i: (0, 0)),    # conv block-diag W
            pl.BlockSpec((1, G * CCONV), lambda i: (0, 0)),           # conv bias (tiled)
            pl.BlockSpec((NG, G * CCONV, 256), lambda i: (0, 0, 0)),  # combined W (conv part)
            pl.BlockSpec((CCONV, 256), lambda i: (0, 0)),             # combined W (mlp part)
            pl.BlockSpec((1, 256), lambda i: (0, 0)),                 # combined bias
            pl.BlockSpec((3, CCONV), lambda i: (0, 0)),               # mlp W
            pl.BlockSpec((1, CCONV), lambda i: (0, 0)),               # mlp bias
            pl.BlockSpec((256, 128), lambda i: (0, 0)),               # merged head W
            pl.BlockSpec((1, 128), lambda i: (0, 0)),                 # merged head bias
        ],
        out_specs=pl.BlockSpec((BC, 128), lambda i: (i, 0)),
        scratch_shapes=[pltpu.VMEM((NG * BC, G * CCONV), jnp.bfloat16)],
        compiler_params=pltpu.CompilerParams(dimension_semantics=("parallel",)),
        cost_estimate=pl.CostEstimate(flops=int(flops), transcendentals=0,
                                      bytes_accessed=int(bytes_accessed)),
    )(pt, mlp_p,
      prep["conv_wbd"], prep["conv_bt"],
      prep["w1"], prep["w2"], prep["comb_b"],
      prep["mlp_w"], prep["mlp_b"],
      prep["head_w"], prep["head_b"])

    return out[:B, :81], out[:B, 81:83]


# ---------------------------------------------------------------------------
# Plain-JAX reference (mirrors the PyTorch module exactly, pure f32)
# ---------------------------------------------------------------------------
def forward_ref(params, board, mlp_feat):
    B = board.shape[0]
    conv = jax.lax.conv_general_dilated(
        board, params["conv_w"], window_strides=(1, 1), padding="SAME",
        dimension_numbers=("NCHW", "OIHW", "NCHW"))
    conv = jnp.maximum(conv + params["conv_b"][None, :, None, None], 0.0)
    x1 = conv.reshape(B, -1)                                   # NCHW flatten
    x2 = jnp.maximum(mlp_feat @ params["mlp_w"].T + params["mlp_b"], 0.0)
    x = jnp.concatenate([x1, x2], axis=1)
    x = jnp.maximum(x @ params["comb_w"].T + params["comb_b"], 0.0)
    moves = x @ params["mv_w"].T + params["mv_b"]
    result = x @ params["res_w"].T + params["res_b"]
    return moves, result


# ---------------------------------------------------------------------------
if __name__ == "__main__":
    key = jax.random.PRNGKey(0)
    k_board, k_feat, k_params = jax.random.split(key, 3)

    B = 2
    board = jax.random.normal(k_board, (B, 4, 9, 9), jnp.float32)   # NCHW
    mlp_feat = jax.random.normal(k_feat, (B, 3), jnp.float32)

    params = init_params(k_params)
    prep = prepare_params(params)     # one-time weight layout / bf16 cast

    moves, result = forward(prep, board, mlp_feat)
    moves, result = jax.block_until_ready((moves, result))

    ref_moves, ref_result = forward_ref(params, board, mlp_feat)
    np.testing.assert_allclose(np.asarray(moves), np.asarray(ref_moves),
                               rtol=5e-2, atol=5e-2)
    np.testing.assert_allclose(np.asarray(result), np.asarray(ref_result),
                               rtol=5e-2, atol=5e-2)

    assert moves.shape == (B, 81) and result.shape == (B, 2)
    print("KERNEL_OK")
</pallas_src>

<mosaic_0001>
module attributes {stable_mosaic.version = 11 : i64} {
  func.func @_fused_kernel(%arg0: i32, %arg1: memref<88x288xbf16, #tpu.memory_space<vmem>>, %arg2: memref<8x3xf32, #tpu.memory_space<vmem>>, %arg3: memref<288x256xbf16, #tpu.memory_space<vmem>>, %arg4: memref<1x256xf32, #tpu.memory_space<vmem>>, %arg5: memref<11x256x256xbf16, #tpu.memory_space<vmem>>, %arg6: memref<32x256xbf16, #tpu.memory_space<vmem>>, %arg7: memref<1x256xf32, #tpu.memory_space<vmem>>, %arg8: memref<3x32xf32, #tpu.memory_space<vmem>>, %arg9: memref<1x32xf32, #tpu.memory_space<vmem>>, %arg10: memref<256x128xbf16, #tpu.memory_space<vmem>>, %arg11: memref<1x128xf32, #tpu.memory_space<vmem>>, %arg12: memref<8x128xf32, #tpu.memory_space<vmem>>, %arg13: memref<88x256xbf16, #tpu.memory_space<vmem>>) attributes {dimension_semantics = [#tpu.dimension_semantics<parallel>], iteration_bounds = array<i64: 1>, scalar_prefetch = 0 : i64, scratch_operands = 1 : i64, tpu.core_type = #tpu.core_type<tc>, window_params = [{transform_indices = @transform_0, window_bounds = array<i64: 88, 288>}, {transform_indices = @transform_1, window_bounds = array<i64: 8, 3>}, {pipeline_mode = #tpu.pipeline_mode<synchronous>, transform_indices = @transform_2, window_bounds = array<i64: 288, 256>}, {pipeline_mode = #tpu.pipeline_mode<synchronous>, transform_indices = @transform_3, window_bounds = array<i64: 1, 256>}, {pipeline_mode = #tpu.pipeline_mode<synchronous>, transform_indices = @transform_4, window_bounds = array<i64: 11, 256, 256>}, {pipeline_mode = #tpu.pipeline_mode<synchronous>, transform_indices = @transform_5, window_bounds = array<i64: 32, 256>}, {pipeline_mode = #tpu.pipeline_mode<synchronous>, transform_indices = @transform_6, window_bounds = array<i64: 1, 256>}, {pipeline_mode = #tpu.pipeline_mode<synchronous>, transform_indices = @transform_7, window_bounds = array<i64: 3, 32>}, {pipeline_mode = #tpu.pipeline_mode<synchronous>, transform_indices = @transform_8, window_bounds = array<i64: 1, 32>}, {pipeline_mode = #tpu.pipeline_mode<synchronous>, transform_indices = @transform_9, window_bounds = array<i64: 256, 128>}, {pipeline_mode = #tpu.pipeline_mode<synchronous>, transform_indices = @transform_10, window_bounds = array<i64: 1, 128>}, {transform_indices = @transform_11, window_bounds = array<i64: 8, 128>}]} {
    %c0 = arith.constant 0 : index
    %c0_0 = arith.constant 0 : index
    %0 = vector.load %arg1[%c0, %c0_0] : memref<88x288xbf16, #tpu.memory_space<vmem>>, vector<88x288xbf16>
    %c0_1 = arith.constant 0 : index
    %c0_2 = arith.constant 0 : index
    %1 = vector.load %arg3[%c0_1, %c0_2] : memref<288x256xbf16, #tpu.memory_space<vmem>>, vector<288x256xbf16>
    %cst = arith.constant dense<0.000000e+00> : vector<88x256xf32>
    %2 = tpu.matmul %0, %1, %cst {dimension_numbers = #tpu.dot_dimension_numbers<[1], [0], [0], [1], [0, 0, 1, 1], [], []>} : vector<88x288xbf16>, vector<288x256xbf16>, vector<88x256xf32> -> vector<88x256xf32>
    %c0_3 = arith.constant 0 : index
    %c0_4 = arith.constant 0 : index
    %3 = vector.load %arg4[%c0_3, %c0_4] : memref<1x256xf32, #tpu.memory_space<vmem>>, vector<1x256xf32>
    %4 = vector.broadcast %3 : vector<1x256xf32> to vector<88x256xf32>
    %5 = arith.addf %2, %4 : vector<88x256xf32>
    %cst_5 = arith.constant 0.000000e+00 : f32
    %6 = vector.broadcast %cst_5 : f32 to vector<88x256xf32>
    %7 = arith.maximumf %5, %6 : vector<88x256xf32>
    %8 = arith.truncf %7 : vector<88x256xf32> to vector<88x256xbf16>
    %c0_6 = arith.constant 0 : index
    %c0_7 = arith.constant 0 : index
    %9 = vector.load %arg13[%c0_6, %c0_7] : memref<88x256xbf16, #tpu.memory_space<vmem>>, vector<88x256xbf16>
    tpu.vector_store %arg13[%c0_6, %c0_7], %8 {strides = array<i32>} : memref<88x256xbf16, #tpu.memory_space<vmem>>, vector<88x256xbf16>,
    %c0_8 = arith.constant 0 : index
    %c0_9 = arith.constant 0 : index
    %10 = vector.load %arg2[%c0_8, %c0_9] : memref<8x3xf32, #tpu.memory_space<vmem>>, vector<8x3xf32>
    %cst_10 = arith.constant 0.000000e+00 : f32
    %11 = vector.broadcast %cst_10 : f32 to vector<8x32xf32>
    %c0_11 = arith.constant 0 : index
    %c0_12 = arith.constant 0 : index
    %12 = vector.load %arg9[%c0_11, %c0_12] : memref<1x32xf32, #tpu.memory_space<vmem>>, vector<1x32xf32>
    %13 = vector.broadcast %12 : vector<1x32xf32> to vector<8x32xf32>
    %14 = arith.addf %11, %13 : vector<8x32xf32>
    %15 = vector.extract_strided_slice %10 {offsets = [0, 0], sizes = [8, 1], strides = [1, 1]} : vector<8x3xf32> to vector<8x1xf32>
    %c0_13 = arith.constant 0 : index
    %c0_14 = arith.constant 0 : index
    %16 = vector.load %arg8[%c0_13, %c0_14] : memref<3x32xf32, #tpu.memory_space<vmem>>, vector<1x32xf32>
    %17 = vector.broadcast %15 : vector<8x1xf32> to vector<8x32xf32>
    %18 = vector.broadcast %16 : vector<1x32xf32> to vector<8x32xf32>
    %19 = arith.mulf %17, %18 : vector<8x32xf32>
    %20 = arith.addf %14, %19 : vector<8x32xf32>
    %21 = vector.extract_strided_slice %10 {offsets = [0, 1], sizes = [8, 1], strides = [1, 1]} : vector<8x3xf32> to vector<8x1xf32>
    %c1 = arith.constant 1 : index
    %c0_15 = arith.constant 0 : index
    %22 = vector.load %arg8[%c1, %c0_15] : memref<3x32xf32, #tpu.memory_space<vmem>>, vector<1x32xf32>
    %23 = vector.broadcast %21 : vector<8x1xf32> to vector<8x32xf32>
    %24 = vector.broadcast %22 : vector<1x32xf32> to vector<8x32xf32>
    %25 = arith.mulf %23, %24 : vector<8x32xf32>
    %26 = arith.addf %20, %25 : vector<8x32xf32>
    %27 = vector.extract_strided_slice %10 {offsets = [0, 2], sizes = [8, 1], strides = [1, 1]} : vector<8x3xf32> to vector<8x1xf32>
    %c2 = arith.constant 2 : index
    %c0_16 = arith.constant 0 : index
    %28 = vector.load %arg8[%c2, %c0_16] : memref<3x32xf32, #tpu.memory_space<vmem>>, vector<1x32xf32>
    %29 = vector.broadcast %27 : vector<8x1xf32> to vector<8x32xf32>
    %30 = vector.broadcast %28 : vector<1x32xf32> to vector<8x32xf32>
    %31 = arith.mulf %29, %30 : vector<8x32xf32>
    %32 = arith.addf %26, %31 : vector<8x32xf32>
    %cst_17 = arith.constant 0.000000e+00 : f32
    %33 = vector.broadcast %cst_17 : f32 to vector<8x32xf32>
    %34 = arith.maximumf %32, %33 : vector<8x32xf32>
    %35 = arith.truncf %34 : vector<8x32xf32> to vector<8x32xbf16>
    %c0_18 = arith.constant 0 : index
    %c0_19 = arith.constant 0 : index
    %36 = vector.load %arg6[%c0_18, %c0_19] : memref<32x256xbf16, #tpu.memory_space<vmem>>, vector<32x256xbf16>
    %cst_20 = arith.constant dense<0.000000e+00> : vector<8x256xf32>
    %37 = tpu.matmul %35, %36, %cst_20 {dimension_numbers = #tpu.dot_dimension_numbers<[1], [0], [0], [1], [0, 0, 1, 1], [], []>} : vector<8x32xbf16>, vector<32x256xbf16>, vector<8x256xf32> -> vector<8x256xf32>
    %c0_21 = arith.constant 0 : index
    %c0_22 = arith.constant 0 : index
    %38 = vector.load %arg13[%c0_21, %c0_22] : memref<88x256xbf16, #tpu.memory_space<vmem>>, vector<8x256xbf16>
    %c0_23 = arith.constant 0 : index
    %c0_24 = arith.constant 0 : index
    %c0_25 = arith.constant 0 : index
    %39 = vector.load %arg5[%c0_23, %c0_24, %c0_25] : memref<11x256x256xbf16, #tpu.memory_space<vmem>>, vector<1x256x256xbf16>
    %40 = vector.shape_cast %39 : vector<1x256x256xbf16> to vector<256x256xbf16>
    %cst_26 = arith.constant dense<0.000000e+00> : vector<8x256xf32>
    %41 = tpu.matmul %38, %40, %cst_26 {dimension_numbers = #tpu.dot_dimension_numbers<[1], [0], [0], [1], [0, 0, 1, 1], [], []>} : vector<8x256xbf16>, vector<256x256xbf16>, vector<8x256xf32> -> vector<8x256xf32>
    %42 = arith.addf %37, %41 : vector<8x256xf32>
    %c8 = arith.constant 8 : index
    %c0_27 = arith.constant 0 : index
    %43 = vector.load %arg13[%c8, %c0_27] : memref<88x256xbf16, #tpu.memory_space<vmem>>, vector<8x256xbf16>
    %c1_28 = arith.constant 1 : index
    %c0_29 = arith.constant 0 : index
    %c0_30 = arith.constant 0 : index
    %44 = vector.load %arg5[%c1_28, %c0_29, %c0_30] : memref<11x256x256xbf16, #tpu.memory_space<vmem>>, vector<1x256x256xbf16>
    %45 = vector.shape_cast %44 : vector<1x256x256xbf16> to vector<256x256xbf16>
    %cst_31 = arith.constant dense<0.000000e+00> : vector<8x256xf32>
    %46 = tpu.matmul %43, %45, %cst_31 {dimension_numbers = #tpu.dot_dimension_numbers<[1], [0], [0], [1], [0, 0, 1, 1], [], []>} : vector<8x256xbf16>, vector<256x256xbf16>, vector<8x256xf32> -> vector<8x256xf32>
    %47 = arith.addf %42, %46 : vector<8x256xf32>
    %c16 = arith.constant 16 : index
    %c0_32 = arith.constant 0 : index
    %48 = vector.load %arg13[%c16, %c0_32] : memref<88x256xbf16, #tpu.memory_space<vmem>>, vector<8x256xbf16>
    %c2_33 = arith.constant 2 : index
    %c0_34 = arith.constant 0 : index
    %c0_35 = arith.constant 0 : index
    %49 = vector.load %arg5[%c2_33, %c0_34, %c0_35] : memref<11x256x256xbf16, #tpu.memory_space<vmem>>, vector<1x256x256xbf16>
    %50 = vector.shape_cast %49 : vector<1x256x256xbf16> to vector<256x256xbf16>
    %cst_36 = arith.constant dense<0.000000e+00> : vector<8x256xf32>
    %51 = tpu.matmul %48, %50, %cst_36 {dimension_numbers = #tpu.dot_dimension_numbers<[1], [0], [0], [1], [0, 0, 1, 1], [], []>} : vector<8x256xbf16>, vector<256x256xbf16>, vector<8x256xf32> -> vector<8x256xf32>
    %52 = arith.addf %47, %51 : vector<8x256xf32>
    %c24 = arith.constant 24 : index
    %c0_37 = arith.constant 0 : index
    %53 = vector.load %arg13[%c24, %c0_37] : memref<88x256xbf16, #tpu.memory_space<vmem>>, vector<8x256xbf16>
    %c3 = arith.constant 3 : index
    %c0_38 = arith.constant 0 : index
    %c0_39 = arith.constant 0 : index
    %54 = vector.load %arg5[%c3, %c0_38, %c0_39] : memref<11x256x256xbf16, #tpu.memory_space<vmem>>, vector<1x256x256xbf16>
    %55 = vector.shape_cast %54 : vector<1x256x256xbf16> to vector<256x256xbf16>
    %cst_40 = arith.constant dense<0.000000e+00> : vector<8x256xf32>
    %56 = tpu.matmul %53, %55, %cst_40 {dimension_numbers = #tpu.dot_dimension_numbers<[1], [0], [0], [1], [0, 0, 1, 1], [], []>} : vector<8x256xbf16>, vector<256x256xbf16>, vector<8x256xf32> -> vector<8x256xf32>
    %57 = arith.addf %52, %56 : vector<8x256xf32>
    %c32 = arith.constant 32 : index
    %c0_41 = arith.constant 0 : index
    %58 = vector.load %arg13[%c32, %c0_41] : memref<88x256xbf16, #tpu.memory_space<vmem>>, vector<8x256xbf16>
    %c4 = arith.constant 4 : index
    %c0_42 = arith.constant 0 : index
    %c0_43 = arith.constant 0 : index
    %59 = vector.load %arg5[%c4, %c0_42, %c0_43] : memref<11x256x256xbf16, #tpu.memory_space<vmem>>, vector<1x256x256xbf16>
    %60 = vector.shape_cast %59 : vector<1x256x256xbf16> to vector<256x256xbf16>
    %cst_44 = arith.constant dense<0.000000e+00> : vector<8x256xf32>
    %61 = tpu.matmul %58, %60, %cst_44 {dimension_numbers = #tpu.dot_dimension_numbers<[1], [0], [0], [1], [0, 0, 1, 1], [], []>} : vector<8x256xbf16>, vector<256x256xbf16>, vector<8x256xf32> -> vector<8x256xf32>
    %62 = arith.addf %57, %61 : vector<8x256xf32>
    %c40 = arith.constant 40 : index
    %c0_45 = arith.constant 0 : index
    %63 = vector.load %arg13[%c40, %c0_45] : memref<88x256xbf16, #tpu.memory_space<vmem>>, vector<8x256xbf16>
    %c5 = arith.constant 5 : index
    %c0_46 = arith.constant 0 : index
    %c0_47 = arith.constant 0 : index
    %64 = vector.load %arg5[%c5, %c0_46, %c0_47] : memref<11x256x256xbf16, #tpu.memory_space<vmem>>, vector<1x256x256xbf16>
    %65 = vector.shape_cast %64 : vector<1x256x256xbf16> to vector<256x256xbf16>
    %cst_48 = arith.constant dense<0.000000e+00> : vector<8x256xf32>
    %66 = tpu.matmul %63, %65, %cst_48 {dimension_numbers = #tpu.dot_dimension_numbers<[1], [0], [0], [1], [0, 0, 1, 1], [], []>} : vector<8x256xbf16>, vector<256x256xbf16>, vector<8x256xf32> -> vector<8x256xf32>
    %67 = arith.addf %62, %66 : vector<8x256xf32>
    %c48 = arith.constant 48 : index
    %c0_49 = arith.constant 0 : index
    %68 = vector.load %arg13[%c48, %c0_49] : memref<88x256xbf16, #tpu.memory_space<vmem>>, vector<8x256xbf16>
    %c6 = arith.constant 6 : index
    %c0_50 = arith.constant 0 : index
    %c0_51 = arith.constant 0 : index
    %69 = vector.load %arg5[%c6, %c0_50, %c0_51] : memref<11x256x256xbf16, #tpu.memory_space<vmem>>, vector<1x256x256xbf16>
    %70 = vector.shape_cast %69 : vector<1x256x256xbf16> to vector<256x256xbf16>
    %cst_52 = arith.constant dense<0.000000e+00> : vector<8x256xf32>
    %71 = tpu.matmul %68, %70, %cst_52 {dimension_numbers = #tpu.dot_dimension_numbers<[1], [0], [0], [1], [0, 0, 1, 1], [], []>} : vector<8x256xbf16>, vector<256x256xbf16>, vector<8x256xf32> -> vector<8x256xf32>
    %72 = arith.addf %67, %71 : vector<8x256xf32>
    %c56 = arith.constant 56 : index
    %c0_53 = arith.constant 0 : index
    %73 = vector.load %arg13[%c56, %c0_53] : memref<88x256xbf16, #tpu.memory_space<vmem>>, vector<8x256xbf16>
    %c7 = arith.constant 7 : index
    %c0_54 = arith.constant 0 : index
    %c0_55 = arith.constant 0 : index
    %74 = vector.load %arg5[%c7, %c0_54, %c0_55] : memref<11x256x256xbf16, #tpu.memory_space<vmem>>, vector<1x256x256xbf16>
    %75 = vector.shape_cast %74 : vector<1x256x256xbf16> to vector<256x256xbf16>
    %cst_56 = arith.constant dense<0.000000e+00> : vector<8x256xf32>
    %76 = tpu.matmul %73, %75, %cst_56 {dimension_numbers = #tpu.dot_dimension_numbers<[1], [0], [0], [1], [0, 0, 1, 1], [], []>} : vector<8x256xbf16>, vector<256x256xbf16>, vector<8x256xf32> -> vector<8x256xf32>
    %77 = arith.addf %72, %76 : vector<8x256xf32>
    %c64 = arith.constant 64 : index
    %c0_57 = arith.constant 0 : index
    %78 = vector.load %arg13[%c64, %c0_57] : memref<88x256xbf16, #tpu.memory_space<vmem>>, vector<8x256xbf16>
    %c8_58 = arith.constant 8 : index
    %c0_59 = arith.constant 0 : index
    %c0_60 = arith.constant 0 : index
    %79 = vector.load %arg5[%c8_58, %c0_59, %c0_60] : memref<11x256x256xbf16, #tpu.memory_space<vmem>>, vector<1x256x256xbf16>
    %80 = vector.shape_cast %79 : vector<1x256x256xbf16> to vector<256x256xbf16>
    %cst_61 = arith.constant dense<0.000000e+00> : vector<8x256xf32>
    %81 = tpu.matmul %78, %80, %cst_61 {dimension_numbers = #tpu.dot_dimension_numbers<[1], [0], [0], [1], [0, 0, 1, 1], [], []>} : vector<8x256xbf16>, vector<256x256xbf16>, vector<8x256xf32> -> vector<8x256xf32>
    %82 = arith.addf %77, %81 : vector<8x256xf32>
    %c72 = arith.constant 72 : index
    %c0_62 = arith.constant 0 : index
    %83 = vector.load %arg13[%c72, %c0_62] : memref<88x256xbf16, #tpu.memory_space<vmem>>, vector<8x256xbf16>
    %c9 = arith.constant 9 : index
    %c0_63 = arith.constant 0 : index
    %c0_64 = arith.constant 0 : index
    %84 = vector.load %arg5[%c9, %c0_63, %c0_64] : memref<11x256x256xbf16, #tpu.memory_space<vmem>>, vector<1x256x256xbf16>
    %85 = vector.shape_cast %84 : vector<1x256x256xbf16> to vector<256x256xbf16>
    %cst_65 = arith.constant dense<0.000000e+00> : vector<8x256xf32>
    %86 = tpu.matmul %83, %85, %cst_65 {dimension_numbers = #tpu.dot_dimension_numbers<[1], [0], [0], [1], [0, 0, 1, 1], [], []>} : vector<8x256xbf16>, vector<256x256xbf16>, vector<8x256xf32> -> vector<8x256xf32>
    %87 = arith.addf %82, %86 : vector<8x256xf32>
    %c80 = arith.constant 80 : index
    %c0_66 = arith.constant 0 : index
    %88 = vector.load %arg13[%c80, %c0_66] : memref<88x256xbf16, #tpu.memory_space<vmem>>, vector<8x256xbf16>
    %c10 = arith.constant 10 : index
    %c0_67 = arith.constant 0 : index
    %c0_68 = arith.constant 0 : index
    %89 = vector.load %arg5[%c10, %c0_67, %c0_68] : memref<11x256x256xbf16, #tpu.memory_space<vmem>>, vector<1x256x256xbf16>
    %90 = vector.shape_cast %89 : vector<1x256x256xbf16> to vector<256x256xbf16>
    %cst_69 = arith.constant dense<0.000000e+00> : vector<8x256xf32>
    %91 = tpu.matmul %88, %90, %cst_69 {dimension_numbers = #tpu.dot_dimension_numbers<[1], [0], [0], [1], [0, 0, 1, 1], [], []>} : vector<8x256xbf16>, vector<256x256xbf16>, vector<8x256xf32> -> vector<8x256xf32>
    %92 = arith.addf %87, %91 : vector<8x256xf32>
    %c0_70 = arith.constant 0 : index
    %c0_71 = arith.constant 0 : index
    %93 = vector.load %arg7[%c0_70, %c0_71] : memref<1x256xf32, #tpu.memory_space<vmem>>, vector<1x256xf32>
    %94 = vector.broadcast %93 : vector<1x256xf32> to vector<8x256xf32>
    %95 = arith.addf %92, %94 : vector<8x256xf32>
    %cst_72 = arith.constant 0.000000e+00 : f32
    %96 = vector.broadcast %cst_72 : f32 to vector<8x256xf32>
    %97 = arith.maximumf %95, %96 : vector<8x256xf32>
    %98 = arith.truncf %97 : vector<8x256xf32> to vector<8x256xbf16>
    %c0_73 = arith.constant 0 : index
    %c0_74 = arith.constant 0 : index
    %99 = vector.load %arg10[%c0_73, %c0_74] : memref<256x128xbf16, #tpu.memory_space<vmem>>, vector<256x128xbf16>
    %cst_75 = arith.constant dense<0.000000e+00> : vector<8x128xf32>
    %100 = tpu.matmul %98, %99, %cst_75 {dimension_numbers = #tpu.dot_dimension_numbers<[1], [0], [0], [1], [0, 0, 1, 1], [], []>} : vector<8x256xbf16>, vector<256x128xbf16>, vector<8x128xf32> -> vector<8x128xf32>
    %c0_76 = arith.constant 0 : index
    %c0_77 = arith.constant 0 : index
    %101 = vector.load %arg11[%c0_76, %c0_77] : memref<1x128xf32, #tpu.memory_space<vmem>>, vector<1x128xf32>
    %102 = vector.broadcast %101 : vector<1x128xf32> to vector<8x128xf32>
    %103 = arith.addf %100, %102 : vector<8x128xf32>
    %c0_78 = arith.constant 0 : index
    %c0_79 = arith.constant 0 : index
    %104 = vector.load %arg12[%c0_78, %c0_79] : memref<8x128xf32, #tpu.memory_space<vmem>>, vector<8x128xf32>
    tpu.vector_store %arg12[%c0_78, %c0_79], %103 {strides = array<i32>} : memref<8x128xf32, #tpu.memory_space<vmem>>, vector<8x128xf32>,
    return
  }
  func.func @transform_0(%arg0: i32) -> (i32, i32) {
    %c0_i32 = arith.constant 0 : i32
    %c0_i32_0 = arith.constant 0 : i32
    return %arg0, %c0_i32 : i32, i32
  }
  func.func @transform_1(%arg0: i32) -> (i32, i32) {
    %c0_i32 = arith.constant 0 : i32
    %c0_i32_0 = arith.constant 0 : i32
    return %arg0, %c0_i32 : i32, i32
  }
  func.func @transform_2(%arg0: i32) -> (i32, i32) {
    %c0_i32 = arith.constant 0 : i32
    %c0_i32_0 = arith.constant 0 : i32
    %c0_i32_1 = arith.constant 0 : i32
    return %c0_i32, %c0_i32_0 : i32, i32
  }
  func.func @transform_3(%arg0: i32) -> (i32, i32) {
    %c0_i32 = arith.constant 0 : i32
    %c0_i32_0 = arith.constant 0 : i32
    %c0_i32_1 = arith.constant 0 : i32
    return %c0_i32, %c0_i32_0 : i32, i32
  }
  func.func @transform_4(%arg0: i32) -> (i32, i32, i32) {
    %c0_i32 = arith.constant 0 : i32
    %c0_i32_0 = arith.constant 0 : i32
    %c0_i32_1 = arith.constant 0 : i32
    %c0_i32_2 = arith.constant 0 : i32
    return %c0_i32, %c0_i32_0, %c0_i32_1 : i32, i32, i32
  }
  func.func @transform_5(%arg0: i32) -> (i32, i32) {
    %c0_i32 = arith.constant 0 : i32
    %c0_i32_0 = arith.constant 0 : i32
    %c0_i32_1 = arith.constant 0 : i32
    return %c0_i32, %c0_i32_0 : i32, i32
  }
  func.func @transform_6(%arg0: i32) -> (i32, i32) {
    %c0_i32 = arith.constant 0 : i32
    %c0_i32_0 = arith.constant 0 : i32
    %c0_i32_1 = arith.constant 0 : i32
    return %c0_i32, %c0_i32_0 : i32, i32
  }
  func.func @transform_7(%arg0: i32) -> (i32, i32) {
    %c0_i32 = arith.constant 0 : i32
    %c0_i32_0 = arith.constant 0 : i32
    %c0_i32_1 = arith.constant 0 : i32
    return %c0_i32, %c0_i32_0 : i32, i32
  }
  func.func @transform_8(%arg0: i32) -> (i32, i32) {
    %c0_i32 = arith.constant 0 : i32
    %c0_i32_0 = arith.constant 0 : i32
    %c0_i32_1 = arith.constant 0 : i32
    return %c0_i32, %c0_i32_0 : i32, i32
  }
  func.func @transform_9(%arg0: i32) -> (i32, i32) {
    %c0_i32 = arith.constant 0 : i32
    %c0_i32_0 = arith.constant 0 : i32
    %c0_i32_1 = arith.constant 0 : i32
    return %c0_i32, %c0_i32_0 : i32, i32
  }
  func.func @transform_10(%arg0: i32) -> (i32, i32) {
    %c0_i32 = arith.constant 0 : i32
    %c0_i32_0 = arith.constant 0 : i32
    %c0_i32_1 = arith.constant 0 : i32
    return %c0_i32, %c0_i32_0 : i32, i32
  }
  func.func @transform_11(%arg0: i32) -> (i32, i32) {
    %c0_i32 = arith.constant 0 : i32
    %c0_i32_0 = arith.constant 0 : i32
    return %arg0, %c0_i32 : i32, i32
  }
}

</mosaic_0001>

<llo_original>
// kernel: forward.1
$region0: #{forward.1}
  #allocation0 [shape = 'u32[]', space=smem, size = 0x4, offset = 0x4, fixed_abs, tag = 'smem constant byte address 0x4 - core index']
  #allocation1 [shape = 'u32[144,128]{1,0:T(1,128)}', space=vmem, size = 0x12000, scoped, tag = 'internal scratch']
  #allocation2 [shape = 'bf16[88,256]{1,0:T(8,128)(2,1)}', space=vmem, size = 0xb000, scoped, tag = 'scratch operand']
  %s0 = inlined_call_operand.vmem [shape: bf16[88,288], index: 0, kind: input, shape index: {}]
  %s1 = inlined_call_operand.vmem [shape: f32[8,3], index: 1, kind: input, shape index: {}]
  %s2 = inlined_call_operand.vmem [shape: bf16[288,256], index: 2, kind: input, shape index: {}]
  %s3 = inlined_call_operand.vmem [shape: f32[1,256], index: 3, kind: input, shape index: {}]
  %s4 = inlined_call_operand.vmem [shape: bf16[11,256,256], index: 4, kind: input, shape index: {}]
  %s5 = inlined_call_operand.vmem [shape: bf16[32,256], index: 5, kind: input, shape index: {}]
  %s6 = inlined_call_operand.vmem [shape: f32[1,256], index: 6, kind: input, shape index: {}]
  %s7 = inlined_call_operand.vmem [shape: f32[3,32], index: 7, kind: input, shape index: {}]
  %s8 = inlined_call_operand.vmem [shape: f32[1,32], index: 8, kind: input, shape index: {}]
  %s9 = inlined_call_operand.vmem [shape: bf16[256,128], index: 9, kind: input, shape index: {}]
  %s10 = inlined_call_operand.vmem [shape: f32[1,128], index: 10, kind: input, shape index: {}]
  %s11 = inlined_call_operand.vmem [shape: f32[8,128], index: 11, kind: output, shape index: {}]
  %s12 = sld [smem:[#allocation0]]
  $region54: #{forward.1} parent=0
    _
  %s14 = ssub.s32 1, %s12
  %s15 = scalar_select 0, %s14, %s12
  // Predicated region
  $region2: #{forward.1} parent=0 // pred_check
    _
  $region3: #{forward.1} parent=0 // pred_check_branch
    %17 = sbr.rel (0) target = $region5
  $region4: #{forward.1} parent=0 // pred_region
    _
  $region5: #{forward.1} parent=0 // pred_fallthru
    _
  // Predicated region
  $region6: #{forward.1} parent=0 // pred_check
    _
  $region7: #{forward.1} parent=0 // pred_check_branch
    %19 = sbr.rel (0) target = $region9
  $region8: #{forward.1} parent=0 // pred_region
    _
  $region9: #{forward.1} parent=0 // pred_fallthru
    _
  // Predicated region
  $region10: #{forward.1} parent=0 // pred_check
    _
  $region11: #{forward.1} parent=0 // pred_check_branch
    %21 = sbr.rel (0) target = $region13
  $region12: #{forward.1} parent=0 // pred_region
    _
  $region13: #{forward.1} parent=0 // pred_fallthru
    _
  // Predicated region
  $region14: #{forward.1} parent=0 // pred_check
    _
  $region15: #{forward.1} parent=0 // pred_check_branch
    %23 = sbr.rel (0) target = $region17
  $region16: #{forward.1} parent=0 // pred_region
    _
  $region17: #{forward.1} parent=0 // pred_fallthru
    _
  // Predicated region
  $region18: #{forward.1} parent=0 // pred_check
    _
  $region19: #{forward.1} parent=0 // pred_check_branch
    %25 = sbr.rel (0) target = $region21
  $region20: #{forward.1} parent=0 // pred_region
    _
  $region21: #{forward.1} parent=0 // pred_fallthru
    _
  // Predicated region
  $region22: #{forward.1} parent=0 // pred_check
    _
  $region23: #{forward.1} parent=0 // pred_check_branch
    %27 = sbr.rel (0) target = $region25
  $region24: #{forward.1} parent=0 // pred_region
    _
  $region25: #{forward.1} parent=0 // pred_fallthru
    _
  // Predicated region
  $region26: #{forward.1} parent=0 // pred_check
    _
  $region27: #{forward.1} parent=0 // pred_check_branch
    %29 = sbr.rel (0) target = $region29
  $region28: #{forward.1} parent=0 // pred_region
    _
  $region29: #{forward.1} parent=0 // pred_fallthru
    _
  // Predicated region
  $region30: #{forward.1} parent=0 // pred_check
    _
  $region31: #{forward.1} parent=0 // pred_check_branch
    %31 = sbr.rel (0) target = $region33
  $region32: #{forward.1} parent=0 // pred_region
    _
  $region33: #{forward.1} parent=0 // pred_fallthru
    _
  // Predicated region
  $region34: #{forward.1} parent=0 // pred_check
    _
  $region35: #{forward.1} parent=0 // pred_check_branch
    %33 = sbr.rel (0) target = $region37
  $region36: #{forward.1} parent=0 // pred_region
    _
  $region37: #{forward.1} parent=0 // pred_fallthru
    _
  // Predicated region
  $region38: #{forward.1} parent=0 // pred_check
    _
  $region39: #{forward.1} parent=0 // pred_check_branch
    %35 = sbr.rel (0) target = $region41
  $region40: #{forward.1} parent=0 // pred_region
    _
  $region41: #{forward.1} parent=0 // pred_fallthru
    _
  // Predicated region
  $region42: #{forward.1} parent=0 // pred_check
    _
  $region43: #{forward.1} parent=0 // pred_check_branch
    %37 = sbr.rel (0) target = $region45
  $region44: #{forward.1} parent=0 // pred_region
    _
  $region45: #{forward.1} parent=0 // pred_fallthru
    _
  %v39 = vld [vmem:[%s0] sm:$0xff]
  %v40 = vld [vmem:[%s0 + $0x8] sm:$0xf]
  %v41 = vld [vmem:[%s0 + $0xc] sm:$0xff]
  %v42 = vld [vmem:[%s0 + $0x14] sm:$0xf]
  %v43 = vld [vmem:[%s0 + $0x18] sm:$0xff]
  %v44 = vld [vmem:[%s0 + $0x20] sm:$0xf]
  %v45 = vld [vmem:[%s0 + $0x24] sm:$0xff]
  %v46 = vld [vmem:[%s0 + $0x2c] sm:$0xf]
  %v47 = vld [vmem:[%s0 + $0x30] sm:$0xff]
  %v48 = vld [vmem:[%s0 + $0x38] sm:$0xf]
  %v49 = vld [vmem:[%s0 + $0x3c] sm:$0xff]
  %v50 = vld [vmem:[%s0 + $0x44] sm:$0xf]
  %v51 = vld [vmem:[%s0 + $0x48] sm:$0xff]
  %v52 = vld [vmem:[%s0 + $0x50] sm:$0xf]
  %v53 = vld [vmem:[%s0 + $0x54] sm:$0xff]
  %v54 = vld [vmem:[%s0 + $0x5c] sm:$0xf]
  %v55 = vld [vmem:[%s0 + $0x60] sm:$0xff]
  %v56 = vld [vmem:[%s0 + $0x68] sm:$0xf]
  %v57 = vld [vmem:[%s0 + $0x6c] sm:$0xff]
  %v58 = vld [vmem:[%s0 + $0x74] sm:$0xf]
  %v59 = vld [vmem:[%s0 + $0x78] sm:$0xff]
  %v60 = vld [vmem:[%s0 + $0x80] sm:$0xf]
  %v61 = vld [vmem:[%s2] sm:$0xff]
  %v62 = vld [vmem:[%s2 + $0x8] sm:$0xff]
  %v63 = vld [vmem:[%s2 + $0x10] sm:$0xff]
  %v64 = vld [vmem:[%s2 + $0x18] sm:$0xff]
  %v65 = vld [vmem:[%s2 + $0x20] sm:$0xff]
  %v66 = vld [vmem:[%s2 + $0x28] sm:$0xff]
  %v67 = vld [vmem:[%s2 + $0x30] sm:$0xff]
  %v68 = vld [vmem:[%s2 + $0x38] sm:$0xff]
  %v69 = vld [vmem:[%s2 + $0x40] sm:$0xff]
  %v70 = vld [vmem:[%s2 + $0x48] sm:$0xff]
  %v71 = vld [vmem:[%s2 + $0x50] sm:$0xff]
  %v72 = vld [vmem:[%s2 + $0x58] sm:$0xff]
  %v73 = vld [vmem:[%s2 + $0x60] sm:$0xff]
  %v74 = vld [vmem:[%s2 + $0x68] sm:$0xff]
  %v75 = vld [vmem:[%s2 + $0x70] sm:$0xff]
  %v76 = vld [vmem:[%s2 + $0x78] sm:$0xff]
  %v77 = vld [vmem:[%s2 + $0x80] sm:$0xff]
  %v78 = vld [vmem:[%s2 + $0x88] sm:$0xff]
  %v79 = vld [vmem:[%s2 + $0x90] sm:$0xff]
  %v80 = vld [vmem:[%s2 + $0x98] sm:$0xff]
  %v81 = vld [vmem:[%s2 + $0xa0] sm:$0xff]
  %v82 = vld [vmem:[%s2 + $0xa8] sm:$0xff]
  %v83 = vld [vmem:[%s2 + $0xb0] sm:$0xff]
  %v84 = vld [vmem:[%s2 + $0xb8] sm:$0xff]
  %v85 = vld [vmem:[%s2 + $0xc0] sm:$0xff]
  %v86 = vld [vmem:[%s2 + $0xc8] sm:$0xff]
  %v87 = vld [vmem:[%s2 + $0xd0] sm:$0xff]
  %v88 = vld [vmem:[%s2 + $0xd8] sm:$0xff]
  %v89 = vld [vmem:[%s2 + $0xe0] sm:$0xff]
  %v90 = vld [vmem:[%s2 + $0xe8] sm:$0xff]
  %v91 = vld [vmem:[%s2 + $0xf0] sm:$0xff]
  %v92 = vld [vmem:[%s2 + $0xf8] sm:$0xff]
  %v93 = vld [vmem:[%s2 + $0x100] sm:$0xff]
  %v94 = vld [vmem:[%s2 + $0x108] sm:$0xff]
  %v95 = vld [vmem:[%s2 + $0x110] sm:$0xff]
  %v96 = vld [vmem:[%s2 + $0x118] sm:$0xff]
  %v97 = vld [vmem:[%s3] sm:$0x3]
  %v99 = vlaneseq
  %v100 = vshrl.u32 %v99, 7
  %v101 = vsub.s32 0, %v100
  %v102 = vrot.slane %v97, %v101
  %v103 = vlaneseq
  %v104 = vshrl.u32 %v103, 7
  %v105 = vsub.s32 1, %v104
  %v106 = vrot.slane %v97, %v105
  %v131 = vunpack.c.l.b16 %v39
  %v132 = vunpack.c.h.b16 %v39
  %v133 = vunpack.c.l.b16 %v40
  %v134 = vunpack.c.l.b16 %v41
  %v135 = vunpack.c.h.b16 %v41
  %v136 = vunpack.c.l.b16 %v42
  %v137 = vunpack.c.l.b16 %v43
  %v138 = vunpack.c.h.b16 %v43
  %v139 = vunpack.c.l.b16 %v44
  %v140 = vunpack.c.l.b16 %v45
  %v141 = vunpack.c.h.b16 %v45
  %v142 = vunpack.c.l.b16 %v46
  %v143 = vunpack.c.l.b16 %v47
  %v144 = vunpack.c.h.b16 %v47
  %v145 = vunpack.c.l.b16 %v48
  %v146 = vunpack.c.l.b16 %v49
  %v147 = vunpack.c.h.b16 %v49
  %v148 = vunpack.c.l.b16 %v50
  %v149 = vunpack.c.l.b16 %v51
  %v150 = vunpack.c.h.b16 %v51
  %v151 = vunpack.c.l.b16 %v52
  %v152 = vunpack.c.l.b16 %v53
  %v153 = vunpack.c.h.b16 %v53
  %v154 = vunpack.c.l.b16 %v54
  %v155 = vunpack.c.l.b16 %v55
  %v156 = vunpack.c.h.b16 %v55
  %v157 = vunpack.c.l.b16 %v56
  %v158 = vunpack.c.l.b16 %v57
  %v159 = vunpack.c.h.b16 %v57
  %v160 = vunpack.c.l.b16 %v58
  %v161 = vunpack.c.l.b16 %v59
  %v162 = vunpack.c.h.b16 %v59
  %v163 = vunpack.c.l.b16 %v60
  %v164 = vpack.c.b16 %v134, %v131
  %v165 = vpack.c.b16 %v135, %v132
  %v166 = vpack.c.b16 %v136, %v133
  %v167 = vpack.c.b16 %v140, %v137
  %v168 = vpack.c.b16 %v141, %v138
  %v169 = vpack.c.b16 %v142, %v139
  %v170 = vpack.c.b16 %v146, %v143
  %v171 = vpack.c.b16 %v147, %v144
  %v172 = vpack.c.b16 %v148, %v145
  %v173 = vpack.c.b16 %v152, %v149
  %v174 = vpack.c.b16 %v153, %v150
  %v175 = vpack.c.b16 %v154, %v151
  %v176 = vpack.c.b16 %v158, %v155
  %v177 = vpack.c.b16 %v159, %v156
  %v178 = vpack.c.b16 %v160, %v157
  %v179 = vpack.c.b16 %v161, %v161
  %v180 = vpack.c.b16 %v162, %v162
  %v181 = vpack.c.b16 %v163, %v163
  %v230 = vunpack.c.l.b16 %v61
  %v231 = vunpack.c.h.b16 %v61
  %v232 = vunpack.c.l.b16 %v62
  %v233 = vunpack.c.h.b16 %v62
  %v234 = vunpack.c.l.b16 %v63
  %v235 = vunpack.c.h.b16 %v63
  %v236 = vunpack.c.l.b16 %v64
  %v237 = vunpack.c.h.b16 %v64
  %v238 = vunpack.c.l.b16 %v65
  %v239 = vunpack.c.h.b16 %v65
  %v240 = vunpack.c.l.b16 %v66
  %v241 = vunpack.c.h.b16 %v66
  %v242 = vunpack.c.l.b16 %v67
  %v243 = vunpack.c.h.b16 %v67
  %v244 = vunpack.c.l.b16 %v68
  %v245 = vunpack.c.h.b16 %v68
  %v246 = vunpack.c.l.b16 %v69
  %v247 = vunpack.c.h.b16 %v69
  %v248 = vunpack.c.l.b16 %v70
  %v249 = vunpack.c.h.b16 %v70
  %v250 = vunpack.c.l.b16 %v71
  %v251 = vunpack.c.h.b16 %v71
  %v252 = vunpack.c.l.b16 %v72
  %v253 = vunpack.c.h.b16 %v72
  %v254 = vunpack.c.l.b16 %v73
  %v255 = vunpack.c.h.b16 %v73
  %v256 = vunpack.c.l.b16 %v74
  %v257 = vunpack.c.h.b16 %v74
  %v258 = vunpack.c.l.b16 %v75
  %v259 = vunpack.c.h.b16 %v75
  %v260 = vunpack.c.l.b16 %v76
  %v261 = vunpack.c.h.b16 %v76
  %v262 = vunpack.c.l.b16 %v77
  %v263 = vunpack.c.h.b16 %v77
  %v264 = vunpack.c.l.b16 %v78
  %v265 = vunpack.c.h.b16 %v78
  %v266 = vunpack.c.l.b16 %v79
  %v267 = vunpack.c.h.b16 %v79
  %v268 = vunpack.c.l.b16 %v80
  %v269 = vunpack.c.h.b16 %v80
  %v270 = vunpack.c.l.b16 %v81
  %v271 = vunpack.c.h.b16 %v81
  %v272 = vunpack.c.l.b16 %v82
  %v273 = vunpack.c.h.b16 %v82
  %v274 = vunpack.c.l.b16 %v83
  %v275 = vunpack.c.h.b16 %v83
  %v276 = vunpack.c.l.b16 %v84
  %v277 = vunpack.c.h.b16 %v84
  %v278 = vunpack.c.l.b16 %v85
  %v279 = vunpack.c.h.b16 %v85
  %v280 = vunpack.c.l.b16 %v86
  %v281 = vunpack.c.h.b16 %v86
  %v282 = vunpack.c.l.b16 %v87
  %v283 = vunpack.c.h.b16 %v87
  %v284 = vunpack.c.l.b16 %v88
  %v285 = vunpack.c.h.b16 %v88
  %v286 = vunpack.c.l.b16 %v89
  %v287 = vunpack.c.h.b16 %v89
  %v288 = vunpack.c.l.b16 %v90
  %v289 = vunpack.c.h.b16 %v90
  %v290 = vunpack.c.l.b16 %v91
  %v291 = vunpack.c.h.b16 %v91
  %v292 = vunpack.c.l.b16 %v92
  %v293 = vunpack.c.h.b16 %v92
  %v294 = vunpack.c.l.b16 %v93
  %v295 = vunpack.c.h.b16 %v93
  %v296 = vunpack.c.l.b16 %v94
  %v297 = vunpack.c.h.b16 %v94
  %v298 = vunpack.c.l.b16 %v95
  %v299 = vunpack.c.h.b16 %v95
  %v300 = vunpack.c.l.b16 %v96
  %v301 = vunpack.c.h.b16 %v96
  %v302 = vpack.c.b16 %v232, %v230
  %v303 = vpack.c.b16 %v233, %v231
  %v304 = vpack.c.b16 %v236, %v234
  %v305 = vpack.c.b16 %v237, %v235
  %v306 = vpack.c.b16 %v240, %v238
  %v307 = vpack.c.b16 %v241, %v239
  %v308 = vpack.c.b16 %v244, %v242
  %v309 = vpack.c.b16 %v245, %v243
  %v310 = vpack.c.b16 %v248, %v246
  %v311 = vpack.c.b16 %v249, %v247
  %v312 = vpack.c.b16 %v252, %v250
  %v313 = vpack.c.b16 %v253, %v251
  %v314 = vpack.c.b16 %v256, %v254
  %v315 = vpack.c.b16 %v257, %v255
  %v316 = vpack.c.b16 %v260, %v258
  %v317 = vpack.c.b16 %v261, %v259
  %v318 = vpack.c.b16 %v264, %v262
  %v319 = vpack.c.b16 %v265, %v263
  %v320 = vpack.c.b16 %v268, %v266
  %v321 = vpack.c.b16 %v269, %v267
  %v322 = vpack.c.b16 %v272, %v270
  %v323 = vpack.c.b16 %v273, %v271
  %v324 = vpack.c.b16 %v276, %v274
  %v325 = vpack.c.b16 %v277, %v275
  %v326 = vpack.c.b16 %v280, %v278
  %v327 = vpack.c.b16 %v281, %v279
  %v328 = vpack.c.b16 %v284, %v282
  %v329 = vpack.c.b16 %v285, %v283
  %v330 = vpack.c.b16 %v288, %v286
  %v331 = vpack.c.b16 %v289, %v287
  %v332 = vpack.c.b16 %v292, %v290
  %v333 = vpack.c.b16 %v293, %v291
  %v334 = vpack.c.b16 %v296, %v294
  %v335 = vpack.c.b16 %v297, %v295
  %v336 = vpack.c.b16 %v300, %v298
  %v337 = vpack.c.b16 %v301, %v299
  %vm374 = vcmask 261120
  %v376 = vsel %vm374, %v166, 0
  %v379 = vsel %vm374, %v169, 0
  %v382 = vsel %vm374, %v172, 0
  %v385 = vsel %vm374, %v175, 0
  %v388 = vsel %vm374, %v178, 0
  %v391 = vsel %vm374, %v181, 0
  %393 = vmatprep.subr.bf16.mxu0 %v303
  %394 = vmatpush1.bf16.msra.mxu0 %v302
  %395 = vmatprep.subr.bf16.mxu0 %v305
  %396 = vmatpush1.bf16.msra.mxu0 %v304
  %397 = vmatprep.subr.bf16.mxu0 %v307
  %398 = vmatpush1.bf16.msra.mxu0 %v306
  %399 = vmatprep.subr.bf16.mxu0 %v309
  %400 = vmatpush1.bf16.msra.mxu0 %v308
  %401 = vmatprep.subr.bf16.mxu0 %v311
  %402 = vmatpush1.bf16.msra.mxu0 %v310
  %403 = vmatprep.subr.bf16.mxu0 %v313
  %404 = vmatpush1.bf16.msra.mxu0 %v312
  %405 = vmatprep.subr.bf16.mxu0 %v315
  %406 = vmatpush1.bf16.msra.mxu0 %v314
  %407 = vmatprep.subr.bf16.mxu0 %v317
  %408 = vmatpush1.bf16.msra.mxu0 %v316
  %409 = vmatprep.subr.bf16.mxu0 %v319
  %410 = vmatpush1.bf16.msra.mxu0 %v318
  %411 = vmatprep.subr.bf16.mxu0 %v321
  %412 = vmatpush1.bf16.msra.mxu0 %v320
  %413 = vmatprep.subr.bf16.mxu0 %v323
  %414 = vmatpush1.bf16.msra.mxu0 %v322
  %415 = vmatprep.subr.bf16.mxu0 %v325
  %416 = vmatpush1.bf16.msra.mxu0 %v324
  %417 = vmatprep.subr.bf16.mxu0 %v327
  %418 = vmatpush1.bf16.msra.mxu0 %v326
  %419 = vmatprep.subr.bf16.mxu0 %v329
  %420 = vmatpush1.bf16.msra.mxu0 %v328
  %421 = vmatprep.subr.bf16.mxu0 %v331
  %422 = vmatpush1.bf16.msra.mxu0 %v330
  %423 = vmatprep.subr.bf16.mxu0 %v333
  %424 = vmatpush1.bf16.msra.mxu0 %v332
  %425 = vmatprep.mubr.bf16.mxu0 %v165
  %426 = vmatmul.mubr.bf16.gmra.mrb[0].mxu0 %v164
  %v427 = vpop.f32.mrb[0].mxu0
  %v428 = vadd.f32 %v102, %v427
  %v429 = vpop.f32.mrb[0].mxu0
  %v430 = vadd.f32 %v106, %v429
  %v431 = vpop.f32.mrb[0].mxu0
  %v432 = vadd.f32 %v102, %v431
  %v433 = vpop.f32.mrb[0].mxu0
  %v434 = vadd.f32 %v106, %v433
  %435 = vmatprep.mubr.bf16.mxu0 %v168
  %436 = vmatmul.mubr.bf16.gmra.mrb[0].mxu0 %v167
  %v437 = vpop.f32.mrb[0].mxu0
  %v438 = vadd.f32 %v102, %v437
  %v439 = vpop.f32.mrb[0].mxu0
  %v440 = vadd.f32 %v106, %v439
  %v441 = vpop.f32.mrb[0].mxu0
  %v442 = vadd.f32 %v102, %v441
  %v443 = vpop.f32.mrb[0].mxu0
  %v444 = vadd.f32 %v106, %v443
  %445 = vmatprep.mubr.bf16.mxu0 %v171
  %446 = vmatmul.mubr.bf16.gmra.mrb[0].mxu0 %v170
  %v447 = vpop.f32.mrb[0].mxu0
  %v448 = vadd.f32 %v102, %v447
  %v449 = vpop.f32.mrb[0].mxu0
  %v450 = vadd.f32 %v106, %v449
  %v451 = vpop.f32.mrb[0].mxu0
  %v452 = vadd.f32 %v102, %v451
  %v453 = vpop.f32.mrb[0].mxu0
  %v454 = vadd.f32 %v106, %v453
  %455 = vmatprep.mubr.bf16.mxu0 %v174
  %456 = vmatmul.mubr.bf16.gmra.mrb[0].mxu0 %v173
  %v457 = vpop.f32.mrb[0].mxu0
  %v458 = vadd.f32 %v102, %v457
  %v459 = vpop.f32.mrb[0].mxu0
  %v460 = vadd.f32 %v106, %v459
  %v461 = vpop.f32.mrb[0].mxu0
  %v462 = vadd.f32 %v102, %v461
  %v463 = vpop.f32.mrb[0].mxu0
  %v464 = vadd.f32 %v106, %v463
  %465 = vmatprep.mubr.bf16.mxu0 %v177
  %466 = vmatmul.mubr.bf16.gmra.mrb[0].mxu0 %v176
  %v467 = vpop.f32.mrb[0].mxu0
  %v468 = vadd.f32 %v102, %v467
  %v469 = vpop.f32.mrb[0].mxu0
  %v470 = vadd.f32 %v106, %v469
  %v471 = vpop.f32.mrb[0].mxu0
  %v472 = vadd.f32 %v102, %v471
  %v473 = vpop.f32.mrb[0].mxu0
  %v474 = vadd.f32 %v106, %v473
  %475 = vmatprep.mubr.bf16.mxu0 %v180
  %476 = vmatmul.mubr.bf16.gmra.mrb[0].mxu0 %v179
  %v477 = vpop.f32.mrb[0].mxu0
  %v478 = vadd.f32 %v102, %v477
  %v479 = vpop.f32.mrb[0].mxu0
  %v480 = vadd.f32 %v106, %v479
  %v481 = vpop.f32.mrb[0].mxu0
  %v482 = vpop.f32.mrb[0].mxu0
  %483 = vdwg.mxu0
  %484 = vmatprep.subr.bf16.mxu0 %v335
  %485 = vmatpush1.bf16.msra.mxu0 %v334
  %486 = vmatprep.subr.bf16.mxu0 %v337
  %487 = vmatpush1.bf16.msra.mxu0 %v336
  %488 = vmatprep.subr.bf16.mxu0 0
  %489 = vmatpush1.bf16.msra.mxu0 0
  %490 = vmatprep.subr.bf16.mxu0 0
  %491 = vmatpush1.bf16.msra.mxu0 0
  %492 = vmatprep.subr.bf16.mxu0 0
  %493 = vmatpush1.bf16.msra.mxu0 0
  %494 = vmatprep.subr.bf16.mxu0 0
  %495 = vmatpush1.bf16.msra.mxu0 0
  %496 = vmatprep.subr.bf16.mxu0 0
  %497 = vmatpush1.bf16.msra.mxu0 0
  %498 = vmatprep.subr.bf16.mxu0 0
  %499 = vmatpush1.bf16.msra.mxu0 0
  %500 = vmatprep.subr.bf16.mxu0 0
  %501 = vmatpush1.bf16.msra.mxu0 0
  %502 = vmatprep.subr.bf16.mxu0 0
  %503 = vmatpush1.bf16.msra.mxu0 0
  %504 = vmatprep.subr.bf16.mxu0 0
  %505 = vmatpush1.bf16.msra.mxu0 0
  %506 = vmatprep.subr.bf16.mxu0 0
  %507 = vmatpush1.bf16.msra.mxu0 0
  %508 = vmatprep.subr.bf16.mxu0 0
  %509 = vmatpush1.bf16.msra.mxu0 0
  %510 = vmatprep.subr.bf16.mxu0 0
  %511 = vmatpush1.bf16.msra.mxu0 0
  %512 = vmatprep.subr.bf16.mxu0 0
  %513 = vmatpush1.bf16.msra.mxu0 0
  %514 = vmatprep.subr.bf16.mxu0 0
  %515 = vmatpush1.bf16.msra.mxu0 0
  %516 = vmatprep.mubr.bf16.mxu0 0
  %517 = vmatmul.mubr.bf16.gmra.mrb[0].mxu0 %v376
  %v518 = vpop.f32.mrb[0].mxu0
  %v519 = vadd.f32 %v428, %v518
  %v520 = vpop.f32.mrb[0].mxu0
  %v521 = vadd.f32 %v430, %v520
  %v522 = vpop.f32.mrb[0].mxu0
  %v523 = vadd.f32 %v432, %v522
  %v524 = vpop.f32.mrb[0].mxu0
  %v525 = vadd.f32 %v434, %v524
  %526 = vmatprep.mubr.bf16.mxu0 0
  %527 = vmatmul.mubr.bf16.gmra.mrb[0].mxu0 %v379
  %v528 = vpop.f32.mrb[0].mxu0
  %v529 = vadd.f32 %v438, %v528
  %v530 = vpop.f32.mrb[0].mxu0
  %v531 = vadd.f32 %v440, %v530
  %v532 = vpop.f32.mrb[0].mxu0
  %v533 = vadd.f32 %v442, %v532
  %v534 = vpop.f32.mrb[0].mxu0
  %v535 = vadd.f32 %v444, %v534
  %536 = vmatprep.mubr.bf16.mxu0 0
  %537 = vmatmul.mubr.bf16.gmra.mrb[0].mxu0 %v382
  %v538 = vpop.f32.mrb[0].mxu0
  %v539 = vadd.f32 %v448, %v538
  %v540 = vpop.f32.mrb[0].mxu0
  %v541 = vadd.f32 %v450, %v540
  %v542 = vpop.f32.mrb[0].mxu0
  %v543 = vadd.f32 %v452, %v542
  %v544 = vpop.f32.mrb[0].mxu0
  %v545 = vadd.f32 %v454, %v544
  %546 = vmatprep.mubr.bf16.mxu0 0
  %547 = vmatmul.mubr.bf16.gmra.mrb[0].mxu0 %v385
  %v548 = vpop.f32.mrb[0].mxu0
  %v549 = vadd.f32 %v458, %v548
  %v550 = vpop.f32.mrb[0].mxu0
  %v551 = vadd.f32 %v460, %v550
  %v552 = vpop.f32.mrb[0].mxu0
  %v553 = vadd.f32 %v462, %v552
  %v554 = vpop.f32.mrb[0].mxu0
  %v555 = vadd.f32 %v464, %v554
  %556 = vmatprep.mubr.bf16.mxu0 0
  %557 = vmatmul.mubr.bf16.gmra.mrb[0].mxu0 %v388
  %v558 = vpop.f32.mrb[0].mxu0
  %v559 = vadd.f32 %v468, %v558
  %v560 = vpop.f32.mrb[0].mxu0
  %v561 = vadd.f32 %v470, %v560
  %v562 = vpop.f32.mrb[0].mxu0
  %v563 = vadd.f32 %v472, %v562
  %v564 = vpop.f32.mrb[0].mxu0
  %v565 = vadd.f32 %v474, %v564
  %566 = vmatprep.mubr.bf16.mxu0 0
  %567 = vmatmul.mubr.bf16.gmra.mrb[0].mxu0 %v391
  %v568 = vpop.f32.mrb[0].mxu0
  %v569 = vadd.f32 %v478, %v568
  %v570 = vpop.f32.mrb[0].mxu0
  %v571 = vadd.f32 %v480, %v570
  %v572 = vpop.f32.mrb[0].mxu0
  %v573 = vpop.f32.mrb[0].mxu0
  %574 = vdwg.mxu0
  %v575 = vmax.f32 %v519, 0.0
  %v576 = vmax.f32 %v521, 0.0
  %v577 = vmax.f32 %v523, 0.0
  %v578 = vmax.f32 %v525, 0.0
  %v579 = vmax.f32 %v529, 0.0
  %v580 = vmax.f32 %v531, 0.0
  %v581 = vmax.f32 %v533, 0.0
  %v582 = vmax.f32 %v535, 0.0
  %v583 = vmax.f32 %v539, 0.0
  %v584 = vmax.f32 %v541, 0.0
  %v585 = vmax.f32 %v543, 0.0
  %v586 = vmax.f32 %v545, 0.0
  %v587 = vmax.f32 %v549, 0.0
  %v588 = vmax.f32 %v551, 0.0
  %v589 = vmax.f32 %v553, 0.0
  %v590 = vmax.f32 %v555, 0.0
  %v591 = vmax.f32 %v559, 0.0
  %v592 = vmax.f32 %v561, 0.0
  %v593 = vmax.f32 %v563, 0.0
  %v594 = vmax.f32 %v565, 0.0
  %v595 = vmax.f32 %v569, 0.0
  %v596 = vmax.f32 %v571, 0.0
  %v597 = vpack.c.bf16 %v577, %v575
  %v598 = vpack.c.bf16 %v578, %v576
  %v599 = vpack.c.bf16 %v581, %v579
  %v600 = vpack.c.bf16 %v582, %v580
  %v601 = vpack.c.bf16 %v585, %v583
  %v602 = vpack.c.bf16 %v586, %v584
  %v603 = vpack.c.bf16 %v589, %v587
  %v604 = vpack.c.bf16 %v590, %v588
  %v605 = vpack.c.bf16 %v593, %v591
  %v606 = vpack.c.bf16 %v594, %v592
  %v607 = vpack.c.bf16 %v595, %v595
  %v608 = vpack.c.bf16 %v596, %v596
  %v621 = vunpack.c.l.b16 %v597
  %v622 = vunpack.c.l.b16 %v598
  %v623 = vunpack.c.h.b16 %v597
  %v624 = vunpack.c.h.b16 %v598
  %v625 = vunpack.c.l.b16 %v599
  %v626 = vunpack.c.l.b16 %v600
  %v627 = vunpack.c.h.b16 %v599
  %v628 = vunpack.c.h.b16 %v600
  %v629 = vunpack.c.l.b16 %v601
  %v630 = vunpack.c.l.b16 %v602
  %v631 = vunpack.c.h.b16 %v601
  %v632 = vunpack.c.h.b16 %v602
  %v633 = vunpack.c.l.b16 %v603
  %v634 = vunpack.c.l.b16 %v604
  %v635 = vunpack.c.h.b16 %v603
  %v636 = vunpack.c.h.b16 %v604
  %v637 = vunpack.c.l.b16 %v605
  %v638 = vunpack.c.l.b16 %v606
  %v639 = vunpack.c.h.b16 %v605
  %v640 = vunpack.c.h.b16 %v606
  %v641 = vunpack.c.l.b16 %v607
  %v642 = vunpack.c.l.b16 %v608
  %v643 = vpack.c.b16 %v622, %v621
  %v644 = vpack.c.b16 %v624, %v623
  %v645 = vpack.c.b16 %v626, %v625
  %v646 = vpack.c.b16 %v628, %v627
  %v647 = vpack.c.b16 %v630, %v629
  %v648 = vpack.c.b16 %v632, %v631
  %v649 = vpack.c.b16 %v634, %v633
  %v650 = vpack.c.b16 %v636, %v635
  %v651 = vpack.c.b16 %v638, %v637
  %v652 = vpack.c.b16 %v640, %v639
  %v653 = vpack.c.b16 %v642, %v641
  %665 = vst [vmem:[#allocation2] sm:$0xff] %v643
  %666 = vst [vmem:[#allocation2 + $0x8] sm:$0xff] %v644
  %667 = vst [vmem:[#allocation2 + $0x10] sm:$0xff] %v645
  %668 = vst [vmem:[#allocation2 + $0x18] sm:$0xff] %v646
  %669 = vst [vmem:[#allocation2 + $0x20] sm:$0xff] %v647
  %670 = vst [vmem:[#allocation2 + $0x28] sm:$0xff] %v648
  %671 = vst [vmem:[#allocation2 + $0x30] sm:$0xff] %v649
  %672 = vst [vmem:[#allocation2 + $0x38] sm:$0xff] %v650
  %673 = vst [vmem:[#allocation2 + $0x40] sm:$0xff] %v651
  %674 = vst [vmem:[#allocation2 + $0x48] sm:$0xff] %v652
  %675 = vst [vmem:[#allocation2 + $0x50] sm:$0xff] %v653
  %v676 = vld [vmem:[%s1] sm:$0xff]
  %v677 = vld [vmem:[%s8] sm:$0x1]
  %v679 = vlaneseq
  %v680 = vshrl.u32 %v679, 7
  %v681 = vsub.s32 0, %v680
  %v682 = vrot.slane %v677, %v681
  %v684 = vadd.f32 %v682, 0.0
  %v685 = vld [vmem:[%s7] sm:$0x1]
  %687 = vset.pattern.permute.xlu0 0
  %688 = vperm.xlu0 %687, %v676
  %v689 = vpop.permute.xlu0 %688
  %v691 = vlaneseq
  %v692 = vshrl.u32 %v691, 7
  %v693 = vsub.s32 0, %v692
  %v694 = vrot.slane %v685, %v693
  %v695 = vmul.f32 %v689, %v694
  %v696 = vadd.f32 %v684, %v695
  %v697 = vld [vmem:[%s7 + $0x1] sm:$0x1]
  %698 = vset.pattern.permute.xlu0 1
  %699 = vperm.xlu0 %698, %v676
  %v700 = vpop.permute.xlu0 %699
  %v702 = vlaneseq
  %v703 = vshrl.u32 %v702, 7
  %v704 = vsub.s32 0, %v703
  %v705 = vrot.slane %v697, %v704
  %v706 = vmul.f32 %v700, %v705
  %v707 = vadd.f32 %v696, %v706
  %v708 = vld [vmem:[%s7 + $0x2] sm:$0x1]
  %709 = vset.pattern.permute.xlu0 2
  %710 = vperm.xlu0 %709, %v676
  %v711 = vpop.permute.xlu0 %710
  %v713 = vlaneseq
  %v714 = vshrl.u32 %v713, 7
  %v715 = vsub.s32 0, %v714
  %v716 = vrot.slane %v708, %v715
  %v717 = vmul.f32 %v711, %v716
  %v718 = vadd.f32 %v707, %v717
  %v719 = vmax.f32 %v718, 0.0
  %v720 = vpack.c.bf16 %v719, %v719
  %v721 = vld [vmem:[%s5] sm:$0xff]
  %v722 = vld [vmem:[%s5 + $0x8] sm:$0xff]
  %v723 = vld [vmem:[%s5 + $0x10] sm:$0xff]
  %v724 = vld [vmem:[%s5 + $0x18] sm:$0xff]
  %v725 = vld [vmem:[#allocation2] sm:$0xff]
  %v726 = vld [vmem:[%s4] sm:$0xff]
  %v727 = vld [vmem:[%s4 + $0x8] sm:$0xff]
  %v728 = vld [vmem:[%s4 + $0x10] sm:$0xff]
  %v729 = vld [vmem:[%s4 + $0x18] sm:$0xff]
  %v730 = vld [vmem:[%s4 + $0x20] sm:$0xff]
  %v731 = vld [vmem:[%s4 + $0x28] sm:$0xff]
  %v732 = vld [vmem:[%s4 + $0x30] sm:$0xff]
  %v733 = vld [vmem:[%s4 + $0x38] sm:$0xff]
  %v734 = vld [vmem:[%s4 + $0x40] sm:$0xff]
  %v735 = vld [vmem:[%s4 + $0x48] sm:$0xff]
  %v736 = vld [vmem:[%s4 + $0x50] sm:$0xff]
  %v737 = vld [vmem:[%s4 + $0x58] sm:$0xff]
  %v738 = vld [vmem:[%s4 + $0x60] sm:$0xff]
  %v739 = vld [vmem:[%s4 + $0x68] sm:$0xff]
  %v740 = vld [vmem:[%s4 + $0x70] sm:$0xff]
  %v741 = vld [vmem:[%s4 + $0x78] sm:$0xff]
  %v742 = vld [vmem:[%s4 + $0x80] sm:$0xff]
  %v743 = vld [vmem:[%s4 + $0x88] sm:$0xff]
  %v744 = vld [vmem:[%s4 + $0x90] sm:$0xff]
  %v745 = vld [vmem:[%s4 + $0x98] sm:$0xff]
  %v746 = vld [vmem:[%s4 + $0xa0] sm:$0xff]
  %v747 = vld [vmem:[%s4 + $0xa8] sm:$0xff]
  %v748 = vld [vmem:[%s4 + $0xb0] sm:$0xff]
  %v749 = vld [vmem:[%s4 + $0xb8] sm:$0xff]
  %v750 = vld [vmem:[%s4 + $0xc0] sm:$0xff]
  %v751 = vld [vmem:[%s4 + $0xc8] sm:$0xff]
  %v752 = vld [vmem:[%s4 + $0xd0] sm:$0xff]
  %v753 = vld [vmem:[%s4 + $0xd8] sm:$0xff]
  %v754 = vld [vmem:[%s4 + $0xe0] sm:$0xff]
  %v755 = vld [vmem:[%s4 + $0xe8] sm:$0xff]
  %v756 = vld [vmem:[%s4 + $0xf0] sm:$0xff]
  %v757 = vld [vmem:[%s4 + $0xf8] sm:$0xff]
  %v759 = vunpack.c.l.b16 %v725
  %v760 = vunpack.c.h.b16 %v725
  %v761 = vpack.c.b16 %v759, %v759
  %v762 = vpack.c.b16 %v760, %v760
  %v797 = vunpack.c.l.b16 %v726
  %v798 = vunpack.c.h.b16 %v726
  %v799 = vunpack.c.l.b16 %v727
  %v800 = vunpack.c.h.b16 %v727
  %v801 = vunpack.c.l.b16 %v728
  %v802 = vunpack.c.h.b16 %v728
  %v803 = vunpack.c.l.b16 %v729
  %v804 = vunpack.c.h.b16 %v729
  %v805 = vunpack.c.l.b16 %v730
  %v806 = vunpack.c.h.b16 %v730
  %v807 = vunpack.c.l.b16 %v731
  %v808 = vunpack.c.h.b16 %v731
  %v809 = vunpack.c.l.b16 %v732
  %v810 = vunpack.c.h.b16 %v732
  %v811 = vunpack.c.l.b16 %v733
  %v812 = vunpack.c.h.b16 %v733
  %v813 = vunpack.c.l.b16 %v734
  %v814 = vunpack.c.h.b16 %v734
  %v815 = vunpack.c.l.b16 %v735
  %v816 = vunpack.c.h.b16 %v735
  %v817 = vunpack.c.l.b16 %v736
  %v818 = vunpack.c.h.b16 %v736
  %v819 = vunpack.c.l.b16 %v737
  %v820 = vunpack.c.h.b16 %v737
  %v821 = vunpack.c.l.b16 %v738
  %v822 = vunpack.c.h.b16 %v738
  %v823 = vunpack.c.l.b16 %v739
  %v824 = vunpack.c.h.b16 %v739
  %v825 = vunpack.c.l.b16 %v740
  %v826 = vunpack.c.h.b16 %v740
  %v827 = vunpack.c.l.b16 %v741
  %v828 = vunpack.c.h.b16 %v741
  %v829 = vunpack.c.l.b16 %v742
  %v830 = vunpack.c.h.b16 %v742
  %v831 = vunpack.c.l.b16 %v743
  %v832 = vunpack.c.h.b16 %v743
  %v833 = vunpack.c.l.b16 %v744
  %v834 = vunpack.c.h.b16 %v744
  %v835 = vunpack.c.l.b16 %v745
  %v836 = vunpack.c.h.b16 %v745
  %v837 = vunpack.c.l.b16 %v746
  %v838 = vunpack.c.h.b16 %v746
  %v839 = vunpack.c.l.b16 %v747
  %v840 = vunpack.c.h.b16 %v747
  %v841 = vunpack.c.l.b16 %v748
  %v842 = vunpack.c.h.b16 %v748
  %v843 = vunpack.c.l.b16 %v749
  %v844 = vunpack.c.h.b16 %v749
  %v845 = vunpack.c.l.b16 %v750
  %v846 = vunpack.c.h.b16 %v750
  %v847 = vunpack.c.l.b16 %v751
  %v848 = vunpack.c.h.b16 %v751
  %v849 = vunpack.c.l.b16 %v752
  %v850 = vunpack.c.h.b16 %v752
  %v851 = vunpack.c.l.b16 %v753
  %v852 = vunpack.c.h.b16 %v753
  %v853 = vunpack.c.l.b16 %v754
  %v854 = vunpack.c.h.b16 %v754
  %v855 = vunpack.c.l.b16 %v755
  %v856 = vunpack.c.h.b16 %v755
  %v857 = vunpack.c.l.b16 %v756
  %v858 = vunpack.c.h.b16 %v756
  %v859 = vunpack.c.l.b16 %v757
  %v860 = vunpack.c.h.b16 %v757
  %v861 = vpack.c.b16 %v799, %v797
  %v862 = vpack.c.b16 %v800, %v798
  %v863 = vpack.c.b16 %v803, %v801
  %v864 = vpack.c.b16 %v804, %v802
  %v865 = vpack.c.b16 %v807, %v805
  %v866 = vpack.c.b16 %v808, %v806
  %v867 = vpack.c.b16 %v811, %v809
  %v868 = vpack.c.b16 %v812, %v810
  %v869 = vpack.c.b16 %v815, %v813
  %v870 = vpack.c.b16 %v816, %v814
  %v871 = vpack.c.b16 %v819, %v817
  %v872 = vpack.c.b16 %v820, %v818
  %v873 = vpack.c.b16 %v823, %v821
  %v874 = vpack.c.b16 %v824, %v822
  %v875 = vpack.c.b16 %v827, %v825
  %v876 = vpack.c.b16 %v828, %v826
  %v877 = vpack.c.b16 %v831, %v829
  %v878 = vpack.c.b16 %v832, %v830
  %v879 = vpack.c.b16 %v835, %v833
  %v880 = vpack.c.b16 %v836, %v834
  %v881 = vpack.c.b16 %v839, %v837
  %v882 = vpack.c.b16 %v840, %v838
  %v883 = vpack.c.b16 %v843, %v841
  %v884 = vpack.c.b16 %v844, %v842
  %v885 = vpack.c.b16 %v847, %v845
  %v886 = vpack.c.b16 %v848, %v846
  %v887 = vpack.c.b16 %v851, %v849
  %v888 = vpack.c.b16 %v852, %v850
  %v889 = vpack.c.b16 %v855, %v853
  %v890 = vpack.c.b16 %v856, %v854
  %v891 = vpack.c.b16 %v859, %v857
  %v892 = vpack.c.b16 %v860, %v858
  %925 = vmatprep.subr.bf16.mxu0 %v862
  %926 = vmatpush1.bf16.msra.mxu0 %v861
  %927 = vmatprep.subr.bf16.mxu0 %v864
  %928 = vmatpush1.bf16.msra.mxu0 %v863
  %929 = vmatprep.subr.bf16.mxu0 %v866
  %930 = vmatpush1.bf16.msra.mxu0 %v865
  %931 = vmatprep.subr.bf16.mxu0 %v868
  %932 = vmatpush1.bf16.msra.mxu0 %v867
  %933 = vmatprep.subr.bf16.mxu0 %v870
  %934 = vmatpush1.bf16.msra.mxu0 %v869
  %935 = vmatprep.subr.bf16.mxu0 %v872
  %936 = vmatpush1.bf16.msra.mxu0 %v871
  %937 = vmatprep.subr.bf16.mxu0 %v874
  %938 = vmatpush1.bf16.msra.mxu0 %v873
  %939 = vmatprep.subr.bf16.mxu0 %v876
  %940 = vmatpush1.bf16.msra.mxu0 %v875
  %941 = vmatprep.subr.bf16.mxu0 %v878
  %942 = vmatpush1.bf16.msra.mxu0 %v877
  %943 = vmatprep.subr.bf16.mxu0 %v880
  %944 = vmatpush1.bf16.msra.mxu0 %v879
  %945 = vmatprep.subr.bf16.mxu0 %v882
  %946 = vmatpush1.bf16.msra.mxu0 %v881
  %947 = vmatprep.subr.bf16.mxu0 %v884
  %948 = vmatpush1.bf16.msra.mxu0 %v883
  %949 = vmatprep.subr.bf16.mxu0 %v886
  %950 = vmatpush1.bf16.msra.mxu0 %v885
  %951 = vmatprep.subr.bf16.mxu0 %v888
  %952 = vmatpush1.bf16.msra.mxu0 %v887
  %953 = vmatprep.subr.bf16.mxu0 %v890
  %954 = vmatpush1.bf16.msra.mxu0 %v889
  %955 = vmatprep.subr.bf16.mxu0 %v892
  %956 = vmatpush1.bf16.msra.mxu0 %v891
  %957 = vmatprep.mubr.bf16.mxu0 %v762
  %958 = vmatmul.mubr.bf16.gmra.mrb[0].mxu0 %v761
  %v959 = vpop.f32.mrb[0].mxu0
  %v960 = vadd.f32 0.0, %v959
  %v961 = vpop.f32.mrb[0].mxu0
  %v962 = vadd.f32 0.0, %v961
  %v963 = vpop.f32.mrb[0].mxu0
  %v964 = vpop.f32.mrb[0].mxu0
  %965 = vdwg.mxu0
  %v970 = vunpack.c.l.b16 %v721
  %v971 = vunpack.c.h.b16 %v721
  %v972 = vunpack.c.l.b16 %v722
  %v973 = vunpack.c.h.b16 %v722
  %v974 = vunpack.c.l.b16 %v723
  %v975 = vunpack.c.h.b16 %v723
  %v976 = vunpack.c.l.b16 %v724
  %v977 = vunpack.c.h.b16 %v724
  %v978 = vpack.c.b16 %v972, %v970
  %v979 = vpack.c.b16 %v973, %v971
  %v980 = vpack.c.b16 %v976, %v974
  %v981 = vpack.c.b16 %v977, %v975
  %v987 = vsel %vm374, %v720, 0
  %989 = vmatprep.subr.bf16.mxu0 %v979
  %990 = vmatpush1.bf16.msra.mxu0 %v978
  %991 = vmatprep.subr.bf16.mxu0 %v981
  %992 = vmatpush1.bf16.msra.mxu0 %v980
  %993 = vmatprep.subr.bf16.mxu0 0
  %994 = vmatpush1.bf16.msra.mxu0 0
  %995 = vmatprep.subr.bf16.mxu0 0
  %996 = vmatpush1.bf16.msra.mxu0 0
  %997 = vmatprep.subr.bf16.mxu0 0
  %998 = vmatpush1.bf16.msra.mxu0 0
  %999 = vmatprep.subr.bf16.mxu0 0
  %1000 = vmatpush1.bf16.msra.mxu0 0
  %1001 = vmatprep.subr.bf16.mxu0 0
  %1002 = vmatpush1.bf16.msra.mxu0 0
  %1003 = vmatprep.subr.bf16.mxu0 0
  %1004 = vmatpush1.bf16.msra.mxu0 0
  %1005 = vmatprep.subr.bf16.mxu0 0
  %1006 = vmatpush1.bf16.msra.mxu0 0
  %1007 = vmatprep.subr.bf16.mxu0 0
  %1008 = vmatpush1.bf16.msra.mxu0 0
  %1009 = vmatprep.subr.bf16.mxu0 0
  %1010 = vmatpush1.bf16.msra.mxu0 0
  %1011 = vmatprep.subr.bf16.mxu0 0
  %1012 = vmatpush1.bf16.msra.mxu0 0
  %1013 = vmatprep.subr.bf16.mxu0 0
  %1014 = vmatpush1.bf16.msra.mxu0 0
  %1015 = vmatprep.subr.bf16.mxu0 0
  %1016 = vmatpush1.bf16.msra.mxu0 0
  %1017 = vmatprep.subr.bf16.mxu0 0
  %1018 = vmatpush1.bf16.msra.mxu0 0
  %1019 = vmatprep.subr.bf16.mxu0 0
  %1020 = vmatpush1.bf16.msra.mxu0 0
  %1021 = vmatprep.mubr.bf16.mxu0 0
  %1022 = vmatmul.mubr.bf16.gmra.mrb[0].mxu0 %v987
  %v1023 = vpop.f32.mrb[0].mxu0
  %v1024 = vadd.f32 %v960, %v1023
  %v1025 = vpop.f32.mrb[0].mxu0
  %v1026 = vadd.f32 %v962, %v1025
  %v1027 = vpop.f32.mrb[0].mxu0
  %v1028 = vpop.f32.mrb[0].mxu0
  %1029 = vdwg.mxu0
  %v1030 = vld [vmem:[#allocation2 + $0x8] sm:$0xff]
  %s1031 = scalar_lea.vmem %s4, 256
  %v1032 = vld [vmem:[%s1031] sm:$0xff]
  %v1033 = vld [vmem:[%s1031 + $0x8] sm:$0xff]
  %v1034 = vld [vmem:[%s1031 + $0x10] sm:$0xff]
  %v1035 = vld [vmem:[%s1031 + $0x18] sm:$0xff]
  %v1036 = vld [vmem:[%s1031 + $0x20] sm:$0xff]
  %v1037 = vld [vmem:[%s1031 + $0x28] sm:$0xff]
  %v1038 = vld [vmem:[%s1031 + $0x30] sm:$0xff]
  %v1039 = vld [vmem:[%s1031 + $0x38] sm:$0xff]
  %v1040 = vld [vmem:[%s1031 + $0x40] sm:$0xff]
  %v1041 = vld [vmem:[%s1031 + $0x48] sm:$0xff]
  %v1042 = vld [vmem:[%s1031 + $0x50] sm:$0xff]
  %v1043 = vld [vmem:[%s1031 + $0x58] sm:$0xff]
  %v1044 = vld [vmem:[%s1031 + $0x60] sm:$0xff]
  %v1045 = vld [vmem:[%s1031 + $0x68] sm:$0xff]
  %v1046 = vld [vmem:[%s1031 + $0x70] sm:$0xff]
  %v1047 = vld [vmem:[%s1031 + $0x78] sm:$0xff]
  %v1048 = vld [vmem:[%s1031 + $0x80] sm:$0xff]
  %v1049 = vld [vmem:[%s1031 + $0x88] sm:$0xff]
  %v1050 = vld [vmem:[%s1031 + $0x90] sm:$0xff]
  %v1051 = vld [vmem:[%s1031 + $0x98] sm:$0xff]
  %v1052 = vld [vmem:[%s1031 + $0xa0] sm:$0xff]
  %v1053 = vld [vmem:[%s1031 + $0xa8] sm:$0xff]
  %v1054 = vld [vmem:[%s1031 + $0xb0] sm:$0xff]
  %v1055 = vld [vmem:[%s1031 + $0xb8] sm:$0xff]
  %v1056 = vld [vmem:[%s1031 + $0xc0] sm:$0xff]
  %v1057 = vld [vmem:[%s1031 + $0xc8] sm:$0xff]
  %v1058 = vld [vmem:[%s1031 + $0xd0] sm:$0xff]
  %v1059 = vld [vmem:[%s1031 + $0xd8] sm:$0xff]
  %v1060 = vld [vmem:[%s1031 + $0xe0] sm:$0xff]
  %v1061 = vld [vmem:[%s1031 + $0xe8] sm:$0xff]
  %v1062 = vld [vmem:[%s1031 + $0xf0] sm:$0xff]
  %v1063 = vld [vmem:[%s1031 + $0xf8] sm:$0xff]
  %v1065 = vunpack.c.l.b16 %v1030
  %v1066 = vunpack.c.h.b16 %v1030
  %v1067 = vpack.c.b16 %v1065, %v1065
  %v1068 = vpack.c.b16 %v1066, %v1066
  %v1103 = vunpack.c.l.b16 %v1032
  %v1104 = vunpack.c.h.b16 %v1032
  %v1105 = vunpack.c.l.b16 %v1033
  %v1106 = vunpack.c.h.b16 %v1033
  %v1107 = vunpack.c.l.b16 %v1034
  %v1108 = vunpack.c.h.b16 %v1034
  %v1109 = vunpack.c.l.b16 %v1035
  %v1110 = vunpack.c.h.b16 %v1035
  %v1111 = vunpack.c.l.b16 %v1036
  %v1112 = vunpack.c.h.b16 %v1036
  %v1113 = vunpack.c.l.b16 %v1037
  %v1114 = vunpack.c.h.b16 %v1037
  %v1115 = vunpack.c.l.b16 %v1038
  %v1116 = vunpack.c.h.b16 %v1038
  %v1117 = vunpack.c.l.b16 %v1039
  %v1118 = vunpack.c.h.b16 %v1039
  %v1119 = vunpack.c.l.b16 %v1040
  %v1120 = vunpack.c.h.b16 %v1040
  %v1121 = vunpack.c.l.b16 %v1041
  %v1122 = vunpack.c.h.b16 %v1041
  %v1123 = vunpack.c.l.b16 %v1042
  %v1124 = vunpack.c.h.b16 %v1042
  %v1125 = vunpack.c.l.b16 %v1043
  %v1126 = vunpack.c.h.b16 %v1043
  %v1127 = vunpack.c.l.b16 %v1044
  %v1128 = vunpack.c.h.b16 %v1044
  %v1129 = vunpack.c.l.b16 %v1045
  %v1130 = vunpack.c.h.b16 %v1045
  %v1131 = vunpack.c.l.b16 %v1046
  %v1132 = vunpack.c.h.b16 %v1046
  %v1133 = vunpack.c.l.b16 %v1047
  %v1134 = vunpack.c.h.b16 %v1047
  %v1135 = vunpack.c.l.b16 %v1048
  %v1136 = vunpack.c.h.b16 %v1048
  %v1137 = vunpack.c.l.b16 %v1049
  %v1138 = vunpack.c.h.b16 %v1049
  %v1139 = vunpack.c.l.b16 %v1050
  %v1140 = vunpack.c.h.b16 %v1050
  %v1141 = vunpack.c.l.b16 %v1051
  %v1142 = vunpack.c.h.b16 %v1051
  %v1143 = vunpack.c.l.b16 %v1052
  %v1144 = vunpack.c.h.b16 %v1052
  %v1145 = vunpack.c.l.b16 %v1053
  %v1146 = vunpack.c.h.b16 %v1053
  %v1147 = vunpack.c.l.b16 %v1054
  %v1148 = vunpack.c.h.b16 %v1054
  %v1149 = vunpack.c.l.b16 %v1055
  %v1150 = vunpack.c.h.b16 %v1055
  %v1151 = vunpack.c.l.b16 %v1056
  %v1152 = vunpack.c.h.b16 %v1056
  %v1153 = vunpack.c.l.b16 %v1057
  %v1154 = vunpack.c.h.b16 %v1057
  %v1155 = vunpack.c.l.b16 %v1058
  %v1156 = vunpack.c.h.b16 %v1058
  %v1157 = vunpack.c.l.b16 %v1059
  %v1158 = vunpack.c.h.b16 %v1059
  %v1159 = vunpack.c.l.b16 %v1060
  %v1160 = vunpack.c.h.b16 %v1060
  %v1161 = vunpack.c.l.b16 %v1061
  %v1162 = vunpack.c.h.b16 %v1061
  %v1163 = vunpack.c.l.b16 %v1062
  %v1164 = vunpack.c.h.b16 %v1062
  %v1165 = vunpack.c.l.b16 %v1063
  %v1166 = vunpack.c.h.b16 %v1063
  %v1167 = vpack.c.b16 %v1105, %v1103
  %v1168 = vpack.c.b16 %v1106, %v1104
  %v1169 = vpack.c.b16 %v1109, %v1107
  %v1170 = vpack.c.b16 %v1110, %v1108
  %v1171 = vpack.c.b16 %v1113, %v1111
  %v1172 = vpack.c.b16 %v1114, %v1112
  %v1173 = vpack.c.b16 %v1117, %v1115
  %v1174 = vpack.c.b16 %v1118, %v1116
  %v1175 = vpack.c.b16 %v1121, %v1119
  %v1176 = vpack.c.b16 %v1122, %v1120
  %v1177 = vpack.c.b16 %v1125, %v1123
  %v1178 = vpack.c.b16 %v1126, %v1124
  %v1179 = vpack.c.b16 %v1129, %v1127
  %v1180 = vpack.c.b16 %v1130, %v1128
  %v1181 = vpack.c.b16 %v1133, %v1131
  %v1182 = vpack.c.b16 %v1134, %v1132
  %v1183 = vpack.c.b16 %v1137, %v1135
  %v1184 = vpack.c.b16 %v1138, %v1136
  %v1185 = vpack.c.b16 %v1141, %v1139
  %v1186 = vpack.c.b16 %v1142, %v1140
  %v1187 = vpack.c.b16 %v1145, %v1143
  %v1188 = vpack.c.b16 %v1146, %v1144
  %v1189 = vpack.c.b16 %v1149, %v1147
  %v1190 = vpack.c.b16 %v1150, %v1148
  %v1191 = vpack.c.b16 %v1153, %v1151
  %v1192 = vpack.c.b16 %v1154, %v1152
  %v1193 = vpack.c.b16 %v1157, %v1155
  %v1194 = vpack.c.b16 %v1158, %v1156
  %v1195 = vpack.c.b16 %v1161, %v1159
  %v1196 = vpack.c.b16 %v1162, %v1160
  %v1197 = vpack.c.b16 %v1165, %v1163
  %v1198 = vpack.c.b16 %v1166, %v1164
  %1231 = vmatprep.subr.bf16.mxu0 %v1168
  %1232 = vmatpush1.bf16.msra.mxu0 %v1167
  %1233 = vmatprep.subr.bf16.mxu0 %v1170
  %1234 = vmatpush1.bf16.msra.mxu0 %v1169
  %1235 = vmatprep.subr.bf16.mxu0 %v1172
  %1236 = vmatpush1.bf16.msra.mxu0 %v1171
  %1237 = vmatprep.subr.bf16.mxu0 %v1174
  %1238 = vmatpush1.bf16.msra.mxu0 %v1173
  %1239 = vmatprep.subr.bf16.mxu0 %v1176
  %1240 = vmatpush1.bf16.msra.mxu0 %v1175
  %1241 = vmatprep.subr.bf16.mxu0 %v1178
  %1242 = vmatpush1.bf16.msra.mxu0 %v1177
  %1243 = vmatprep.subr.bf16.mxu0 %v1180
  %1244 = vmatpush1.bf16.msra.mxu0 %v1179
  %1245 = vmatprep.subr.bf16.mxu0 %v1182
  %1246 = vmatpush1.bf16.msra.mxu0 %v1181
  %1247 = vmatprep.subr.bf16.mxu0 %v1184
  %1248 = vmatpush1.bf16.msra.mxu0 %v1183
  %1249 = vmatprep.subr.bf16.mxu0 %v1186
  %1250 = vmatpush1.bf16.msra.mxu0 %v1185
  %1251 = vmatprep.subr.bf16.mxu0 %v1188
  %1252 = vmatpush1.bf16.msra.mxu0 %v1187
  %1253 = vmatprep.subr.bf16.mxu0 %v1190
  %1254 = vmatpush1.bf16.msra.mxu0 %v1189
  %1255 = vmatprep.subr.bf16.mxu0 %v1192
  %1256 = vmatpush1.bf16.msra.mxu0 %v1191
  %1257 = vmatprep.subr.bf16.mxu0 %v1194
  %1258 = vmatpush1.bf16.msra.mxu0 %v1193
  %1259 = vmatprep.subr.bf16.mxu0 %v1196
  %1260 = vmatpush1.bf16.msra.mxu0 %v1195
  %1261 = vmatprep.subr.bf16.mxu0 %v1198
  %1262 = vmatpush1.bf16.msra.mxu0 %v1197
  %1263 = vmatprep.mubr.bf16.mxu0 %v1068
  %1264 = vmatmul.mubr.bf16.gmra.mrb[0].mxu0 %v1067
  %v1265 = vpop.f32.mrb[0].mxu0
  %v1266 = vadd.f32 0.0, %v1265
  %v1267 = vpop.f32.mrb[0].mxu0
  %v1268 = vadd.f32 0.0, %v1267
  %v1269 = vpop.f32.mrb[0].mxu0
  %v1270 = vpop.f32.mrb[0].mxu0
  %1271 = vdwg.mxu0
  %v1272 = vadd.f32 %v1024, %v1266
  %v1273 = vadd.f32 %v1026, %v1268
  %v1274 = vld [vmem:[#allocation2 + $0x10] sm:$0xff]
  %s1275 = scalar_lea.vmem %s4, 512
  %v1276 = vld [vmem:[%s1275] sm:$0xff]
  %v1277 = vld [vmem:[%s1275 + $0x8] sm:$0xff]
  %v1278 = vld [vmem:[%s1275 + $0x10] sm:$0xff]
  %v1279 = vld [vmem:[%s1275 + $0x18] sm:$0xff]
  %v1280 = vld [vmem:[%s1275 + $0x20] sm:$0xff]
  %v1281 = vld [vmem:[%s1275 + $0x28] sm:$0xff]
  %v1282 = vld [vmem:[%s1275 + $0x30] sm:$0xff]
  %v1283 = vld [vmem:[%s1275 + $0x38] sm:$0xff]
  %v1284 = vld [vmem:[%s1275 + $0x40] sm:$0xff]
  %v1285 = vld [vmem:[%s1275 + $0x48] sm:$0xff]
  %v1286 = vld [vmem:[%s1275 + $0x50] sm:$0xff]
  %v1287 = vld [vmem:[%s1275 + $0x58] sm:$0xff]
  %v1288 = vld [vmem:[%s1275 + $0x60] sm:$0xff]
  %v1289 = vld [vmem:[%s1275 + $0x68] sm:$0xff]
  %v1290 = vld [vmem:[%s1275 + $0x70] sm:$0xff]
  %v1291 = vld [vmem:[%s1275 + $0x78] sm:$0xff]
  %v1292 = vld [vmem:[%s1275 + $0x80] sm:$0xff]
  %v1293 = vld [vmem:[%s1275 + $0x88] sm:$0xff]
  %v1294 = vld [vmem:[%s1275 + $0x90] sm:$0xff]
  %v1295 = vld [vmem:[%s1275 + $0x98] sm:$0xff]
  %v1296 = vld [vmem:[%s1275 + $0xa0] sm:$0xff]
  %v1297 = vld [vmem:[%s1275 + $0xa8] sm:$0xff]
  %v1298 = vld [vmem:[%s1275 + $0xb0] sm:$0xff]
  %v1299 = vld [vmem:[%s1275 + $0xb8] sm:$0xff]
  %v1300 = vld [vmem:[%s1275 + $0xc0] sm:$0xff]
  %v1301 = vld [vmem:[%s1275 + $0xc8] sm:$0xff]
  %v1302 = vld [vmem:[%s1275 + $0xd0] sm:$0xff]
  %v1303 = vld [vmem:[%s1275 + $0xd8] sm:$0xff]
  %v1304 = vld [vmem:[%s1275 + $0xe0] sm:$0xff]
  %v1305 = vld [vmem:[%s1275 + $0xe8] sm:$0xff]
  %v1306 = vld [vmem:[%s1275 + $0xf0] sm:$0xff]
  %v1307 = vld [vmem:[%s1275 + $0xf8] sm:$0xff]
  %v1309 = vunpack.c.l.b16 %v1274
  %v1310 = vunpack.c.h.b16 %v1274
  %v1311 = vpack.c.b16 %v1309, %v1309
  %v1312 = vpack.c.b16 %v1310, %v1310
  %v1347 = vunpack.c.l.b16 %v1276
  %v1348 = vunpack.c.h.b16 %v1276
  %v1349 = vunpack.c.l.b16 %v1277
  %v1350 = vunpack.c.h.b16 %v1277
  %v1351 = vunpack.c.l.b16 %v1278
  %v1352 = vunpack.c.h.b16 %v1278
  %v1353 = vunpack.c.l.b16 %v1279
  %v1354 = vunpack.c.h.b16 %v1279
  %v1355 = vunpack.c.l.b16 %v1280
  %v1356 = vunpack.c.h.b16 %v1280
  %v1357 = vunpack.c.l.b16 %v1281
  %v1358 = vunpack.c.h.b16 %v1281
  %v1359 = vunpack.c.l.b16 %v1282
  %v1360 = vunpack.c.h.b16 %v1282
  %v1361 = vunpack.c.l.b16 %v1283
  %v1362 = vunpack.c.h.b16 %v1283
  %v1363 = vunpack.c.l.b16 %v1284
  %v1364 = vunpack.c.h.b16 %v1284
  %v1365 = vunpack.c.l.b16 %v1285
  %v1366 = vunpack.c.h.b16 %v1285
  %v1367 = vunpack.c.l.b16 %v1286
  %v1368 = vunpack.c.h.b16 %v1286
  %v1369 = vunpack.c.l.b16 %v1287
  %v1370 = vunpack.c.h.b16 %v1287
  %v1371 = vunpack.c.l.b16 %v1288
  %v1372 = vunpack.c.h.b16 %v1288
  %v1373 = vunpack.c.l.b16 %v1289
  %v1374 = vunpack.c.h.b16 %v1289
  %v1375 = vunpack.c.l.b16 %v1290
  %v1376 = vunpack.c.h.b16 %v1290
  %v1377 = vunpack.c.l.b16 %v1291
  %v1378 = vunpack.c.h.b16 %v1291
  %v1379 = vunpack.c.l.b16 %v1292
  %v1380 = vunpack.c.h.b16 %v1292
  %v1381 = vunpack.c.l.b16 %v1293
  %v1382 = vunpack.c.h.b16 %v1293
  %v1383 = vunpack.c.l.b16 %v1294
  %v1384 = vunpack.c.h.b16 %v1294
  %v1385 = vunpack.c.l.b16 %v1295
  %v1386 = vunpack.c.h.b16 %v1295
  %v1387 = vunpack.c.l.b16 %v1296
  %v1388 = vunpack.c.h.b16 %v1296
  %v1389 = vunpack.c.l.b16 %v1297
  %v1390 = vunpack.c.h.b16 %v1297
  %v1391 = vunpack.c.l.b16 %v1298
  %v1392 = vunpack.c.h.b16 %v1298
  %v1393 = vunpack.c.l.b16 %v1299
  %v1394 = vunpack.c.h.b16 %v1299
  %v1395 = vunpack.c.l.b16 %v1300
  %v1396 = vunpack.c.h.b16 %v1300
  %v1397 = vunpack.c.l.b16 %v1301
  %v1398 = vunpack.c.h.b16 %v1301
  %v1399 = vunpack.c.l.b16 %v1302
  %v1400 = vunpack.c.h.b16 %v1302
  %v1401 = vunpack.c.l.b16 %v1303
  %v1402 = vunpack.c.h.b16 %v1303
  %v1403 = vunpack.c.l.b16 %v1304
  %v1404 = vunpack.c.h.b16 %v1304
  %v1405 = vunpack.c.l.b16 %v1305
  %v1406 = vunpack.c.h.b16 %v1305
  %v1407 = vunpack.c.l.b16 %v1306
  %v1408 = vunpack.c.h.b16 %v1306
  %v1409 = vunpack.c.l.b16 %v1307
  %v1410 = vunpack.c.h.b16 %v1307
  %v1411 = vpack.c.b16 %v1349, %v1347
  %v1412 = vpack.c.b16 %v1350, %v1348
  %v1413 = vpack.c.b16 %v1353, %v1351
  %v1414 = vpack.c.b16 %v1354, %v1352
  %v1415 = vpack.c.b16 %v1357, %v1355
  %v1416 = vpack.c.b16 %v1358, %v1356
  %v1417 = vpack.c.b16 %v1361, %v1359
  %v1418 = vpack.c.b16 %v1362, %v1360
  %v1419 = vpack.c.b16 %v1365, %v1363
  %v1420 = vpack.c.b16 %v1366, %v1364
  %v1421 = vpack.c.b16 %v1369, %v1367
  %v1422 = vpack.c.b16 %v1370, %v1368
  %v1423 = vpack.c.b16 %v1373, %v1371
  %v1424 = vpack.c.b16 %v1374, %v1372
  %v1425 = vpack.c.b16 %v1377, %v1375
  %v1426 = vpack.c.b16 %v1378, %v1376
  %v1427 = vpack.c.b16 %v1381, %v1379
  %v1428 = vpack.c.b16 %v1382, %v1380
  %v1429 = vpack.c.b16 %v1385, %v1383
  %v1430 = vpack.c.b16 %v1386, %v1384
  %v1431 = vpack.c.b16 %v1389, %v1387
  %v1432 = vpack.c.b16 %v1390, %v1388
  %v1433 = vpack.c.b16 %v1393, %v1391
  %v1434 = vpack.c.b16 %v1394, %v1392
  %v1435 = vpack.c.b16 %v1397, %v1395
  %v1436 = vpack.c.b16 %v1398, %v1396
  %v1437 = vpack.c.b16 %v1401, %v1399
  %v1438 = vpack.c.b16 %v1402, %v1400
  %v1439 = vpack.c.b16 %v1405, %v1403
  %v1440 = vpack.c.b16 %v1406, %v1404
  %v1441 = vpack.c.b16 %v1409, %v1407
  %v1442 = vpack.c.b16 %v1410, %v1408
  %1475 = vmatprep.subr.bf16.mxu0 %v1412
  %1476 = vmatpush1.bf16.msra.mxu0 %v1411
  %1477 = vmatprep.subr.bf16.mxu0 %v1414
  %1478 = vmatpush1.bf16.msra.mxu0 %v1413
  %1479 = vmatprep.subr.bf16.mxu0 %v1416
  %1480 = vmatpush1.bf16.msra.mxu0 %v1415
  %1481 = vmatprep.subr.bf16.mxu0 %v1418
  %1482 = vmatpush1.bf16.msra.mxu0 %v1417
  %1483 = vmatprep.subr.bf16.mxu0 %v1420
  %1484 = vmatpush1.bf16.msra.mxu0 %v1419
  %1485 = vmatprep.subr.bf16.mxu0 %v1422
  %1486 = vmatpush1.bf16.msra.mxu0 %v1421
  %1487 = vmatprep.subr.bf16.mxu0 %v1424
  %1488 = vmatpush1.bf16.msra.mxu0 %v1423
  %1489 = vmatprep.subr.bf16.mxu0 %v1426
  %1490 = vmatpush1.bf16.msra.mxu0 %v1425
  %1491 = vmatprep.subr.bf16.mxu0 %v1428
  %1492 = vmatpush1.bf16.msra.mxu0 %v1427
  %1493 = vmatprep.subr.bf16.mxu0 %v1430
  %1494 = vmatpush1.bf16.msra.mxu0 %v1429
  %1495 = vmatprep.subr.bf16.mxu0 %v1432
  %1496 = vmatpush1.bf16.msra.mxu0 %v1431
  %1497 = vmatprep.subr.bf16.mxu0 %v1434
  %1498 = vmatpush1.bf16.msra.mxu0 %v1433
  %1499 = vmatprep.subr.bf16.mxu0 %v1436
  %1500 = vmatpush1.bf16.msra.mxu0 %v1435
  %1501 = vmatprep.subr.bf16.mxu0 %v1438
  %1502 = vmatpush1.bf16.msra.mxu0 %v1437
  %1503 = vmatprep.subr.bf16.mxu0 %v1440
  %1504 = vmatpush1.bf16.msra.mxu0 %v1439
  %1505 = vmatprep.subr.bf16.mxu0 %v1442
  %1506 = vmatpush1.bf16.msra.mxu0 %v1441
  %1507 = vmatprep.mubr.bf16.mxu0 %v1312
  %1508 = vmatmul.mubr.bf16.gmra.mrb[0].mxu0 %v1311
  %v1509 = vpop.f32.mrb[0].mxu0
  %v1510 = vadd.f32 0.0, %v1509
  %v1511 = vpop.f32.mrb[0].mxu0
  %v1512 = vadd.f32 0.0, %v1511
  %v1513 = vpop.f32.mrb[0].mxu0
  %v1514 = vpop.f32.mrb[0].mxu0
  %1515 = vdwg.mxu0
  %v1516 = vadd.f32 %v1272, %v1510
  %v1517 = vadd.f32 %v1273, %v1512
  %v1518 = vld [vmem:[#allocation2 + $0x18] sm:$0xff]
  %s1519 = scalar_lea.vmem %s4, 768
  %v1520 = vld [vmem:[%s1519] sm:$0xff]
  %v1521 = vld [vmem:[%s1519 + $0x8] sm:$0xff]
  %v1522 = vld [vmem:[%s1519 + $0x10] sm:$0xff]
  %v1523 = vld [vmem:[%s1519 + $0x18] sm:$0xff]
  %v1524 = vld [vmem:[%s1519 + $0x20] sm:$0xff]
  %v1525 = vld [vmem:[%s1519 + $0x28] sm:$0xff]
  %v1526 = vld [vmem:[%s1519 + $0x30] sm:$0xff]
  %v1527 = vld [vmem:[%s1519 + $0x38] sm:$0xff]
  %v1528 = vld [vmem:[%s1519 + $0x40] sm:$0xff]
  %v1529 = vld [vmem:[%s1519 + $0x48] sm:$0xff]
  %v1530 = vld [vmem:[%s1519 + $0x50] sm:$0xff]
  %v1531 = vld [vmem:[%s1519 + $0x58] sm:$0xff]
  %v1532 = vld [vmem:[%s1519 + $0x60] sm:$0xff]
  %v1533 = vld [vmem:[%s1519 + $0x68] sm:$0xff]
  %v1534 = vld [vmem:[%s1519 + $0x70] sm:$0xff]
  %v1535 = vld [vmem:[%s1519 + $0x78] sm:$0xff]
  %v1536 = vld [vmem:[%s1519 + $0x80] sm:$0xff]
  %v1537 = vld [vmem:[%s1519 + $0x88] sm:$0xff]
  %v1538 = vld [vmem:[%s1519 + $0x90] sm:$0xff]
  %v1539 = vld [vmem:[%s1519 + $0x98] sm:$0xff]
  %v1540 = vld [vmem:[%s1519 + $0xa0] sm:$0xff]
  %v1541 = vld [vmem:[%s1519 + $0xa8] sm:$0xff]
  %v1542 = vld [vmem:[%s1519 + $0xb0] sm:$0xff]
  %v1543 = vld [vmem:[%s1519 + $0xb8] sm:$0xff]
  %v1544 = vld [vmem:[%s1519 + $0xc0] sm:$0xff]
  %v1545 = vld [vmem:[%s1519 + $0xc8] sm:$0xff]
  %v1546 = vld [vmem:[%s1519 + $0xd0] sm:$0xff]
  %v1547 = vld [vmem:[%s1519 + $0xd8] sm:$0xff]
  %v1548 = vld [vmem:[%s1519 + $0xe0] sm:$0xff]
  %v1549 = vld [vmem:[%s1519 + $0xe8] sm:$0xff]
  %v1550 = vld [vmem:[%s1519 + $0xf0] sm:$0xff]
  %v1551 = vld [vmem:[%s1519 + $0xf8] sm:$0xff]
  %v1553 = vunpack.c.l.b16 %v1518
  %v1554 = vunpack.c.h.b16 %v1518
  %v1555 = vpack.c.b16 %v1553, %v1553
  %v1556 = vpack.c.b16 %v1554, %v1554
  %v1591 = vunpack.c.l.b16 %v1520
  %v1592 = vunpack.c.h.b16 %v1520
  %v1593 = vunpack.c.l.b16 %v1521
  %v1594 = vunpack.c.h.b16 %v1521
  %v1595 = vunpack.c.l.b16 %v1522
  %v1596 = vunpack.c.h.b16 %v1522
  %v1597 = vunpack.c.l.b16 %v1523
  %v1598 = vunpack.c.h.b16 %v1523
  %v1599 = vunpack.c.l.b16 %v1524
  %v1600 = vunpack.c.h.b16 %v1524
  %v1601 = vunpack.c.l.b16 %v1525
  %v1602 = vunpack.c.h.b16 %v1525
  %v1603 = vunpack.c.l.b16 %v1526
  %v1604 = vunpack.c.h.b16 %v1526
  %v1605 = vunpack.c.l.b16 %v1527
  %v1606 = vunpack.c.h.b16 %v1527
  %v1607 = vunpack.c.l.b16 %v1528
  %v1608 = vunpack.c.h.b16 %v1528
  %v1609 = vunpack.c.l.b16 %v1529
  %v1610 = vunpack.c.h.b16 %v1529
  %v1611 = vunpack.c.l.b16 %v1530
  %v1612 = vunpack.c.h.b16 %v1530
  %v1613 = vunpack.c.l.b16 %v1531
  %v1614 = vunpack.c.h.b16 %v1531
  %v1615 = vunpack.c.l.b16 %v1532
  %v1616 = vunpack.c.h.b16 %v1532
  %v1617 = vunpack.c.l.b16 %v1533
  %v1618 = vunpack.c.h.b16 %v1533
  %v1619 = vunpack.c.l.b16 %v1534
  %v1620 = vunpack.c.h.b16 %v1534
  %v1621 = vunpack.c.l.b16 %v1535
  %v1622 = vunpack.c.h.b16 %v1535
  %v1623 = vunpack.c.l.b16 %v1536
  %v1624 = vunpack.c.h.b16 %v1536
  %v1625 = vunpack.c.l.b16 %v1537
  %v1626 = vunpack.c.h.b16 %v1537
  %v1627 = vunpack.c.l.b16 %v1538
  %v1628 = vunpack.c.h.b16 %v1538
  %v1629 = vunpack.c.l.b16 %v1539
  %v1630 = vunpack.c.h.b16 %v1539
  %v1631 = vunpack.c.l.b16 %v1540
  %v1632 = vunpack.c.h.b16 %v1540
  %v1633 = vunpack.c.l.b16 %v1541
  %v1634 = vunpack.c.h.b16 %v1541
  %v1635 = vunpack.c.l.b16 %v1542
  %v1636 = vunpack.c.h.b16 %v1542
  %v1637 = vunpack.c.l.b16 %v1543
  %v1638 = vunpack.c.h.b16 %v1543
  %v1639 = vunpack.c.l.b16 %v1544
  %v1640 = vunpack.c.h.b16 %v1544
  %v1641 = vunpack.c.l.b16 %v1545
  %v1642 = vunpack.c.h.b16 %v1545
  %v1643 = vunpack.c.l.b16 %v1546
  %v1644 = vunpack.c.h.b16 %v1546
  %v1645 = vunpack.c.l.b16 %v1547
  %v1646 = vunpack.c.h.b16 %v1547
  %v1647 = vunpack.c.l.b16 %v1548
  %v1648 = vunpack.c.h.b16 %v1548
  %v1649 = vunpack.c.l.b16 %v1549
  %v1650 = vunpack.c.h.b16 %v1549
  %v1651 = vunpack.c.l.b16 %v1550
  %v1652 = vunpack.c.h.b16 %v1550
  %v1653 = vunpack.c.l.b16 %v1551
  %v1654 = vunpack.c.h.b16 %v1551
  %v1655 = vpack.c.b16 %v1593, %v1591
  %v1656 = vpack.c.b16 %v1594, %v1592
  %v1657 = vpack.c.b16 %v1597, %v1595
  %v1658 = vpack.c.b16 %v1598, %v1596
  %v1659 = vpack.c.b16 %v1601, %v1599
  %v1660 = vpack.c.b16 %v1602, %v1600
  %v1661 = vpack.c.b16 %v1605, %v1603
  %v1662 = vpack.c.b16 %v1606, %v1604
  %v1663 = vpack.c.b16 %v1609, %v1607
  %v1664 = vpack.c.b16 %v1610, %v1608
  %v1665 = vpack.c.b16 %v1613, %v1611
  %v1666 = vpack.c.b16 %v1614, %v1612
  %v1667 = vpack.c.b16 %v1617, %v1615
  %v1668 = vpack.c.b16 %v1618, %v1616
  %v1669 = vpack.c.b16 %v1621, %v1619
  %v1670 = vpack.c.b16 %v1622, %v1620
  %v1671 = vpack.c.b16 %v1625, %v1623
  %v1672 = vpack.c.b16 %v1626, %v1624
  %v1673 = vpack.c.b16 %v1629, %v1627
  %v1674 = vpack.c.b16 %v1630, %v1628
  %v1675 = vpack.c.b16 %v1633, %v1631
  %v1676 = vpack.c.b16 %v1634, %v1632
  %v1677 = vpack.c.b16 %v1637, %v1635
  %v1678 = vpack.c.b16 %v1638, %v1636
  %v1679 = vpack.c.b16 %v1641, %v1639
  %v1680 = vpack.c.b16 %v1642, %v1640
  %v1681 = vpack.c.b16 %v1645, %v1643
  %v1682 = vpack.c.b16 %v1646, %v1644
  %v1683 = vpack.c.b16 %v1649, %v1647
  %v1684 = vpack.c.b16 %v1650, %v1648
  %v1685 = vpack.c.b16 %v1653, %v1651
  %v1686 = vpack.c.b16 %v1654, %v1652
  %1719 = vmatprep.subr.bf16.mxu0 %v1656
  %1720 = vmatpush1.bf16.msra.mxu0 %v1655
  %1721 = vmatprep.subr.bf16.mxu0 %v1658
  %1722 = vmatpush1.bf16.msra.mxu0 %v1657
  %1723 = vmatprep.subr.bf16.mxu0 %v1660
  %1724 = vmatpush1.bf16.msra.mxu0 %v1659
  %1725 = vmatprep.subr.bf16.mxu0 %v1662
  %1726 = vmatpush1.bf16.msra.mxu0 %v1661
  %1727 = vmatprep.subr.bf16.mxu0 %v1664
  %1728 = vmatpush1.bf16.msra.mxu0 %v1663
  %1729 = vmatprep.subr.bf16.mxu0 %v1666
  %1730 = vmatpush1.bf16.msra.mxu0 %v1665
  %1731 = vmatprep.subr.bf16.mxu0 %v1668
  %1732 = vmatpush1.bf16.msra.mxu0 %v1667
  %1733 = vmatprep.subr.bf16.mxu0 %v1670
  %1734 = vmatpush1.bf16.msra.mxu0 %v1669
  %1735 = vmatprep.subr.bf16.mxu0 %v1672
  %1736 = vmatpush1.bf16.msra.mxu0 %v1671
  %1737 = vmatprep.subr.bf16.mxu0 %v1674
  %1738 = vmatpush1.bf16.msra.mxu0 %v1673
  %1739 = vmatprep.subr.bf16.mxu0 %v1676
  %1740 = vmatpush1.bf16.msra.mxu0 %v1675
  %1741 = vmatprep.subr.bf16.mxu0 %v1678
  %1742 = vmatpush1.bf16.msra.mxu0 %v1677
  %1743 = vmatprep.subr.bf16.mxu0 %v1680
  %1744 = vmatpush1.bf16.msra.mxu0 %v1679
  %1745 = vmatprep.subr.bf16.mxu0 %v1682
  %1746 = vmatpush1.bf16.msra.mxu0 %v1681
  %1747 = vmatprep.subr.bf16.mxu0 %v1684
  %1748 = vmatpush1.bf16.msra.mxu0 %v1683
  %1749 = vmatprep.subr.bf16.mxu0 %v1686
  %1750 = vmatpush1.bf16.msra.mxu0 %v1685
  %1751 = vmatprep.mubr.bf16.mxu0 %v1556
  %1752 = vmatmul.mubr.bf16.gmra.mrb[0].mxu0 %v1555
  %v1753 = vpop.f32.mrb[0].mxu0
  %v1754 = vadd.f32 0.0, %v1753
  %v1755 = vpop.f32.mrb[0].mxu0
  %v1756 = vadd.f32 0.0, %v1755
  %v1757 = vpop.f32.mrb[0].mxu0
  %v1758 = vpop.f32.mrb[0].mxu0
  %1759 = vdwg.mxu0
  %v1760 = vadd.f32 %v1516, %v1754
  %v1761 = vadd.f32 %v1517, %v1756
  %v1762 = vld [vmem:[#allocation2 + $0x20] sm:$0xff]
  %s1763 = scalar_lea.vmem %s4, 1024
  %v1764 = vld [vmem:[%s1763] sm:$0xff]
  %v1765 = vld [vmem:[%s1763 + $0x8] sm:$0xff]
  %v1766 = vld [vmem:[%s1763 + $0x10] sm:$0xff]
  %v1767 = vld [vmem:[%s1763 + $0x18] sm:$0xff]
  %v1768 = vld [vmem:[%s1763 + $0x20] sm:$0xff]
  %v1769 = vld [vmem:[%s1763 + $0x28] sm:$0xff]
  %v1770 = vld [vmem:[%s1763 + $0x30] sm:$0xff]
  %v1771 = vld [vmem:[%s1763 + $0x38] sm:$0xff]
  %v1772 = vld [vmem:[%s1763 + $0x40] sm:$0xff]
  %v1773 = vld [vmem:[%s1763 + $0x48] sm:$0xff]
  %v1774 = vld [vmem:[%s1763 + $0x50] sm:$0xff]
  %v1775 = vld [vmem:[%s1763 + $0x58] sm:$0xff]
  %v1776 = vld [vmem:[%s1763 + $0x60] sm:$0xff]
  %v1777 = vld [vmem:[%s1763 + $0x68] sm:$0xff]
  %v1778 = vld [vmem:[%s1763 + $0x70] sm:$0xff]
  %v1779 = vld [vmem:[%s1763 + $0x78] sm:$0xff]
  %v1780 = vld [vmem:[%s1763 + $0x80] sm:$0xff]
  %v1781 = vld [vmem:[%s1763 + $0x88] sm:$0xff]
  %v1782 = vld [vmem:[%s1763 + $0x90] sm:$0xff]
  %v1783 = vld [vmem:[%s1763 + $0x98] sm:$0xff]
  %v1784 = vld [vmem:[%s1763 + $0xa0] sm:$0xff]
  %v1785 = vld [vmem:[%s1763 + $0xa8] sm:$0xff]
  %v1786 = vld [vmem:[%s1763 + $0xb0] sm:$0xff]
  %v1787 = vld [vmem:[%s1763 + $0xb8] sm:$0xff]
  %v1788 = vld [vmem:[%s1763 + $0xc0] sm:$0xff]
  %v1789 = vld [vmem:[%s1763 + $0xc8] sm:$0xff]
  %v1790 = vld [vmem:[%s1763 + $0xd0] sm:$0xff]
  %v1791 = vld [vmem:[%s1763 + $0xd8] sm:$0xff]
  %v1792 = vld [vmem:[%s1763 + $0xe0] sm:$0xff]
  %v1793 = vld [vmem:[%s1763 + $0xe8] sm:$0xff]
  %v1794 = vld [vmem:[%s1763 + $0xf0] sm:$0xff]
  %v1795 = vld [vmem:[%s1763 + $0xf8] sm:$0xff]
  %v1797 = vunpack.c.l.b16 %v1762
  %v1798 = vunpack.c.h.b16 %v1762
  %v1799 = vpack.c.b16 %v1797, %v1797
  %v1800 = vpack.c.b16 %v1798, %v1798
  %v1835 = vunpack.c.l.b16 %v1764
  %v1836 = vunpack.c.h.b16 %v1764
  %v1837 = vunpack.c.l.b16 %v1765
  %v1838 = vunpack.c.h.b16 %v1765
  %v1839 = vunpack.c.l.b16 %v1766
  %v1840 = vunpack.c.h.b16 %v1766
  %v1841 = vunpack.c.l.b16 %v1767
  %v1842 = vunpack.c.h.b16 %v1767
  %v1843 = vunpack.c.l.b16 %v1768
  %v1844 = vunpack.c.h.b16 %v1768
  %v1845 = vunpack.c.l.b16 %v1769
  %v1846 = vunpack.c.h.b16 %v1769
  %v1847 = vunpack.c.l.b16 %v1770
  %v1848 = vunpack.c.h.b16 %v1770
  %v1849 = vunpack.c.l.b16 %v1771
  %v1850 = vunpack.c.h.b16 %v1771
  %v1851 = vunpack.c.l.b16 %v1772
  %v1852 = vunpack.c.h.b16 %v1772
  %v1853 = vunpack.c.l.b16 %v1773
  %v1854 = vunpack.c.h.b16 %v1773
  %v1855 = vunpack.c.l.b16 %v1774
  %v1856 = vunpack.c.h.b16 %v1774
  %v1857 = vunpack.c.l.b16 %v1775
  %v1858 = vunpack.c.h.b16 %v1775
  %v1859 = vunpack.c.l.b16 %v1776
  %v1860 = vunpack.c.h.b16 %v1776
  %v1861 = vunpack.c.l.b16 %v1777
  %v1862 = vunpack.c.h.b16 %v1777
  %v1863 = vunpack.c.l.b16 %v1778
  %v1864 = vunpack.c.h.b16 %v1778
  %v1865 = vunpack.c.l.b16 %v1779
  %v1866 = vunpack.c.h.b16 %v1779
  %v1867 = vunpack.c.l.b16 %v1780
  %v1868 = vunpack.c.h.b16 %v1780
  %v1869 = vunpack.c.l.b16 %v1781
  %v1870 = vunpack.c.h.b16 %v1781
  %v1871 = vunpack.c.l.b16 %v1782
  %v1872 = vunpack.c.h.b16 %v1782
  %v1873 = vunpack.c.l.b16 %v1783
  %v1874 = vunpack.c.h.b16 %v1783
  %v1875 = vunpack.c.l.b16 %v1784
  %v1876 = vunpack.c.h.b16 %v1784
  %v1877 = vunpack.c.l.b16 %v1785
  %v1878 = vunpack.c.h.b16 %v1785
  %v1879 = vunpack.c.l.b16 %v1786
  %v1880 = vunpack.c.h.b16 %v1786
  %v1881 = vunpack.c.l.b16 %v1787
  %v1882 = vunpack.c.h.b16 %v1787
  %v1883 = vunpack.c.l.b16 %v1788
  %v1884 = vunpack.c.h.b16 %v1788
  %v1885 = vunpack.c.l.b16 %v1789
  %v1886 = vunpack.c.h.b16 %v1789
  %v1887 = vunpack.c.l.b16 %v1790
  %v1888 = vunpack.c.h.b16 %v1790
  %v1889 = vunpack.c.l.b16 %v1791
  %v1890 = vunpack.c.h.b16 %v1791
  %v1891 = vunpack.c.l.b16 %v1792
  %v1892 = vunpack.c.h.b16 %v1792
  %v1893 = vunpack.c.l.b16 %v1793
  %v1894 = vunpack.c.h.b16 %v1793
  %v1895 = vunpack.c.l.b16 %v1794
  %v1896 = vunpack.c.h.b16 %v1794
  %v1897 = vunpack.c.l.b16 %v1795
  %v1898 = vunpack.c.h.b16 %v1795
  %v1899 = vpack.c.b16 %v1837, %v1835
  %v1900 = vpack.c.b16 %v1838, %v1836
  %v1901 = vpack.c.b16 %v1841, %v1839
  %v1902 = vpack.c.b16 %v1842, %v1840
  %v1903 = vpack.c.b16 %v1845, %v1843
  %v1904 = vpack.c.b16 %v1846, %v1844
  %v1905 = vpack.c.b16 %v1849, %v1847
  %v1906 = vpack.c.b16 %v1850, %v1848
  %v1907 = vpack.c.b16 %v1853, %v1851
  %v1908 = vpack.c.b16 %v1854, %v1852
  %v1909 = vpack.c.b16 %v1857, %v1855
  %v1910 = vpack.c.b16 %v1858, %v1856
  %v1911 = vpack.c.b16 %v1861, %v1859
  %v1912 = vpack.c.b16 %v1862, %v1860
  %v1913 = vpack.c.b16 %v1865, %v1863
  %v1914 = vpack.c.b16 %v1866, %v1864
  %v1915 = vpack.c.b16 %v1869, %v1867
  %v1916 = vpack.c.b16 %v1870, %v1868
  %v1917 = vpack.c.b16 %v1873, %v1871
  %v1918 = vpack.c.b16 %v1874, %v1872
  %v1919 = vpack.c.b16 %v1877, %v1875
  %v1920 = vpack.c.b16 %v1878, %v1876
  %v1921 = vpack.c.b16 %v1881, %v1879
  %v1922 = vpack.c.b16 %v1882, %v1880
  %v1923 = vpack.c.b16 %v1885, %v1883
  %v1924 = vpack.c.b16 %v1886, %v1884
  %v1925 = vpack.c.b16 %v1889, %v1887
  %v1926 = vpack.c.b16 %v1890, %v1888
  %v1927 = vpack.c.b16 %v1893, %v1891
  %v1928 = vpack.c.b16 %v1894, %v1892
  %v1929 = vpack.c.b16 %v1897, %v1895
  %v1930 = vpack.c.b16 %v1898, %v1896
  %1963 = vmatprep.subr.bf16.mxu0 %v1900
  %1964 = vmatpush1.bf16.msra.mxu0 %v1899
  %1965 = vmatprep.subr.bf16.mxu0 %v1902
  %1966 = vmatpush1.bf16.msra.mxu0 %v1901
  %1967 = vmatprep.subr.bf16.mxu0 %v1904
  %1968 = vmatpush1.bf16.msra.mxu0 %v1903
  %1969 = vmatprep.subr.bf16.mxu0 %v1906
  %1970 = vmatpush1.bf16.msra.mxu0 %v1905
  %1971 = vmatprep.subr.bf16.mxu0 %v1908
  %1972 = vmatpush1.bf16.msra.mxu0 %v1907
  %1973 = vmatprep.subr.bf16.mxu0 %v1910
  %1974 = vmatpush1.bf16.msra.mxu0 %v1909
  %1975 = vmatprep.subr.bf16.mxu0 %v1912
  %1976 = vmatpush1.bf16.msra.mxu0 %v1911
  %1977 = vmatprep.subr.bf16.mxu0 %v1914
  %1978 = vmatpush1.bf16.msra.mxu0 %v1913
  %1979 = vmatprep.subr.bf16.mxu0 %v1916
  %1980 = vmatpush1.bf16.msra.mxu0 %v1915
  %1981 = vmatprep.subr.bf16.mxu0 %v1918
  %1982 = vmatpush1.bf16.msra.mxu0 %v1917
  %1983 = vmatprep.subr.bf16.mxu0 %v1920
  %1984 = vmatpush1.bf16.msra.mxu0 %v1919
  %1985 = vmatprep.subr.bf16.mxu0 %v1922
  %1986 = vmatpush1.bf16.msra.mxu0 %v1921
  %1987 = vmatprep.subr.bf16.mxu0 %v1924
  %1988 = vmatpush1.bf16.msra.mxu0 %v1923
  %1989 = vmatprep.subr.bf16.mxu0 %v1926
  %1990 = vmatpush1.bf16.msra.mxu0 %v1925
  %1991 = vmatprep.subr.bf16.mxu0 %v1928
  %1992 = vmatpush1.bf16.msra.mxu0 %v1927
  %1993 = vmatprep.subr.bf16.mxu0 %v1930
  %1994 = vmatpush1.bf16.msra.mxu0 %v1929
  %1995 = vmatprep.mubr.bf16.mxu0 %v1800
  %1996 = vmatmul.mubr.bf16.gmra.mrb[0].mxu0 %v1799
  %v1997 = vpop.f32.mrb[0].mxu0
  %v1998 = vadd.f32 0.0, %v1997
  %v1999 = vpop.f32.mrb[0].mxu0
  %v2000 = vadd.f32 0.0, %v1999
  %v2001 = vpop.f32.mrb[0].mxu0
  %v2002 = vpop.f32.mrb[0].mxu0
  %2003 = vdwg.mxu0
  %v2004 = vadd.f32 %v1760, %v1998
  %v2005 = vadd.f32 %v1761, %v2000
  %v2006 = vld [vmem:[#allocation2 + $0x28] sm:$0xff]
  %s2007 = scalar_lea.vmem %s4, 1280
  %v2008 = vld [vmem:[%s2007] sm:$0xff]
  %v2009 = vld [vmem:[%s2007 + $0x8] sm:$0xff]
  %v2010 = vld [vmem:[%s2007 + $0x10] sm:$0xff]
  %v2011 = vld [vmem:[%s2007 + $0x18] sm:$0xff]
  %v2012 = vld [vmem:[%s2007 + $0x20] sm:$0xff]
  %v2013 = vld [vmem:[%s2007 + $0x28] sm:$0xff]
  %v2014 = vld [vmem:[%s2007 + $0x30] sm:$0xff]
  %v2015 = vld [vmem:[%s2007 + $0x38] sm:$0xff]
  %v2016 = vld [vmem:[%s2007 + $0x40] sm:$0xff]
  %v2017 = vld [vmem:[%s2007 + $0x48] sm:$0xff]
  %v2018 = vld [vmem:[%s2007 + $0x50] sm:$0xff]
  %v2019 = vld [vmem:[%s2007 + $0x58] sm:$0xff]
  %v2020 = vld [vmem:[%s2007 + $0x60] sm:$0xff]
  %v2021 = vld [vmem:[%s2007 + $0x68] sm:$0xff]
  %v2022 = vld [vmem:[%s2007 + $0x70] sm:$0xff]
  %v2023 = vld [vmem:[%s2007 + $0x78] sm:$0xff]
  %v2024 = vld [vmem:[%s2007 + $0x80] sm:$0xff]
  %v2025 = vld [vmem:[%s2007 + $0x88] sm:$0xff]
  %v2026 = vld [vmem:[%s2007 + $0x90] sm:$0xff]
  %v2027 = vld [vmem:[%s2007 + $0x98] sm:$0xff]
  %v2028 = vld [vmem:[%s2007 + $0xa0] sm:$0xff]
  %v2029 = vld [vmem:[%s2007 + $0xa8] sm:$0xff]
  %v2030 = vld [vmem:[%s2007 + $0xb0] sm:$0xff]
  %v2031 = vld [vmem:[%s2007 + $0xb8] sm:$0xff]
  %v2032 = vld [vmem:[%s2007 + $0xc0] sm:$0xff]
  %v2033 = vld [vmem:[%s2007 + $0xc8] sm:$0xff]
  %v2034 = vld [vmem:[%s2007 + $0xd0] sm:$0xff]
  %v2035 = vld [vmem:[%s2007 + $0xd8] sm:$0xff]
  %v2036 = vld [vmem:[%s2007 + $0xe0] sm:$0xff]
  %v2037 = vld [vmem:[%s2007 + $0xe8] sm:$0xff]
  %v2038 = vld [vmem:[%s2007 + $0xf0] sm:$0xff]
  %v2039 = vld [vmem:[%s2007 + $0xf8] sm:$0xff]
  %v2041 = vunpack.c.l.b16 %v2006
  %v2042 = vunpack.c.h.b16 %v2006
  %v2043 = vpack.c.b16 %v2041, %v2041
  %v2044 = vpack.c.b16 %v2042, %v2042
  %v2079 = vunpack.c.l.b16 %v2008
  %v2080 = vunpack.c.h.b16 %v2008
  %v2081 = vunpack.c.l.b16 %v2009
  %v2082 = vunpack.c.h.b16 %v2009
  %v2083 = vunpack.c.l.b16 %v2010
  %v2084 = vunpack.c.h.b16 %v2010
  %v2085 = vunpack.c.l.b16 %v2011
  %v2086 = vunpack.c.h.b16 %v2011
  %v2087 = vunpack.c.l.b16 %v2012
  %v2088 = vunpack.c.h.b16 %v2012
  %v2089 = vunpack.c.l.b16 %v2013
  %v2090 = vunpack.c.h.b16 %v2013
  %v2091 = vunpack.c.l.b16 %v2014
  %v2092 = vunpack.c.h.b16 %v2014
  %v2093 = vunpack.c.l.b16 %v2015
  %v2094 = vunpack.c.h.b16 %v2015
  %v2095 = vunpack.c.l.b16 %v2016
  %v2096 = vunpack.c.h.b16 %v2016
  %v2097 = vunpack.c.l.b16 %v2017
  %v2098 = vunpack.c.h.b16 %v2017
  %v2099 = vunpack.c.l.b16 %v2018
  %v2100 = vunpack.c.h.b16 %v2018
  %v2101 = vunpack.c.l.b16 %v2019
  %v2102 = vunpack.c.h.b16 %v2019
  %v2103 = vunpack.c.l.b16 %v2020
  %v2104 = vunpack.c.h.b16 %v2020
  %v2105 = vunpack.c.l.b16 %v2021
  %v2106 = vunpack.c.h.b16 %v2021
  %v2107 = vunpack.c.l.b16 %v2022
  %v2108 = vunpack.c.h.b16 %v2022
  %v2109 = vunpack.c.l.b16 %v2023
  %v2110 = vunpack.c.h.b16 %v2023
  %v2111 = vunpack.c.l.b16 %v2024
  %v2112 = vunpack.c.h.b16 %v2024
  %v2113 = vunpack.c.l.b16 %v2025
  %v2114 = vunpack.c.h.b16 %v2025
  %v2115 = vunpack.c.l.b16 %v2026
  %v2116 = vunpack.c.h.b16 %v2026
  %v2117 = vunpack.c.l.b16 %v2027
  %v2118 = vunpack.c.h.b16 %v2027
  %v2119 = vunpack.c.l.b16 %v2028
  %v2120 = vunpack.c.h.b16 %v2028
  %v2121 = vunpack.c.l.b16 %v2029
  %v2122 = vunpack.c.h.b16 %v2029
  %v2123 = vunpack.c.l.b16 %v2030
  %v2124 = vunpack.c.h.b16 %v2030
  %v2125 = vunpack.c.l.b16 %v2031
  %v2126 = vunpack.c.h.b16 %v2031
  %v2127 = vunpack.c.l.b16 %v2032
  %v2128 = vunpack.c.h.b16 %v2032
  %v2129 = vunpack.c.l.b16 %v2033
  %v2130 = vunpack.c.h.b16 %v2033
  %v2131 = vunpack.c.l.b16 %v2034
  %v2132 = vunpack.c.h.b16 %v2034
  %v2133 = vunpack.c.l.b16 %v2035
  %v2134 = vunpack.c.h.b16 %v2035
  %v2135 = vunpack.c.l.b16 %v2036
  %v2136 = vunpack.c.h.b16 %v2036
  %v2137 = vunpack.c.l.b16 %v2037
  %v2138 = vunpack.c.h.b16 %v2037
  %v2139 = vunpack.c.l.b16 %v2038
  %v2140 = vunpack.c.h.b16 %v2038
  %v2141 = vunpack.c.l.b16 %v2039
  %v2142 = vunpack.c.h.b16 %v2039
  %v2143 = vpack.c.b16 %v2081, %v2079
  %v2144 = vpack.c.b16 %v2082, %v2080
  %v2145 = vpack.c.b16 %v2085, %v2083
  %v2146 = vpack.c.b16 %v2086, %v2084
  %v2147 = vpack.c.b16 %v2089, %v2087
  %v2148 = vpack.c.b16 %v2090, %v2088
  %v2149 = vpack.c.b16 %v2093, %v2091
  %v2150 = vpack.c.b16 %v2094, %v2092
  %v2151 = vpack.c.b16 %v2097, %v2095
  %v2152 = vpack.c.b16 %v2098, %v2096
  %v2153 = vpack.c.b16 %v2101, %v2099
  %v2154 = vpack.c.b16 %v2102, %v2100
  %v2155 = vpack.c.b16 %v2105, %v2103
  %v2156 = vpack.c.b16 %v2106, %v2104
  %v2157 = vpack.c.b16 %v2109, %v2107
  %v2158 = vpack.c.b16 %v2110, %v2108
  %v2159 = vpack.c.b16 %v2113, %v2111
  %v2160 = vpack.c.b16 %v2114, %v2112
  %v2161 = vpack.c.b16 %v2117, %v2115
  %v2162 = vpack.c.b16 %v2118, %v2116
  %v2163 = vpack.c.b16 %v2121, %v2119
  %v2164 = vpack.c.b16 %v2122, %v2120
  %v2165 = vpack.c.b16 %v2125, %v2123
  %v2166 = vpack.c.b16 %v2126, %v2124
  %v2167 = vpack.c.b16 %v2129, %v2127
  %v2168 = vpack.c.b16 %v2130, %v2128
  %v2169 = vpack.c.b16 %v2133, %v2131
  %v2170 = vpack.c.b16 %v2134, %v2132
  %v2171 = vpack.c.b16 %v2137, %v2135
  %v2172 = vpack.c.b16 %v2138, %v2136
  %v2173 = vpack.c.b16 %v2141, %v2139
  %v2174 = vpack.c.b16 %v2142, %v2140
  %2207 = vmatprep.subr.bf16.mxu0 %v2144
  %2208 = vmatpush1.bf16.msra.mxu0 %v2143
  %2209 = vmatprep.subr.bf16.mxu0 %v2146
  %2210 = vmatpush1.bf16.msra.mxu0 %v2145
  %2211 = vmatprep.subr.bf16.mxu0 %v2148
  %2212 = vmatpush1.bf16.msra.mxu0 %v2147
  %2213 = vmatprep.subr.bf16.mxu0 %v2150
  %2214 = vmatpush1.bf16.msra.mxu0 %v2149
  %2215 = vmatprep.subr.bf16.mxu0 %v2152
  %2216 = vmatpush1.bf16.msra.mxu0 %v2151
  %2217 = vmatprep.subr.bf16.mxu0 %v2154
  %2218 = vmatpush1.bf16.msra.mxu0 %v2153
  %2219 = vmatprep.subr.bf16.mxu0 %v2156
  %2220 = vmatpush1.bf16.msra.mxu0 %v2155
  %2221 = vmatprep.subr.bf16.mxu0 %v2158
  %2222 = vmatpush1.bf16.msra.mxu0 %v2157
  %2223 = vmatprep.subr.bf16.mxu0 %v2160
  %2224 = vmatpush1.bf16.msra.mxu0 %v2159
  %2225 = vmatprep.subr.bf16.mxu0 %v2162
  %2226 = vmatpush1.bf16.msra.mxu0 %v2161
  %2227 = vmatprep.subr.bf16.mxu0 %v2164
  %2228 = vmatpush1.bf16.msra.mxu0 %v2163
  %2229 = vmatprep.subr.bf16.mxu0 %v2166
  %2230 = vmatpush1.bf16.msra.mxu0 %v2165
  %2231 = vmatprep.subr.bf16.mxu0 %v2168
  %2232 = vmatpush1.bf16.msra.mxu0 %v2167
  %2233 = vmatprep.subr.bf16.mxu0 %v2170
  %2234 = vmatpush1.bf16.msra.mxu0 %v2169
  %2235 = vmatprep.subr.bf16.mxu0 %v2172
  %2236 = vmatpush1.bf16.msra.mxu0 %v2171
  %2237 = vmatprep.subr.bf16.mxu0 %v2174
  %2238 = vmatpush1.bf16.msra.mxu0 %v2173
  %2239 = vmatprep.mubr.bf16.mxu0 %v2044
  %2240 = vmatmul.mubr.bf16.gmra.mrb[0].mxu0 %v2043
  %v2241 = vpop.f32.mrb[0].mxu0
  %v2242 = vadd.f32 0.0, %v2241
  %v2243 = vpop.f32.mrb[0].mxu0
  %v2244 = vadd.f32 0.0, %v2243
  %v2245 = vpop.f32.mrb[0].mxu0
  %v2246 = vpop.f32.mrb[0].mxu0
  %2247 = vdwg.mxu0
  %v2248 = vadd.f32 %v2004, %v2242
  %v2249 = vadd.f32 %v2005, %v2244
  %v2250 = vld [vmem:[#allocation2 + $0x30] sm:$0xff]
  %s2251 = scalar_lea.vmem %s4, 1536
  %v2252 = vld [vmem:[%s2251] sm:$0xff]
  %v2253 = vld [vmem:[%s2251 + $0x8] sm:$0xff]
  %v2254 = vld [vmem:[%s2251 + $0x10] sm:$0xff]
  %v2255 = vld [vmem:[%s2251 + $0x18] sm:$0xff]
  %v2256 = vld [vmem:[%s2251 + $0x20] sm:$0xff]
  %v2257 = vld [vmem:[%s2251 + $0x28] sm:$0xff]
  %v2258 = vld [vmem:[%s2251 + $0x30] sm:$0xff]
  %v2259 = vld [vmem:[%s2251 + $0x38] sm:$0xff]
  %v2260 = vld [vmem:[%s2251 + $0x40] sm:$0xff]
  %v2261 = vld [vmem:[%s2251 + $0x48] sm:$0xff]
  %v2262 = vld [vmem:[%s2251 + $0x50] sm:$0xff]
  %v2263 = vld [vmem:[%s2251 + $0x58] sm:$0xff]
  %v2264 = vld [vmem:[%s2251 + $0x60] sm:$0xff]
  %v2265 = vld [vmem:[%s2251 + $0x68] sm:$0xff]
  %v2266 = vld [vmem:[%s2251 + $0x70] sm:$0xff]
  %v2267 = vld [vmem:[%s2251 + $0x78] sm:$0xff]
  %v2268 = vld [vmem:[%s2251 + $0x80] sm:$0xff]
  %v2269 = vld [vmem:[%s2251 + $0x88] sm:$0xff]
  %v2270 = vld [vmem:[%s2251 + $0x90] sm:$0xff]
  %v2271 = vld [vmem:[%s2251 + $0x98] sm:$0xff]
  %v2272 = vld [vmem:[%s2251 + $0xa0] sm:$0xff]
  %v2273 = vld [vmem:[%s2251 + $0xa8] sm:$0xff]
  %v2274 = vld [vmem:[%s2251 + $0xb0] sm:$0xff]
  %v2275 = vld [vmem:[%s2251 + $0xb8] sm:$0xff]
  %v2276 = vld [vmem:[%s2251 + $0xc0] sm:$0xff]
  %v2277 = vld [vmem:[%s2251 + $0xc8] sm:$0xff]
  %v2278 = vld [vmem:[%s2251 + $0xd0] sm:$0xff]
  %v2279 = vld [vmem:[%s2251 + $0xd8] sm:$0xff]
  %v2280 = vld [vmem:[%s2251 + $0xe0] sm:$0xff]
  %v2281 = vld [vmem:[%s2251 + $0xe8] sm:$0xff]
  %v2282 = vld [vmem:[%s2251 + $0xf0] sm:$0xff]
  %v2283 = vld [vmem:[%s2251 + $0xf8] sm:$0xff]
  %v2285 = vunpack.c.l.b16 %v2250
  %v2286 = vunpack.c.h.b16 %v2250
  %v2287 = vpack.c.b16 %v2285, %v2285
  %v2288 = vpack.c.b16 %v2286, %v2286
  %v2323 = vunpack.c.l.b16 %v2252
  %v2324 = vunpack.c.h.b16 %v2252
  %v2325 = vunpack.c.l.b16 %v2253
  %v2326 = vunpack.c.h.b16 %v2253
  %v2327 = vunpack.c.l.b16 %v2254
  %v2328 = vunpack.c.h.b16 %v2254
  %v2329 = vunpack.c.l.b16 %v2255
  %v2330 = vunpack.c.h.b16 %v2255
  %v2331 = vunpack.c.l.b16 %v2256
  %v2332 = vunpack.c.h.b16 %v2256
  %v2333 = vunpack.c.l.b16 %v2257
  %v2334 = vunpack.c.h.b16 %v2257
  %v2335 = vunpack.c.l.b16 %v2258
  %v2336 = vunpack.c.h.b16 %v2258
  %v2337 = vunpack.c.l.b16 %v2259
  %v2338 = vunpack.c.h.b16 %v2259
  %v2339 = vunpack.c.l.b16 %v2260
  %v2340 = vunpack.c.h.b16 %v2260
  %v2341 = vunpack.c.l.b16 %v2261
  %v2342 = vunpack.c.h.b16 %v2261
  %v2343 = vunpack.c.l.b16 %v2262
  %v2344 = vunpack.c.h.b16 %v2262
  %v2345 = vunpack.c.l.b16 %v2263
  %v2346 = vunpack.c.h.b16 %v2263
  %v2347 = vunpack.c.l.b16 %v2264
  %v2348 = vunpack.c.h.b16 %v2264
  %v2349 = vunpack.c.l.b16 %v2265
  %v2350 = vunpack.c.h.b16 %v2265
  %v2351 = vunpack.c.l.b16 %v2266
  %v2352 = vunpack.c.h.b16 %v2266
  %v2353 = vunpack.c.l.b16 %v2267
  %v2354 = vunpack.c.h.b16 %v2267
  %v2355 = vunpack.c.l.b16 %v2268
  %v2356 = vunpack.c.h.b16 %v2268
  %v2357 = vunpack.c.l.b16 %v2269
  %v2358 = vunpack.c.h.b16 %v2269
  %v2359 = vunpack.c.l.b16 %v2270
  %v2360 = vunpack.c.h.b16 %v2270
  %v2361 = vunpack.c.l.b16 %v2271
  %v2362 = vunpack.c.h.b16 %v2271
  %v2363 = vunpack.c.l.b16 %v2272
  %v2364 = vunpack.c.h.b16 %v2272
  %v2365 = vunpack.c.l.b16 %v2273
  %v2366 = vunpack.c.h.b16 %v2273
  %v2367 = vunpack.c.l.b16 %v2274
  %v2368 = vunpack.c.h.b16 %v2274
  %v2369 = vunpack.c.l.b16 %v2275
  %v2370 = vunpack.c.h.b16 %v2275
  %v2371 = vunpack.c.l.b16 %v2276
  %v2372 = vunpack.c.h.b16 %v2276
  %v2373 = vunpack.c.l.b16 %v2277
  %v2374 = vunpack.c.h.b16 %v2277
  %v2375 = vunpack.c.l.b16 %v2278
  %v2376 = vunpack.c.h.b16 %v2278
  %v2377 = vunpack.c.l.b16 %v2279
  %v2378 = vunpack.c.h.b16 %v2279
  %v2379 = vunpack.c.l.b16 %v2280
  %v2380 = vunpack.c.h.b16 %v2280
  %v2381 = vunpack.c.l.b16 %v2281
  %v2382 = vunpack.c.h.b16 %v2281
  %v2383 = vunpack.c.l.b16 %v2282
  %v2384 = vunpack.c.h.b16 %v2282
  %v2385 = vunpack.c.l.b16 %v2283
  %v2386 = vunpack.c.h.b16 %v2283
  %v2387 = vpack.c.b16 %v2325, %v2323
  %v2388 = vpack.c.b16 %v2326, %v2324
  %v2389 = vpack.c.b16 %v2329, %v2327
  %v2390 = vpack.c.b16 %v2330, %v2328
  %v2391 = vpack.c.b16 %v2333, %v2331
  %v2392 = vpack.c.b16 %v2334, %v2332
  %v2393 = vpack.c.b16 %v2337, %v2335
  %v2394 = vpack.c.b16 %v2338, %v2336
  %v2395 = vpack.c.b16 %v2341, %v2339
  %v2396 = vpack.c.b16 %v2342, %v2340
  %v2397 = vpack.c.b16 %v2345, %v2343
  %v2398 = vpack.c.b16 %v2346, %v2344
  %v2399 = vpack.c.b16 %v2349, %v2347
  %v2400 = vpack.c.b16 %v2350, %v2348
  %v2401 = vpack.c.b16 %v2353, %v2351
  %v2402 = vpack.c.b16 %v2354, %v2352
  %v2403 = vpack.c.b16 %v2357, %v2355
  %v2404 = vpack.c.b16 %v2358, %v2356
  %v2405 = vpack.c.b16 %v2361, %v2359
  %v2406 = vpack.c.b16 %v2362, %v2360
  %v2407 = vpack.c.b16 %v2365, %v2363
  %v2408 = vpack.c.b16 %v2366, %v2364
  %v2409 = vpack.c.b16 %v2369, %v2367
  %v2410 = vpack.c.b16 %v2370, %v2368
  %v2411 = vpack.c.b16 %v2373, %v2371
  %v2412 = vpack.c.b16 %v2374, %v2372
  %v2413 = vpack.c.b16 %v2377, %v2375
  %v2414 = vpack.c.b16 %v2378, %v2376
  %v2415 = vpack.c.b16 %v2381, %v2379
  %v2416 = vpack.c.b16 %v2382, %v2380
  %v2417 = vpack.c.b16 %v2385, %v2383
  %v2418 = vpack.c.b16 %v2386, %v2384
  %2451 = vmatprep.subr.bf16.mxu0 %v2388
  %2452 = vmatpush1.bf16.msra.mxu0 %v2387
  %2453 = vmatprep.subr.bf16.mxu0 %v2390
  %2454 = vmatpush1.bf16.msra.mxu0 %v2389
  %2455 = vmatprep.subr.bf16.mxu0 %v2392
  %2456 = vmatpush1.bf16.msra.mxu0 %v2391
  %2457 = vmatprep.subr.bf16.mxu0 %v2394
  %2458 = vmatpush1.bf16.msra.mxu0 %v2393
  %2459 = vmatprep.subr.bf16.mxu0 %v2396
  %2460 = vmatpush1.bf16.msra.mxu0 %v2395
  %2461 = vmatprep.subr.bf16.mxu0 %v2398
  %2462 = vmatpush1.bf16.msra.mxu0 %v2397
  %2463 = vmatprep.subr.bf16.mxu0 %v2400
  %2464 = vmatpush1.bf16.msra.mxu0 %v2399
  %2465 = vmatprep.subr.bf16.mxu0 %v2402
  %2466 = vmatpush1.bf16.msra.mxu0 %v2401
  %2467 = vmatprep.subr.bf16.mxu0 %v2404
  %2468 = vmatpush1.bf16.msra.mxu0 %v2403
  %2469 = vmatprep.subr.bf16.mxu0 %v2406
  %2470 = vmatpush1.bf16.msra.mxu0 %v2405
  %2471 = vmatprep.subr.bf16.mxu0 %v2408
  %2472 = vmatpush1.bf16.msra.mxu0 %v2407
  %2473 = vmatprep.subr.bf16.mxu0 %v2410
  %2474 = vmatpush1.bf16.msra.mxu0 %v2409
  %2475 = vmatprep.subr.bf16.mxu0 %v2412
  %2476 = vmatpush1.bf16.msra.mxu0 %v2411
  %2477 = vmatprep.subr.bf16.mxu0 %v2414
  %2478 = vmatpush1.bf16.msra.mxu0 %v2413
  %2479 = vmatprep.subr.bf16.mxu0 %v2416
  %2480 = vmatpush1.bf16.msra.mxu0 %v2415
  %2481 = vmatprep.subr.bf16.mxu0 %v2418
  %2482 = vmatpush1.bf16.msra.mxu0 %v2417
  %2483 = vmatprep.mubr.bf16.mxu0 %v2288
  %2484 = vmatmul.mubr.bf16.gmra.mrb[0].mxu0 %v2287
  %v2485 = vpop.f32.mrb[0].mxu0
  %v2486 = vadd.f32 0.0, %v2485
  %v2487 = vpop.f32.mrb[0].mxu0
  %v2488 = vadd.f32 0.0, %v2487
  %v2489 = vpop.f32.mrb[0].mxu0
  %v2490 = vpop.f32.mrb[0].mxu0
  %2491 = vdwg.mxu0
  %v2492 = vadd.f32 %v2248, %v2486
  %v2493 = vadd.f32 %v2249, %v2488
  %v2494 = vld [vmem:[#allocation2 + $0x38] sm:$0xff]
  %s2495 = scalar_lea.vmem %s4, 1792
  %v2496 = vld [vmem:[%s2495] sm:$0xff]
  %v2497 = vld [vmem:[%s2495 + $0x8] sm:$0xff]
  %v2498 = vld [vmem:[%s2495 + $0x10] sm:$0xff]
  %v2499 = vld [vmem:[%s2495 + $0x18] sm:$0xff]
  %v2500 = vld [vmem:[%s2495 + $0x20] sm:$0xff]
  %v2501 = vld [vmem:[%s2495 + $0x28] sm:$0xff]
  %v2502 = vld [vmem:[%s2495 + $0x30] sm:$0xff]
  %v2503 = vld [vmem:[%s2495 + $0x38] sm:$0xff]
  %v2504 = vld [vmem:[%s2495 + $0x40] sm:$0xff]
  %v2505 = vld [vmem:[%s2495 + $0x48] sm:$0xff]
  %v2506 = vld [vmem:[%s2495 + $0x50] sm:$0xff]
  %v2507 = vld [vmem:[%s2495 + $0x58] sm:$0xff]
  %v2508 = vld [vmem:[%s2495 + $0x60] sm:$0xff]
  %v2509 = vld [vmem:[%s2495 + $0x68] sm:$0xff]
  %v2510 = vld [vmem:[%s2495 + $0x70] sm:$0xff]
  %v2511 = vld [vmem:[%s2495 + $0x78] sm:$0xff]
  %v2512 = vld [vmem:[%s2495 + $0x80] sm:$0xff]
  %v2513 = vld [vmem:[%s2495 + $0x88] sm:$0xff]
  %v2514 = vld [vmem:[%s2495 + $0x90] sm:$0xff]
  %v2515 = vld [vmem:[%s2495 + $0x98] sm:$0xff]
  %v2516 = vld [vmem:[%s2495 + $0xa0] sm:$0xff]
  %v2517 = vld [vmem:[%s2495 + $0xa8] sm:$0xff]
  %v2518 = vld [vmem:[%s2495 + $0xb0] sm:$0xff]
  %v2519 = vld [vmem:[%s2495 + $0xb8] sm:$0xff]
  %v2520 = vld [vmem:[%s2495 + $0xc0] sm:$0xff]
  %v2521 = vld [vmem:[%s2495 + $0xc8] sm:$0xff]
  %v2522 = vld [vmem:[%s2495 + $0xd0] sm:$0xff]
  %v2523 = vld [vmem:[%s2495 + $0xd8] sm:$0xff]
  %v2524 = vld [vmem:[%s2495 + $0xe0] sm:$0xff]
  %v2525 = vld [vmem:[%s2495 + $0xe8] sm:$0xff]
  %v2526 = vld [vmem:[%s2495 + $0xf0] sm:$0xff]
  %v2527 = vld [vmem:[%s2495 + $0xf8] sm:$0xff]
  %v2529 = vunpack.c.l.b16 %v2494
  %v2530 = vunpack.c.h.b16 %v2494
  %v2531 = vpack.c.b16 %v2529, %v2529
  %v2532 = vpack.c.b16 %v2530, %v2530
  %v2567 = vunpack.c.l.b16 %v2496
  %v2568 = vunpack.c.h.b16 %v2496
  %v2569 = vunpack.c.l.b16 %v2497
  %v2570 = vunpack.c.h.b16 %v2497
  %v2571 = vunpack.c.l.b16 %v2498
  %v2572 = vunpack.c.h.b16 %v2498
  %v2573 = vunpack.c.l.b16 %v2499
  %v2574 = vunpack.c.h.b16 %v2499
  %v2575 = vunpack.c.l.b16 %v2500
  %v2576 = vunpack.c.h.b16 %v2500
  %v2577 = vunpack.c.l.b16 %v2501
  %v2578 = vunpack.c.h.b16 %v2501
  %v2579 = vunpack.c.l.b16 %v2502
  %v2580 = vunpack.c.h.b16 %v2502
  %v2581 = vunpack.c.l.b16 %v2503
  %v2582 = vunpack.c.h.b16 %v2503
  %v2583 = vunpack.c.l.b16 %v2504
  %v2584 = vunpack.c.h.b16 %v2504
  %v2585 = vunpack.c.l.b16 %v2505
  %v2586 = vunpack.c.h.b16 %v2505
  %v2587 = vunpack.c.l.b16 %v2506
  %v2588 = vunpack.c.h.b16 %v2506
  %v2589 = vunpack.c.l.b16 %v2507
  %v2590 = vunpack.c.h.b16 %v2507
  %v2591 = vunpack.c.l.b16 %v2508
  %v2592 = vunpack.c.h.b16 %v2508
  %v2593 = vunpack.c.l.b16 %v2509
  %v2594 = vunpack.c.h.b16 %v2509
  %v2595 = vunpack.c.l.b16 %v2510
  %v2596 = vunpack.c.h.b16 %v2510
  %v2597 = vunpack.c.l.b16 %v2511
  %v2598 = vunpack.c.h.b16 %v2511
  %v2599 = vunpack.c.l.b16 %v2512
  %v2600 = vunpack.c.h.b16 %v2512
  %v2601 = vunpack.c.l.b16 %v2513
  %v2602 = vunpack.c.h.b16 %v2513
  %v2603 = vunpack.c.l.b16 %v2514
  %v2604 = vunpack.c.h.b16 %v2514
  %v2605 = vunpack.c.l.b16 %v2515
  %v2606 = vunpack.c.h.b16 %v2515
  %v2607 = vunpack.c.l.b16 %v2516
  %v2608 = vunpack.c.h.b16 %v2516
  %v2609 = vunpack.c.l.b16 %v2517
  %v2610 = vunpack.c.h.b16 %v2517
  %v2611 = vunpack.c.l.b16 %v2518
  %v2612 = vunpack.c.h.b16 %v2518
  %v2613 = vunpack.c.l.b16 %v2519
  %v2614 = vunpack.c.h.b16 %v2519
  %v2615 = vunpack.c.l.b16 %v2520
  %v2616 = vunpack.c.h.b16 %v2520
  %v2617 = vunpack.c.l.b16 %v2521
  %v2618 = vunpack.c.h.b16 %v2521
  %v2619 = vunpack.c.l.b16 %v2522
  %v2620 = vunpack.c.h.b16 %v2522
  %v2621 = vunpack.c.l.b16 %v2523
  %v2622 = vunpack.c.h.b16 %v2523
  %v2623 = vunpack.c.l.b16 %v2524
  %v2624 = vunpack.c.h.b16 %v2524
  %v2625 = vunpack.c.l.b16 %v2525
  %v2626 = vunpack.c.h.b16 %v2525
  %v2627 = vunpack.c.l.b16 %v2526
  %v2628 = vunpack.c.h.b16 %v2526
  %v2629 = vunpack.c.l.b16 %v2527
  %v2630 = vunpack.c.h.b16 %v2527
  %v2631 = vpack.c.b16 %v2569, %v2567
  %v2632 = vpack.c.b16 %v2570, %v2568
  %v2633 = vpack.c.b16 %v2573, %v2571
  %v2634 = vpack.c.b16 %v2574, %v2572
  %v2635 = vpack.c.b16 %v2577, %v2575
  %v2636 = vpack.c.b16 %v2578, %v2576
  %v2637 = vpack.c.b16 %v2581, %v2579
  %v2638 = vpack.c.b16 %v2582, %v2580
  %v2639 = vpack.c.b16 %v2585, %v2583
  %v2640 = vpack.c.b16 %v2586, %v2584
  %v2641 = vpack.c.b16 %v2589, %v2587
  %v2642 = vpack.c.b16 %v2590, %v2588
  %v2643 = vpack.c.b16 %v2593, %v2591
  %v2644 = vpack.c.b16 %v2594, %v2592
  %v2645 = vpack.c.b16 %v2597, %v2595
  %v2646 = vpack.c.b16 %v2598, %v2596
  %v2647 = vpack.c.b16 %v2601, %v2599
  %v2648 = vpack.c.b16 %v2602, %v2600
  %v2649 = vpack.c.b16 %v2605, %v2603
  %v2650 = vpack.c.b16 %v2606, %v2604
  %v2651 = vpack.c.b16 %v2609, %v2607
  %v2652 = vpack.c.b16 %v2610, %v2608
  %v2653 = vpack.c.b16 %v2613, %v2611
  %v2654 = vpack.c.b16 %v2614, %v2612
  %v2655 = vpack.c.b16 %v2617, %v2615
  %v2656 = vpack.c.b16 %v2618, %v2616
  %v2657 = vpack.c.b16 %v2621, %v2619
  %v2658 = vpack.c.b16 %v2622, %v2620
  %v2659 = vpack.c.b16 %v2625, %v2623
  %v2660 = vpack.c.b16 %v2626, %v2624
  %v2661 = vpack.c.b16 %v2629, %v2627
  %v2662 = vpack.c.b16 %v2630, %v2628
  %2695 = vmatprep.subr.bf16.mxu0 %v2632
  %2696 = vmatpush1.bf16.msra.mxu0 %v2631
  %2697 = vmatprep.subr.bf16.mxu0 %v2634
  %2698 = vmatpush1.bf16.msra.mxu0 %v2633
  %2699 = vmatprep.subr.bf16.mxu0 %v2636
  %2700 = vmatpush1.bf16.msra.mxu0 %v2635
  %2701 = vmatprep.subr.bf16.mxu0 %v2638
  %2702 = vmatpush1.bf16.msra.mxu0 %v2637
  %2703 = vmatprep.subr.bf16.mxu0 %v2640
  %2704 = vmatpush1.bf16.msra.mxu0 %v2639
  %2705 = vmatprep.subr.bf16.mxu0 %v2642
  %2706 = vmatpush1.bf16.msra.mxu0 %v2641
  %2707 = vmatprep.subr.bf16.mxu0 %v2644
  %2708 = vmatpush1.bf16.msra.mxu0 %v2643
  %2709 = vmatprep.subr.bf16.mxu0 %v2646
  %2710 = vmatpush1.bf16.msra.mxu0 %v2645
  %2711 = vmatprep.subr.bf16.mxu0 %v2648
  %2712 = vmatpush1.bf16.msra.mxu0 %v2647
  %2713 = vmatprep.subr.bf16.mxu0 %v2650
  %2714 = vmatpush1.bf16.msra.mxu0 %v2649
  %2715 = vmatprep.subr.bf16.mxu0 %v2652
  %2716 = vmatpush1.bf16.msra.mxu0 %v2651
  %2717 = vmatprep.subr.bf16.mxu0 %v2654
  %2718 = vmatpush1.bf16.msra.mxu0 %v2653
  %2719 = vmatprep.subr.bf16.mxu0 %v2656
  %2720 = vmatpush1.bf16.msra.mxu0 %v2655
  %2721 = vmatprep.subr.bf16.mxu0 %v2658
  %2722 = vmatpush1.bf16.msra.mxu0 %v2657
  %2723 = vmatprep.subr.bf16.mxu0 %v2660
  %2724 = vmatpush1.bf16.msra.mxu0 %v2659
  %2725 = vmatprep.subr.bf16.mxu0 %v2662
  %2726 = vmatpush1.bf16.msra.mxu0 %v2661
  %2727 = vmatprep.mubr.bf16.mxu0 %v2532
  %2728 = vmatmul.mubr.bf16.gmra.mrb[0].mxu0 %v2531
  %v2729 = vpop.f32.mrb[0].mxu0
  %v2730 = vadd.f32 0.0, %v2729
  %v2731 = vpop.f32.mrb[0].mxu0
  %v2732 = vadd.f32 0.0, %v2731
  %v2733 = vpop.f32.mrb[0].mxu0
  %v2734 = vpop.f32.mrb[0].mxu0
  %2735 = vdwg.mxu0
  %v2736 = vadd.f32 %v2492, %v2730
  %v2737 = vadd.f32 %v2493, %v2732
  %v2738 = vld [vmem:[#allocation2 + $0x40] sm:$0xff]
  %s2739 = scalar_lea.vmem %s4, 2048
  %v2740 = vld [vmem:[%s2739] sm:$0xff]
  %v2741 = vld [vmem:[%s2739 + $0x8] sm:$0xff]
  %v2742 = vld [vmem:[%s2739 + $0x10] sm:$0xff]
  %v2743 = vld [vmem:[%s2739 + $0x18] sm:$0xff]
  %v2744 = vld [vmem:[%s2739 + $0x20] sm:$0xff]
  %v2745 = vld [vmem:[%s2739 + $0x28] sm:$0xff]
  %v2746 = vld [vmem:[%s2739 + $0x30] sm:$0xff]
  %v2747 = vld [vmem:[%s2739 + $0x38] sm:$0xff]
  %v2748 = vld [vmem:[%s2739 + $0x40] sm:$0xff]
  %v2749 = vld [vmem:[%s2739 + $0x48] sm:$0xff]
  %v2750 = vld [vmem:[%s2739 + $0x50] sm:$0xff]
  %v2751 = vld [vmem:[%s2739 + $0x58] sm:$0xff]
  %v2752 = vld [vmem:[%s2739 + $0x60] sm:$0xff]
  %v2753 = vld [vmem:[%s2739 + $0x68] sm:$0xff]
  %v2754 = vld [vmem:[%s2739 + $0x70] sm:$0xff]
  %v2755 = vld [vmem:[%s2739 + $0x78] sm:$0xff]
  %v2756 = vld [vmem:[%s2739 + $0x80] sm:$0xff]
  %v2757 = vld [vmem:[%s2739 + $0x88] sm:$0xff]
  %v2758 = vld [vmem:[%s2739 + $0x90] sm:$0xff]
  %v2759 = vld [vmem:[%s2739 + $0x98] sm:$0xff]
  %v2760 = vld [vmem:[%s2739 + $0xa0] sm:$0xff]
  %v2761 = vld [vmem:[%s2739 + $0xa8] sm:$0xff]
  %v2762 = vld [vmem:[%s2739 + $0xb0] sm:$0xff]
  %v2763 = vld [vmem:[%s2739 + $0xb8] sm:$0xff]
  %v2764 = vld [vmem:[%s2739 + $0xc0] sm:$0xff]
  %v2765 = vld [vmem:[%s2739 + $0xc8] sm:$0xff]
  %v2766 = vld [vmem:[%s2739 + $0xd0] sm:$0xff]
  %v2767 = vld [vmem:[%s2739 + $0xd8] sm:$0xff]
  %v2768 = vld [vmem:[%s2739 + $0xe0] sm:$0xff]
  %v2769 = vld [vmem:[%s2739 + $0xe8] sm:$0xff]
  %v2770 = vld [vmem:[%s2739 + $0xf0] sm:$0xff]
  %v2771 = vld [vmem:[%s2739 + $0xf8] sm:$0xff]
  %v2773 = vunpack.c.l.b16 %v2738
  %v2774 = vunpack.c.h.b16 %v2738
  %v2775 = vpack.c.b16 %v2773, %v2773
  %v2776 = vpack.c.b16 %v2774, %v2774
  %v2811 = vunpack.c.l.b16 %v2740
  %v2812 = vunpack.c.h.b16 %v2740
  %v2813 = vunpack.c.l.b16 %v2741
  %v2814 = vunpack.c.h.b16 %v2741
  %v2815 = vunpack.c.l.b16 %v2742
  %v2816 = vunpack.c.h.b16 %v2742
  %v2817 = vunpack.c.l.b16 %v2743
  %v2818 = vunpack.c.h.b16 %v2743
  %v2819 = vunpack.c.l.b16 %v2744
  %v2820 = vunpack.c.h.b16 %v2744
  %v2821 = vunpack.c.l.b16 %v2745
  %v2822 = vunpack.c.h.b16 %v2745
  %v2823 = vunpack.c.l.b16 %v2746
  %v2824 = vunpack.c.h.b16 %v2746
  %v2825 = vunpack.c.l.b16 %v2747
  %v2826 = vunpack.c.h.b16 %v2747
  %v2827 = vunpack.c.l.b16 %v2748
  %v2828 = vunpack.c.h.b16 %v2748
  %v2829 = vunpack.c.l.b16 %v2749
  %v2830 = vunpack.c.h.b16 %v2749
  %v2831 = vunpack.c.l.b16 %v2750
  %v2832 = vunpack.c.h.b16 %v2750
  %v2833 = vunpack.c.l.b16 %v2751
  %v2834 = vunpack.c.h.b16 %v2751
  %v2835 = vunpack.c.l.b16 %v2752
  %v2836 = vunpack.c.h.b16 %v2752
  %v2837 = vunpack.c.l.b16 %v2753
  %v2838 = vunpack.c.h.b16 %v2753
  %v2839 = vunpack.c.l.b16 %v2754
  %v2840 = vunpack.c.h.b16 %v2754
  %v2841 = vunpack.c.l.b16 %v2755
  %v2842 = vunpack.c.h.b16 %v2755
  %v2843 = vunpack.c.l.b16 %v2756
  %v2844 = vunpack.c.h.b16 %v2756
  %v2845 = vunpack.c.l.b16 %v2757
  %v2846 = vunpack.c.h.b16 %v2757
  %v2847 = vunpack.c.l.b16 %v2758
  %v2848 = vunpack.c.h.b16 %v2758
  %v2849 = vunpack.c.l.b16 %v2759
  %v2850 = vunpack.c.h.b16 %v2759
  %v2851 = vunpack.c.l.b16 %v2760
  %v2852 = vunpack.c.h.b16 %v2760
  %v2853 = vunpack.c.l.b16 %v2761
  %v2854 = vunpack.c.h.b16 %v2761
  %v2855 = vunpack.c.l.b16 %v2762
  %v2856 = vunpack.c.h.b16 %v2762
  %v2857 = vunpack.c.l.b16 %v2763
  %v2858 = vunpack.c.h.b16 %v2763
  %v2859 = vunpack.c.l.b16 %v2764
  %v2860 = vunpack.c.h.b16 %v2764
  %v2861 = vunpack.c.l.b16 %v2765
  %v2862 = vunpack.c.h.b16 %v2765
  %v2863 = vunpack.c.l.b16 %v2766
  %v2864 = vunpack.c.h.b16 %v2766
  %v2865 = vunpack.c.l.b16 %v2767
  %v2866 = vunpack.c.h.b16 %v2767
  %v2867 = vunpack.c.l.b16 %v2768
  %v2868 = vunpack.c.h.b16 %v2768
  %v2869 = vunpack.c.l.b16 %v2769
  %v2870 = vunpack.c.h.b16 %v2769
  %v2871 = vunpack.c.l.b16 %v2770
  %v2872 = vunpack.c.h.b16 %v2770
  %v2873 = vunpack.c.l.b16 %v2771
  %v2874 = vunpack.c.h.b16 %v2771
  %v2875 = vpack.c.b16 %v2813, %v2811
  %v2876 = vpack.c.b16 %v2814, %v2812
  %v2877 = vpack.c.b16 %v2817, %v2815
  %v2878 = vpack.c.b16 %v2818, %v2816
  %v2879 = vpack.c.b16 %v2821, %v2819
  %v2880 = vpack.c.b16 %v2822, %v2820
  %v2881 = vpack.c.b16 %v2825, %v2823
  %v2882 = vpack.c.b16 %v2826, %v2824
  %v2883 = vpack.c.b16 %v2829, %v2827
  %v2884 = vpack.c.b16 %v2830, %v2828
  %v2885 = vpack.c.b16 %v2833, %v2831
  %v2886 = vpack.c.b16 %v2834, %v2832
  %v2887 = vpack.c.b16 %v2837, %v2835
  %v2888 = vpack.c.b16 %v2838, %v2836
  %v2889 = vpack.c.b16 %v2841, %v2839
  %v2890 = vpack.c.b16 %v2842, %v2840
  %v2891 = vpack.c.b16 %v2845, %v2843
  %v2892 = vpack.c.b16 %v2846, %v2844
  %v2893 = vpack.c.b16 %v2849, %v2847
  %v2894 = vpack.c.b16 %v2850, %v2848
  %v2895 = vpack.c.b16 %v2853, %v2851
  %v2896 = vpack.c.b16 %v2854, %v2852
  %v2897 = vpack.c.b16 %v2857, %v2855
  %v2898 = vpack.c.b16 %v2858, %v2856
  %v2899 = vpack.c.b16 %v2861, %v2859
  %v2900 = vpack.c.b16 %v2862, %v2860
  %v2901 = vpack.c.b16 %v2865, %v2863
  %v2902 = vpack.c.b16 %v2866, %v2864
  %v2903 = vpack.c.b16 %v2869, %v2867
  %v2904 = vpack.c.b16 %v2870, %v2868
  %v2905 = vpack.c.b16 %v2873, %v2871
  %v2906 = vpack.c.b16 %v2874, %v2872
  %2939 = vmatprep.subr.bf16.mxu0 %v2876
  %2940 = vmatpush1.bf16.msra.mxu0 %v2875
  %2941 = vmatprep.subr.bf16.mxu0 %v2878
  %2942 = vmatpush1.bf16.msra.mxu0 %v2877
  %2943 = vmatprep.subr.bf16.mxu0 %v2880
  %2944 = vmatpush1.bf16.msra.mxu0 %v2879
  %2945 = vmatprep.subr.bf16.mxu0 %v2882
  %2946 = vmatpush1.bf16.msra.mxu0 %v2881
  %2947 = vmatprep.subr.bf16.mxu0 %v2884
  %2948 = vmatpush1.bf16.msra.mxu0 %v2883
  %2949 = vmatprep.subr.bf16.mxu0 %v2886
  %2950 = vmatpush1.bf16.msra.mxu0 %v2885
  %2951 = vmatprep.subr.bf16.mxu0 %v2888
  %2952 = vmatpush1.bf16.msra.mxu0 %v2887
  %2953 = vmatprep.subr.bf16.mxu0 %v2890
  %2954 = vmatpush1.bf16.msra.mxu0 %v2889
  %2955 = vmatprep.subr.bf16.mxu0 %v2892
  %2956 = vmatpush1.bf16.msra.mxu0 %v2891
  %2957 = vmatprep.subr.bf16.mxu0 %v2894
  %2958 = vmatpush1.bf16.msra.mxu0 %v2893
  %2959 = vmatprep.subr.bf16.mxu0 %v2896
  %2960 = vmatpush1.bf16.msra.mxu0 %v2895
  %2961 = vmatprep.subr.bf16.mxu0 %v2898
  %2962 = vmatpush1.bf16.msra.mxu0 %v2897
  %2963 = vmatprep.subr.bf16.mxu0 %v2900
  %2964 = vmatpush1.bf16.msra.mxu0 %v2899
  %2965 = vmatprep.subr.bf16.mxu0 %v2902
  %2966 = vmatpush1.bf16.msra.mxu0 %v2901
  %2967 = vmatprep.subr.bf16.mxu0 %v2904
  %2968 = vmatpush1.bf16.msra.mxu0 %v2903
  %2969 = vmatprep.subr.bf16.mxu0 %v2906
  %2970 = vmatpush1.bf16.msra.mxu0 %v2905
  %2971 = vmatprep.mubr.bf16.mxu0 %v2776
  %2972 = vmatmul.mubr.bf16.gmra.mrb[0].mxu0 %v2775
  %v2973 = vpop.f32.mrb[0].mxu0
  %v2974 = vadd.f32 0.0, %v2973
  %v2975 = vpop.f32.mrb[0].mxu0
  %v2976 = vadd.f32 0.0, %v2975
  %v2977 = vpop.f32.mrb[0].mxu0
  %v2978 = vpop.f32.mrb[0].mxu0
  %2979 = vdwg.mxu0
  %v2980 = vadd.f32 %v2736, %v2974
  %v2981 = vadd.f32 %v2737, %v2976
  %v2982 = vld [vmem:[#allocation2 + $0x48] sm:$0xff]
  %s2983 = scalar_lea.vmem %s4, 2304
  %v2984 = vld [vmem:[%s2983] sm:$0xff]
  %v2985 = vld [vmem:[%s2983 + $0x8] sm:$0xff]
  %v2986 = vld [vmem:[%s2983 + $0x10] sm:$0xff]
  %v2987 = vld [vmem:[%s2983 + $0x18] sm:$0xff]
  %v2988 = vld [vmem:[%s2983 + $0x20] sm:$0xff]
  %v2989 = vld [vmem:[%s2983 + $0x28] sm:$0xff]
  %v2990 = vld [vmem:[%s2983 + $0x30] sm:$0xff]
  %v2991 = vld [vmem:[%s2983 + $0x38] sm:$0xff]
  %v2992 = vld [vmem:[%s2983 + $0x40] sm:$0xff]
  %v2993 = vld [vmem:[%s2983 + $0x48] sm:$0xff]
  %v2994 = vld [vmem:[%s2983 + $0x50] sm:$0xff]
  %v2995 = vld [vmem:[%s2983 + $0x58] sm:$0xff]
  %v2996 = vld [vmem:[%s2983 + $0x60] sm:$0xff]
  %v2997 = vld [vmem:[%s2983 + $0x68] sm:$0xff]
  %v2998 = vld [vmem:[%s2983 + $0x70] sm:$0xff]
  %v2999 = vld [vmem:[%s2983 + $0x78] sm:$0xff]
  %v3000 = vld [vmem:[%s2983 + $0x80] sm:$0xff]
  %v3001 = vld [vmem:[%s2983 + $0x88] sm:$0xff]
  %v3002 = vld [vmem:[%s2983 + $0x90] sm:$0xff]
  %v3003 = vld [vmem:[%s2983 + $0x98] sm:$0xff]
  %v3004 = vld [vmem:[%s2983 + $0xa0] sm:$0xff]
  %v3005 = vld [vmem:[%s2983 + $0xa8] sm:$0xff]
  %v3006 = vld [vmem:[%s2983 + $0xb0] sm:$0xff]
  %v3007 = vld [vmem:[%s2983 + $0xb8] sm:$0xff]
  %v3008 = vld [vmem:[%s2983 + $0xc0] sm:$0xff]
  %v3009 = vld [vmem:[%s2983 + $0xc8] sm:$0xff]
  %v3010 = vld [vmem:[%s2983 + $0xd0] sm:$0xff]
  %v3011 = vld [vmem:[%s2983 + $0xd8] sm:$0xff]
  %v3012 = vld [vmem:[%s2983 + $0xe0] sm:$0xff]
  %v3013 = vld [vmem:[%s2983 + $0xe8] sm:$0xff]
  %v3014 = vld [vmem:[%s2983 + $0xf0] sm:$0xff]
  %v3015 = vld [vmem:[%s2983 + $0xf8] sm:$0xff]
  %v3017 = vunpack.c.l.b16 %v2982
  %v3018 = vunpack.c.h.b16 %v2982
  %v3019 = vpack.c.b16 %v3017, %v3017
  %v3020 = vpack.c.b16 %v3018, %v3018
  %v3055 = vunpack.c.l.b16 %v2984
  %v3056 = vunpack.c.h.b16 %v2984
  %v3057 = vunpack.c.l.b16 %v2985
  %v3058 = vunpack.c.h.b16 %v2985
  %v3059 = vunpack.c.l.b16 %v2986
  %v3060 = vunpack.c.h.b16 %v2986
  %v3061 = vunpack.c.l.b16 %v2987
  %v3062 = vunpack.c.h.b16 %v2987
  %v3063 = vunpack.c.l.b16 %v2988
  %v3064 = vunpack.c.h.b16 %v2988
  %v3065 = vunpack.c.l.b16 %v2989
  %v3066 = vunpack.c.h.b16 %v2989
  %v3067 = vunpack.c.l.b16 %v2990
  %v3068 = vunpack.c.h.b16 %v2990
  %v3069 = vunpack.c.l.b16 %v2991
  %v3070 = vunpack.c.h.b16 %v2991
  %v3071 = vunpack.c.l.b16 %v2992
  %v3072 = vunpack.c.h.b16 %v2992
  %v3073 = vunpack.c.l.b16 %v2993
  %v3074 = vunpack.c.h.b16 %v2993
  %v3075 = vunpack.c.l.b16 %v2994
  %v3076 = vunpack.c.h.b16 %v2994
  %v3077 = vunpack.c.l.b16 %v2995
  %v3078 = vunpack.c.h.b16 %v2995
  %v3079 = vunpack.c.l.b16 %v2996
  %v3080 = vunpack.c.h.b16 %v2996
  %v3081 = vunpack.c.l.b16 %v2997
  %v3082 = vunpack.c.h.b16 %v2997
  %v3083 = vunpack.c.l.b16 %v2998
  %v3084 = vunpack.c.h.b16 %v2998
  %v3085 = vunpack.c.l.b16 %v2999
  %v3086 = vunpack.c.h.b16 %v2999
  %v3087 = vunpack.c.l.b16 %v3000
  %v3088 = vunpack.c.h.b16 %v3000
  %v3089 = vunpack.c.l.b16 %v3001
  %v3090 = vunpack.c.h.b16 %v3001
  %v3091 = vunpack.c.l.b16 %v3002
  %v3092 = vunpack.c.h.b16 %v3002
  %v3093 = vunpack.c.l.b16 %v3003
  %v3094 = vunpack.c.h.b16 %v3003
  %v3095 = vunpack.c.l.b16 %v3004
  %v3096 = vunpack.c.h.b16 %v3004
  %v3097 = vunpack.c.l.b16 %v3005
  %v3098 = vunpack.c.h.b16 %v3005
  %v3099 = vunpack.c.l.b16 %v3006
  %v3100 = vunpack.c.h.b16 %v3006
  %v3101 = vunpack.c.l.b16 %v3007
  %v3102 = vunpack.c.h.b16 %v3007
  %v3103 = vunpack.c.l.b16 %v3008
  %v3104 = vunpack.c.h.b16 %v3008
  %v3105 = vunpack.c.l.b16 %v3009
  %v3106 = vunpack.c.h.b16 %v3009
  %v3107 = vunpack.c.l.b16 %v3010
  %v3108 = vunpack.c.h.b16 %v3010
  %v3109 = vunpack.c.l.b16 %v3011
  %v3110 = vunpack.c.h.b16 %v3011
  %v3111 = vunpack.c.l.b16 %v3012
  %v3112 = vunpack.c.h.b16 %v3012
  %v3113 = vunpack.c.l.b16 %v3013
  %v3114 = vunpack.c.h.b16 %v3013
  %v3115 = vunpack.c.l.b16 %v3014
  %v3116 = vunpack.c.h.b16 %v3014
  %v3117 = vunpack.c.l.b16 %v3015
  %v3118 = vunpack.c.h.b16 %v3015
  %v3119 = vpack.c.b16 %v3057, %v3055
  %v3120 = vpack.c.b16 %v3058, %v3056
  %v3121 = vpack.c.b16 %v3061, %v3059
  %v3122 = vpack.c.b16 %v3062, %v3060
  %v3123 = vpack.c.b16 %v3065, %v3063
  %v3124 = vpack.c.b16 %v3066, %v3064
  %v3125 = vpack.c.b16 %v3069, %v3067
  %v3126 = vpack.c.b16 %v3070, %v3068
  %v3127 = vpack.c.b16 %v3073, %v3071
  %v3128 = vpack.c.b16 %v3074, %v3072
  %v3129 = vpack.c.b16 %v3077, %v3075
  %v3130 = vpack.c.b16 %v3078, %v3076
  %v3131 = vpack.c.b16 %v3081, %v3079
  %v3132 = vpack.c.b16 %v3082, %v3080
  %v3133 = vpack.c.b16 %v3085, %v3083
  %v3134 = vpack.c.b16 %v3086, %v3084
  %v3135 = vpack.c.b16 %v3089, %v3087
  %v3136 = vpack.c.b16 %v3090, %v3088
  %v3137 = vpack.c.b16 %v3093, %v3091
  %v3138 = vpack.c.b16 %v3094, %v3092
  %v3139 = vpack.c.b16 %v3097, %v3095
  %v3140 = vpack.c.b16 %v3098, %v3096
  %v3141 = vpack.c.b16 %v3101, %v3099
  %v3142 = vpack.c.b16 %v3102, %v3100
  %v3143 = vpack.c.b16 %v3105, %v3103
  %v3144 = vpack.c.b16 %v3106, %v3104
  %v3145 = vpack.c.b16 %v3109, %v3107
  %v3146 = vpack.c.b16 %v3110, %v3108
  %v3147 = vpack.c.b16 %v3113, %v3111
  %v3148 = vpack.c.b16 %v3114, %v3112
  %v3149 = vpack.c.b16 %v3117, %v3115
  %v3150 = vpack.c.b16 %v3118, %v3116
  %3183 = vmatprep.subr.bf16.mxu0 %v3120
  %3184 = vmatpush1.bf16.msra.mxu0 %v3119
  %3185 = vmatprep.subr.bf16.mxu0 %v3122
  %3186 = vmatpush1.bf16.msra.mxu0 %v3121
  %3187 = vmatprep.subr.bf16.mxu0 %v3124
  %3188 = vmatpush1.bf16.msra.mxu0 %v3123
  %3189 = vmatprep.subr.bf16.mxu0 %v3126
  %3190 = vmatpush1.bf16.msra.mxu0 %v3125
  %3191 = vmatprep.subr.bf16.mxu0 %v3128
  %3192 = vmatpush1.bf16.msra.mxu0 %v3127
  %3193 = vmatprep.subr.bf16.mxu0 %v3130
  %3194 = vmatpush1.bf16.msra.mxu0 %v3129
  %3195 = vmatprep.subr.bf16.mxu0 %v3132
  %3196 = vmatpush1.bf16.msra.mxu0 %v3131
  %3197 = vmatprep.subr.bf16.mxu0 %v3134
  %3198 = vmatpush1.bf16.msra.mxu0 %v3133
  %3199 = vmatprep.subr.bf16.mxu0 %v3136
  %3200 = vmatpush1.bf16.msra.mxu0 %v3135
  %3201 = vmatprep.subr.bf16.mxu0 %v3138
  %3202 = vmatpush1.bf16.msra.mxu0 %v3137
  %3203 = vmatprep.subr.bf16.mxu0 %v3140
  %3204 = vmatpush1.bf16.msra.mxu0 %v3139
  %3205 = vmatprep.subr.bf16.mxu0 %v3142
  %3206 = vmatpush1.bf16.msra.mxu0 %v3141
  %3207 = vmatprep.subr.bf16.mxu0 %v3144
  %3208 = vmatpush1.bf16.msra.mxu0 %v3143
  %3209 = vmatprep.subr.bf16.mxu0 %v3146
  %3210 = vmatpush1.bf16.msra.mxu0 %v3145
  %3211 = vmatprep.subr.bf16.mxu0 %v3148
  %3212 = vmatpush1.bf16.msra.mxu0 %v3147
  %3213 = vmatprep.subr.bf16.mxu0 %v3150
  %3214 = vmatpush1.bf16.msra.mxu0 %v3149
  %3215 = vmatprep.mubr.bf16.mxu0 %v3020
  %3216 = vmatmul.mubr.bf16.gmra.mrb[0].mxu0 %v3019
  %v3217 = vpop.f32.mrb[0].mxu0
  %v3218 = vadd.f32 0.0, %v3217
  %v3219 = vpop.f32.mrb[0].mxu0
  %v3220 = vadd.f32 0.0, %v3219
  %v3221 = vpop.f32.mrb[0].mxu0
  %v3222 = vpop.f32.mrb[0].mxu0
  %3223 = vdwg.mxu0
  %v3224 = vadd.f32 %v2980, %v3218
  %v3225 = vadd.f32 %v2981, %v3220
  %v3226 = vld [vmem:[#allocation2 + $0x50] sm:$0xff]
  %s3227 = scalar_lea.vmem %s4, 2560
  %v3228 = vld [vmem:[%s3227] sm:$0xff]
  %v3229 = vld [vmem:[%s3227 + $0x8] sm:$0xff]
  %v3230 = vld [vmem:[%s3227 + $0x10] sm:$0xff]
  %v3231 = vld [vmem:[%s3227 + $0x18] sm:$0xff]
  %v3232 = vld [vmem:[%s3227 + $0x20] sm:$0xff]
  %v3233 = vld [vmem:[%s3227 + $0x28] sm:$0xff]
  %v3234 = vld [vmem:[%s3227 + $0x30] sm:$0xff]
  %v3235 = vld [vmem:[%s3227 + $0x38] sm:$0xff]
  %v3236 = vld [vmem:[%s3227 + $0x40] sm:$0xff]
  %v3237 = vld [vmem:[%s3227 + $0x48] sm:$0xff]
  %v3238 = vld [vmem:[%s3227 + $0x50] sm:$0xff]
  %v3239 = vld [vmem:[%s3227 + $0x58] sm:$0xff]
  %v3240 = vld [vmem:[%s3227 + $0x60] sm:$0xff]
  %v3241 = vld [vmem:[%s3227 + $0x68] sm:$0xff]
  %v3242 = vld [vmem:[%s3227 + $0x70] sm:$0xff]
  %v3243 = vld [vmem:[%s3227 + $0x78] sm:$0xff]
  %v3244 = vld [vmem:[%s3227 + $0x80] sm:$0xff]
  %v3245 = vld [vmem:[%s3227 + $0x88] sm:$0xff]
  %v3246 = vld [vmem:[%s3227 + $0x90] sm:$0xff]
  %v3247 = vld [vmem:[%s3227 + $0x98] sm:$0xff]
  %v3248 = vld [vmem:[%s3227 + $0xa0] sm:$0xff]
  %v3249 = vld [vmem:[%s3227 + $0xa8] sm:$0xff]
  %v3250 = vld [vmem:[%s3227 + $0xb0] sm:$0xff]
  %v3251 = vld [vmem:[%s3227 + $0xb8] sm:$0xff]
  %v3252 = vld [vmem:[%s3227 + $0xc0] sm:$0xff]
  %v3253 = vld [vmem:[%s3227 + $0xc8] sm:$0xff]
  %v3254 = vld [vmem:[%s3227 + $0xd0] sm:$0xff]
  %v3255 = vld [vmem:[%s3227 + $0xd8] sm:$0xff]
  %v3256 = vld [vmem:[%s3227 + $0xe0] sm:$0xff]
  %v3257 = vld [vmem:[%s3227 + $0xe8] sm:$0xff]
  %v3258 = vld [vmem:[%s3227 + $0xf0] sm:$0xff]
  %v3259 = vld [vmem:[%s3227 + $0xf8] sm:$0xff]
  %v3261 = vunpack.c.l.b16 %v3226
  %v3262 = vunpack.c.h.b16 %v3226
  %v3263 = vpack.c.b16 %v3261, %v3261
  %v3264 = vpack.c.b16 %v3262, %v3262
  %v3299 = vunpack.c.l.b16 %v3228
  %v3300 = vunpack.c.h.b16 %v3228
  %v3301 = vunpack.c.l.b16 %v3229
  %v3302 = vunpack.c.h.b16 %v3229
  %v3303 = vunpack.c.l.b16 %v3230
  %v3304 = vunpack.c.h.b16 %v3230
  %v3305 = vunpack.c.l.b16 %v3231
  %v3306 = vunpack.c.h.b16 %v3231
  %v3307 = vunpack.c.l.b16 %v3232
  %v3308 = vunpack.c.h.b16 %v3232
  %v3309 = vunpack.c.l.b16 %v3233
  %v3310 = vunpack.c.h.b16 %v3233
  %v3311 = vunpack.c.l.b16 %v3234
  %v3312 = vunpack.c.h.b16 %v3234
  %v3313 = vunpack.c.l.b16 %v3235
  %v3314 = vunpack.c.h.b16 %v3235
  %v3315 = vunpack.c.l.b16 %v3236
  %v3316 = vunpack.c.h.b16 %v3236
  %v3317 = vunpack.c.l.b16 %v3237
  %v3318 = vunpack.c.h.b16 %v3237
  %v3319 = vunpack.c.l.b16 %v3238
  %v3320 = vunpack.c.h.b16 %v3238
  %v3321 = vunpack.c.l.b16 %v3239
  %v3322 = vunpack.c.h.b16 %v3239
  %v3323 = vunpack.c.l.b16 %v3240
  %v3324 = vunpack.c.h.b16 %v3240
  %v3325 = vunpack.c.l.b16 %v3241
  %v3326 = vunpack.c.h.b16 %v3241
  %v3327 = vunpack.c.l.b16 %v3242
  %v3328 = vunpack.c.h.b16 %v3242
  %v3329 = vunpack.c.l.b16 %v3243
  %v3330 = vunpack.c.h.b16 %v3243
  %v3331 = vunpack.c.l.b16 %v3244
  %v3332 = vunpack.c.h.b16 %v3244
  %v3333 = vunpack.c.l.b16 %v3245
  %v3334 = vunpack.c.h.b16 %v3245
  %v3335 = vunpack.c.l.b16 %v3246
  %v3336 = vunpack.c.h.b16 %v3246
  %v3337 = vunpack.c.l.b16 %v3247
  %v3338 = vunpack.c.h.b16 %v3247
  %v3339 = vunpack.c.l.b16 %v3248
  %v3340 = vunpack.c.h.b16 %v3248
  %v3341 = vunpack.c.l.b16 %v3249
  %v3342 = vunpack.c.h.b16 %v3249
  %v3343 = vunpack.c.l.b16 %v3250
  %v3344 = vunpack.c.h.b16 %v3250
  %v3345 = vunpack.c.l.b16 %v3251
  %v3346 = vunpack.c.h.b16 %v3251
  %v3347 = vunpack.c.l.b16 %v3252
  %v3348 = vunpack.c.h.b16 %v3252
  %v3349 = vunpack.c.l.b16 %v3253
  %v3350 = vunpack.c.h.b16 %v3253
  %v3351 = vunpack.c.l.b16 %v3254
  %v3352 = vunpack.c.h.b16 %v3254
  %v3353 = vunpack.c.l.b16 %v3255
  %v3354 = vunpack.c.h.b16 %v3255
  %v3355 = vunpack.c.l.b16 %v3256
  %v3356 = vunpack.c.h.b16 %v3256
  %v3357 = vunpack.c.l.b16 %v3257
  %v3358 = vunpack.c.h.b16 %v3257
  %v3359 = vunpack.c.l.b16 %v3258
  %v3360 = vunpack.c.h.b16 %v3258
  %v3361 = vunpack.c.l.b16 %v3259
  %v3362 = vunpack.c.h.b16 %v3259
  %v3363 = vpack.c.b16 %v3301, %v3299
  %v3364 = vpack.c.b16 %v3302, %v3300
  %v3365 = vpack.c.b16 %v3305, %v3303
  %v3366 = vpack.c.b16 %v3306, %v3304
  %v3367 = vpack.c.b16 %v3309, %v3307
  %v3368 = vpack.c.b16 %v3310, %v3308
  %v3369 = vpack.c.b16 %v3313, %v3311
  %v3370 = vpack.c.b16 %v3314, %v3312
  %v3371 = vpack.c.b16 %v3317, %v3315
  %v3372 = vpack.c.b16 %v3318, %v3316
  %v3373 = vpack.c.b16 %v3321, %v3319
  %v3374 = vpack.c.b16 %v3322, %v3320
  %v3375 = vpack.c.b16 %v3325, %v3323
  %v3376 = vpack.c.b16 %v3326, %v3324
  %v3377 = vpack.c.b16 %v3329, %v3327
  %v3378 = vpack.c.b16 %v3330, %v3328
  %v3379 = vpack.c.b16 %v3333, %v3331
  %v3380 = vpack.c.b16 %v3334, %v3332
  %v3381 = vpack.c.b16 %v3337, %v3335
  %v3382 = vpack.c.b16 %v3338, %v3336
  %v3383 = vpack.c.b16 %v3341, %v3339
  %v3384 = vpack.c.b16 %v3342, %v3340
  %v3385 = vpack.c.b16 %v3345, %v3343
  %v3386 = vpack.c.b16 %v3346, %v3344
  %v3387 = vpack.c.b16 %v3349, %v3347
  %v3388 = vpack.c.b16 %v3350, %v3348
  %v3389 = vpack.c.b16 %v3353, %v3351
  %v3390 = vpack.c.b16 %v3354, %v3352
  %v3391 = vpack.c.b16 %v3357, %v3355
  %v3392 = vpack.c.b16 %v3358, %v3356
  %v3393 = vpack.c.b16 %v3361, %v3359
  %v3394 = vpack.c.b16 %v3362, %v3360
  %3427 = vmatprep.subr.bf16.mxu0 %v3364
  %3428 = vmatpush1.bf16.msra.mxu0 %v3363
  %3429 = vmatprep.subr.bf16.mxu0 %v3366
  %3430 = vmatpush1.bf16.msra.mxu0 %v3365
  %3431 = vmatprep.subr.bf16.mxu0 %v3368
  %3432 = vmatpush1.bf16.msra.mxu0 %v3367
  %3433 = vmatprep.subr.bf16.mxu0 %v3370
  %3434 = vmatpush1.bf16.msra.mxu0 %v3369
  %3435 = vmatprep.subr.bf16.mxu0 %v3372
  %3436 = vmatpush1.bf16.msra.mxu0 %v3371
  %3437 = vmatprep.subr.bf16.mxu0 %v3374
  %3438 = vmatpush1.bf16.msra.mxu0 %v3373
  %3439 = vmatprep.subr.bf16.mxu0 %v3376
  %3440 = vmatpush1.bf16.msra.mxu0 %v3375
  %3441 = vmatprep.subr.bf16.mxu0 %v3378
  %3442 = vmatpush1.bf16.msra.mxu0 %v3377
  %3443 = vmatprep.subr.bf16.mxu0 %v3380
  %3444 = vmatpush1.bf16.msra.mxu0 %v3379
  %3445 = vmatprep.subr.bf16.mxu0 %v3382
  %3446 = vmatpush1.bf16.msra.mxu0 %v3381
  %3447 = vmatprep.subr.bf16.mxu0 %v3384
  %3448 = vmatpush1.bf16.msra.mxu0 %v3383
  %3449 = vmatprep.subr.bf16.mxu0 %v3386
  %3450 = vmatpush1.bf16.msra.mxu0 %v3385
  %3451 = vmatprep.subr.bf16.mxu0 %v3388
  %3452 = vmatpush1.bf16.msra.mxu0 %v3387
  %3453 = vmatprep.subr.bf16.mxu0 %v3390
  %3454 = vmatpush1.bf16.msra.mxu0 %v3389
  %3455 = vmatprep.subr.bf16.mxu0 %v3392
  %3456 = vmatpush1.bf16.msra.mxu0 %v3391
  %3457 = vmatprep.subr.bf16.mxu0 %v3394
  %3458 = vmatpush1.bf16.msra.mxu0 %v3393
  %3459 = vmatprep.mubr.bf16.mxu0 %v3264
  %3460 = vmatmul.mubr.bf16.gmra.mrb[0].mxu0 %v3263
  %v3461 = vpop.f32.mrb[0].mxu0
  %v3462 = vadd.f32 0.0, %v3461
  %v3463 = vpop.f32.mrb[0].mxu0
  %v3464 = vadd.f32 0.0, %v3463
  %v3465 = vpop.f32.mrb[0].mxu0
  %v3466 = vpop.f32.mrb[0].mxu0
  %3467 = vdwg.mxu0
  %v3468 = vadd.f32 %v3224, %v3462
  %v3469 = vadd.f32 %v3225, %v3464
  %v3470 = vld [vmem:[%s6] sm:$0x3]
  %v3472 = vlaneseq
  %v3473 = vshrl.u32 %v3472, 7
  %v3474 = vsub.s32 0, %v3473
  %v3475 = vrot.slane %v3470, %v3474
  %v3476 = vlaneseq
  %v3477 = vshrl.u32 %v3476, 7
  %v3478 = vsub.s32 1, %v3477
  %v3479 = vrot.slane %v3470, %v3478
  %v3482 = vadd.f32 %v3468, %v3475
  %v3483 = vadd.f32 %v3469, %v3479
  %v3484 = vmax.f32 %v3482, 0.0
  %v3485 = vmax.f32 %v3483, 0.0
  %v3486 = vpack.c.bf16 %v3484, %v3484
  %v3487 = vpack.c.bf16 %v3485, %v3485
  %v3488 = vld [vmem:[%s9] sm:$0xf]
  %v3489 = vld [vmem:[%s9 + $0x4] sm:$0xf]
  %v3490 = vld [vmem:[%s9 + $0x8] sm:$0xf]
  %v3491 = vld [vmem:[%s9 + $0xc] sm:$0xf]
  %v3492 = vld [vmem:[%s9 + $0x10] sm:$0xf]
  %v3493 = vld [vmem:[%s9 + $0x14] sm:$0xf]
  %v3494 = vld [vmem:[%s9 + $0x18] sm:$0xf]
  %v3495 = vld [vmem:[%s9 + $0x1c] sm:$0xf]
  %v3496 = vld [vmem:[%s9 + $0x20] sm:$0xf]
  %v3497 = vld [vmem:[%s9 + $0x24] sm:$0xf]
  %v3498 = vld [vmem:[%s9 + $0x28] sm:$0xf]
  %v3499 = vld [vmem:[%s9 + $0x2c] sm:$0xf]
  %v3500 = vld [vmem:[%s9 + $0x30] sm:$0xf]
  %v3501 = vld [vmem:[%s9 + $0x34] sm:$0xf]
  %v3502 = vld [vmem:[%s9 + $0x38] sm:$0xf]
  %v3503 = vld [vmem:[%s9 + $0x3c] sm:$0xf]
  %v3504 = vld [vmem:[%s9 + $0x40] sm:$0xf]
  %v3505 = vld [vmem:[%s9 + $0x44] sm:$0xf]
  %v3506 = vld [vmem:[%s9 + $0x48] sm:$0xf]
  %v3507 = vld [vmem:[%s9 + $0x4c] sm:$0xf]
  %v3508 = vld [vmem:[%s9 + $0x50] sm:$0xf]
  %v3509 = vld [vmem:[%s9 + $0x54] sm:$0xf]
  %v3510 = vld [vmem:[%s9 + $0x58] sm:$0xf]
  %v3511 = vld [vmem:[%s9 + $0x5c] sm:$0xf]
  %v3512 = vld [vmem:[%s9 + $0x60] sm:$0xf]
  %v3513 = vld [vmem:[%s9 + $0x64] sm:$0xf]
  %v3514 = vld [vmem:[%s9 + $0x68] sm:$0xf]
  %v3515 = vld [vmem:[%s9 + $0x6c] sm:$0xf]
  %v3516 = vld [vmem:[%s9 + $0x70] sm:$0xf]
  %v3517 = vld [vmem:[%s9 + $0x74] sm:$0xf]
  %v3518 = vld [vmem:[%s9 + $0x78] sm:$0xf]
  %v3519 = vld [vmem:[%s9 + $0x7c] sm:$0xf]
  %v3520 = vld [vmem:[%s10] sm:$0x1]
  %v3522 = vlaneseq
  %v3523 = vshrl.u32 %v3522, 7
  %v3524 = vsub.s32 0, %v3523
  %v3525 = vrot.slane %v3520, %v3524
  %v3559 = vunpack.c.l.b16 %v3488
  %v3560 = vunpack.c.l.b16 %v3489
  %v3561 = vunpack.c.l.b16 %v3490
  %v3562 = vunpack.c.l.b16 %v3491
  %v3563 = vunpack.c.l.b16 %v3492
  %v3564 = vunpack.c.l.b16 %v3493
  %v3565 = vunpack.c.l.b16 %v3494
  %v3566 = vunpack.c.l.b16 %v3495
  %v3567 = vunpack.c.l.b16 %v3496
  %v3568 = vunpack.c.l.b16 %v3497
  %v3569 = vunpack.c.l.b16 %v3498
  %v3570 = vunpack.c.l.b16 %v3499
  %v3571 = vunpack.c.l.b16 %v3500
  %v3572 = vunpack.c.l.b16 %v3501
  %v3573 = vunpack.c.l.b16 %v3502
  %v3574 = vunpack.c.l.b16 %v3503
  %v3575 = vunpack.c.l.b16 %v3504
  %v3576 = vunpack.c.l.b16 %v3505
  %v3577 = vunpack.c.l.b16 %v3506
  %v3578 = vunpack.c.l.b16 %v3507
  %v3579 = vunpack.c.l.b16 %v3508
  %v3580 = vunpack.c.l.b16 %v3509
  %v3581 = vunpack.c.l.b16 %v3510
  %v3582 = vunpack.c.l.b16 %v3511
  %v3583 = vunpack.c.l.b16 %v3512
  %v3584 = vunpack.c.l.b16 %v3513
  %v3585 = vunpack.c.l.b16 %v3514
  %v3586 = vunpack.c.l.b16 %v3515
  %v3587 = vunpack.c.l.b16 %v3516
  %v3588 = vunpack.c.l.b16 %v3517
  %v3589 = vunpack.c.l.b16 %v3518
  %v3590 = vunpack.c.l.b16 %v3519
  %v3591 = vpack.c.b16 %v3560, %v3559
  %v3592 = vpack.c.b16 %v3562, %v3561
  %v3593 = vpack.c.b16 %v3564, %v3563
  %v3594 = vpack.c.b16 %v3566, %v3565
  %v3595 = vpack.c.b16 %v3568, %v3567
  %v3596 = vpack.c.b16 %v3570, %v3569
  %v3597 = vpack.c.b16 %v3572, %v3571
  %v3598 = vpack.c.b16 %v3574, %v3573
  %v3599 = vpack.c.b16 %v3576, %v3575
  %v3600 = vpack.c.b16 %v3578, %v3577
  %v3601 = vpack.c.b16 %v3580, %v3579
  %v3602 = vpack.c.b16 %v3582, %v3581
  %v3603 = vpack.c.b16 %v3584, %v3583
  %v3604 = vpack.c.b16 %v3586, %v3585
  %v3605 = vpack.c.b16 %v3588, %v3587
  %v3606 = vpack.c.b16 %v3590, %v3589
  %3623 = vmatprep.subr.bf16.mxu0 0
  %3624 = vmatpush1.bf16.msra.mxu0 %v3591
  %3625 = vmatprep.subr.bf16.mxu0 0
  %3626 = vmatpush1.bf16.msra.mxu0 %v3592
  %3627 = vmatprep.subr.bf16.mxu0 0
  %3628 = vmatpush1.bf16.msra.mxu0 %v3593
  %3629 = vmatprep.subr.bf16.mxu0 0
  %3630 = vmatpush1.bf16.msra.mxu0 %v3594
  %3631 = vmatprep.subr.bf16.mxu0 0
  %3632 = vmatpush1.bf16.msra.mxu0 %v3595
  %3633 = vmatprep.subr.bf16.mxu0 0
  %3634 = vmatpush1.bf16.msra.mxu0 %v3596
  %3635 = vmatprep.subr.bf16.mxu0 0
  %3636 = vmatpush1.bf16.msra.mxu0 %v3597
  %3637 = vmatprep.subr.bf16.mxu0 0
  %3638 = vmatpush1.bf16.msra.mxu0 %v3598
  %3639 = vmatprep.subr.bf16.mxu0 0
  %3640 = vmatpush1.bf16.msra.mxu0 %v3599
  %3641 = vmatprep.subr.bf16.mxu0 0
  %3642 = vmatpush1.bf16.msra.mxu0 %v3600
  %3643 = vmatprep.subr.bf16.mxu0 0
  %3644 = vmatpush1.bf16.msra.mxu0 %v3601
  %3645 = vmatprep.subr.bf16.mxu0 0
  %3646 = vmatpush1.bf16.msra.mxu0 %v3602
  %3647 = vmatprep.subr.bf16.mxu0 0
  %3648 = vmatpush1.bf16.msra.mxu0 %v3603
  %3649 = vmatprep.subr.bf16.mxu0 0
  %3650 = vmatpush1.bf16.msra.mxu0 %v3604
  %3651 = vmatprep.subr.bf16.mxu0 0
  %3652 = vmatpush1.bf16.msra.mxu0 %v3605
  %3653 = vmatprep.subr.bf16.mxu0 0
  %3654 = vmatpush1.bf16.msra.mxu0 %v3606
  %3655 = vmatprep.mubr.bf16.mxu0 %v3487
  %3656 = vmatmul.mubr.bf16.gmra.mrb[0].mxu0 %v3486
  %v3657 = vpop.f32.mrb[0].mxu0
  %v3658 = vadd.f32 %v3525, %v3657
  %v3659 = vpop.f32.mrb[0].mxu0
  %v3660 = vpop.f32.mrb[0].mxu0
  %v3661 = vpop.f32.mrb[0].mxu0
  %3662 = vdwg.mxu0
  %3663 = vst [vmem:[%s11] sm:$0xff] %v3658
  // Predicated region
  $region46: #{forward.1} parent=0 // pred_check
    _
  $region47: #{forward.1} parent=0 // pred_check_branch
    %3665 = sbr.rel (0) target = $region49
  $region48: #{forward.1} parent=0 // pred_region
    _
  $region49: #{forward.1} parent=0 // pred_fallthru
    _
  // Predicated region
  $region50: #{forward.1} parent=0 // pred_check
    _
  $region51: #{forward.1} parent=0 // pred_check_branch
    %3667 = sbr.rel (0) target = $region53
  $region52: #{forward.1} parent=0 // pred_region
    _
  $region53: #{forward.1} parent=0 // pred_fallthru
    _

</llo_original>
